<compile_context>
chip_gen: v7x
topology: tpu7x:2x2x1
jax: 0.10.0
libtpu: 0.0.40
codegen_flags: <defaults>
</compile_context>

<pallas_src>
import jax
import jax.numpy as jnp
from jax.experimental import pallas as pl
from jax.experimental.pallas import tpu as pltpu


# --------------------------------------------------------------------------
# Trace-time helper: fold (nearest x2 upsample) + (3x3 conv) into 4 per-phase
# 2x2 convolutions on the low-res input.  Returns (4, 4*Cin, Cout) weights,
# phase index p = 2*di + dj, tap index k = 2*r + c (r, c = low-res 2x2 taps).
# --------------------------------------------------------------------------
def _phase_weights(w_oihw):
    w = jnp.transpose(w_oihw, (2, 3, 1, 0)).astype(jnp.float32)  # (kh, kw, Cin, Cout)
    cin, cout = w.shape[2], w.shape[3]
    # For output row 2i+di, the 3 kernel rows collapse onto 2 low-res rows:
    #   di=0: low-res row i   gets kh={0},   row i+1 gets kh={1,2}
    #   di=1: low-res row i+1 gets kh={0,1}, row i+2 gets kh={2}
    sets = (((0,), (1, 2)), ((0, 1), (2,)))
    phases = []
    for di in range(2):
        for dj in range(2):
            taps = []
            for r in range(2):
                for c in range(2):
                    acc = jnp.zeros((cin, cout), jnp.float32)
                    for kh in sets[di][r]:
                        for kw in sets[dj][c]:
                            acc = acc + w[kh, kw]
                    taps.append(acc)
            phases.append(jnp.concatenate(taps, axis=0))          # (4*Cin, Cout)
    return jnp.stack(phases, axis=0)                              # (4, 4*Cin, Cout)


# --------------------------------------------------------------------------
# Kernel 1: fused (upsample-folded) conv + BN-statistics epilogue.
# One batch element per grid step.  Stats outputs are grid-invariant
# accumulators (init on first step), so the grid axis is "arbitrary".
# --------------------------------------------------------------------------
def conv_bn_stats_kernel(x_ref, w_ref, y_ref, sum_ref, sq_ref):
    # x_ref : (1, H+2, W+2, Cin)   low-res input, zero-padded by 1 (NHWC)
    # w_ref : (4, 4*Cin, Cout)     per-phase folded weights
    # y_ref : (1, 4, H, W, Cout)   conv output in phase layout
    # sum_ref/sq_ref : (1, Cout)   running per-channel sum / sum of squares
    H, W, Cout = y_ref.shape[2], y_ref.shape[3], y_ref.shape[4]

    @pl.when(pl.program_id(0) == 0)
    def _():
        sum_ref[...] = jnp.zeros_like(sum_ref)
        sq_ref[...] = jnp.zeros_like(sq_ref)

    x = x_ref[0]                                                  # (H+2, W+2, Cin)
    local_sum = jnp.zeros((Cout,), jnp.float32)
    local_sq = jnp.zeros((Cout,), jnp.float32)

    for di in range(2):
        for dj in range(2):
            # im2col over the 2x2 low-res taps of this output phase.
            patch = jnp.concatenate(
                [x[di + r:di + r + H, dj + c:dj + c + W, :]
                 for r in range(2) for c in range(2)],
                axis=-1)                                          # (H, W, 4*Cin)
            res = jax.lax.dot_general(
                patch, w_ref[2 * di + dj],
                (((2,), (0,)), ((), ())),
                preferred_element_type=jnp.float32)               # (H, W, Cout)
            y_ref[0, 2 * di + dj] = res
            # BN stats ride in free VPU/XLU slots under the MXU work.
            local_sum = local_sum + jnp.sum(res, axis=(0, 1))
            local_sq = local_sq + jnp.sum(res * res, axis=(0, 1))

    sum_ref[...] += local_sum[None, :]
    sq_ref[...] += local_sq[None, :]


# --------------------------------------------------------------------------
# Kernel 2: fused per-channel affine (folded BN) + ReLU, in phase layout.
# --------------------------------------------------------------------------
def affine_relu_kernel(y_ref, scale_ref, shift_ref, o_ref):
    s = scale_ref[0]                                              # (Cout,)
    t = shift_ref[0]                                              # (Cout,)
    o_ref[...] = jnp.maximum(y_ref[...] * s + t, jnp.float32(0.0))


def up_conv_forward(x_nchw, w_oihw, b, gamma, beta, eps=1e-5):
    """x_nchw: (N, Cin, H, W) f32 -> (N, Cout, 2H, 2W) f32."""
    N, Cin, H, W = x_nchw.shape
    Cout = w_oihw.shape[0]
    H2, W2 = 2 * H, 2 * W

    # Conv bias is exactly cancelled by training-mode BN mean subtraction, so
    # it is dropped (output is mathematically identical).
    del b

    # ---- glue: low-res NHWC input, zero-padded by 1.  No 4x upsampled or
    #      padded-upsampled intermediate ever hits HBM. ----------------------
    x = jnp.transpose(x_nchw, (0, 2, 3, 1))                       # (N, H, W, Cin)
    x_pad = jnp.pad(x, ((0, 0), (1, 1), (1, 1), (0, 0)))          # (N, H+2, W+2, Cin)
    w_eff = _phase_weights(w_oihw)                                # (4, 4*Cin, Cout)

    # ---- kernel 1: conv (+ fused BN statistics) ---------------------------
    # TODO(synk): for large H2/W2 (esp. v7x's 64 MiB VMEM), tile the H axis
    # with halo rows instead of one full image per grid step; also pad Cout to
    # a multiple of 128 (lane-dense stores) when Cout is in the 32-64 range.
    y, sums, sqs = pl.pallas_call(
        conv_bn_stats_kernel,
        out_shape=(
            jax.ShapeDtypeStruct((N, 4, H, W, Cout), jnp.float32),
            jax.ShapeDtypeStruct((1, Cout), jnp.float32),
            jax.ShapeDtypeStruct((1, Cout), jnp.float32),
        ),
        grid_spec=pltpu.PrefetchScalarGridSpec(
            num_scalar_prefetch=0,
            grid=(N,),
            in_specs=[
                pl.BlockSpec((1, H + 2, W + 2, Cin), lambda n: (n, 0, 0, 0)),
                pl.BlockSpec((4, 4 * Cin, Cout), lambda n: (0, 0, 0)),
            ],
            out_specs=(
                pl.BlockSpec((1, 4, H, W, Cout), lambda n: (n, 0, 0, 0, 0)),
                pl.BlockSpec((1, Cout), lambda n: (0, 0)),
                pl.BlockSpec((1, Cout), lambda n: (0, 0)),
            ),
        ),
        compiler_params=pltpu.CompilerParams(
            dimension_semantics=("arbitrary",)),   # stats accumulate across grid
    )(x_pad, w_eff)

    # ---- glue: finalize training-mode BN (biased variance) as scale/shift --
    count = jnp.float32(N * H2 * W2)
    mean = sums[0] / count
    var = jnp.maximum(sqs[0] / count - mean * mean, 0.0)          # guard cancellation
    scale = gamma / jnp.sqrt(var + eps)                           # (Cout,)
    shift = beta - mean * scale                                   # (Cout,)

    # ---- kernel 2: affine + ReLU (phase layout) ---------------------------
    out_ph = pl.pallas_call(
        affine_relu_kernel,
        out_shape=jax.ShapeDtypeStruct((N, 4, H, W, Cout), jnp.float32),
        grid_spec=pltpu.PrefetchScalarGridSpec(
            num_scalar_prefetch=0,
            grid=(N,),
            in_specs=[
                pl.BlockSpec((1, 4, H, W, Cout), lambda n: (n, 0, 0, 0, 0)),
                pl.BlockSpec((1, Cout), lambda n: (0, 0)),
                pl.BlockSpec((1, Cout), lambda n: (0, 0)),
            ],
            out_specs=pl.BlockSpec((1, 4, H, W, Cout), lambda n: (n, 0, 0, 0, 0)),
        ),
        compiler_params=pltpu.CompilerParams(
            dimension_semantics=("parallel",)),
    )(y, scale.reshape(1, Cout), shift.reshape(1, Cout))

    # ---- glue: interleave phases and go back to NCHW ----------------------
    # out_ph[n, 2*di+dj, i, j, co] == output[n, co, 2i+di, 2j+dj]
    out = out_ph.reshape(N, 2, 2, H, W, Cout)
    out = jnp.transpose(out, (0, 5, 3, 1, 4, 2))                  # (N, C, H, 2, W, 2)
    return out.reshape(N, Cout, H2, W2)


# --------------------------------------------------------------------------
# Pure-JAX reference for correctness check.
# --------------------------------------------------------------------------
def ref_forward(x, w, b, gamma, beta, eps=1e-5):
    xu = jnp.repeat(jnp.repeat(x, 2, axis=2), 2, axis=3)
    y = jax.lax.conv_general_dilated(
        xu, w, window_strides=(1, 1), padding=((1, 1), (1, 1)),
        dimension_numbers=("NCHW", "OIHW", "NCHW")) + b[None, :, None, None]
    mean = y.mean(axis=(0, 2, 3))
    var = y.var(axis=(0, 2, 3))                                   # biased, like BN
    yn = (y - mean[None, :, None, None]) / jnp.sqrt(var[None, :, None, None] + eps)
    return jnp.maximum(yn * gamma[None, :, None, None] + beta[None, :, None, None], 0.0)


if __name__ == "__main__":
    # small shapes: batch=2, ch_in=4, ch_out=8, spatial 16 -> upsampled to 32
    N, CIN, COUT, H, W = 2, 4, 8, 16, 16

    key = jax.random.PRNGKey(0)
    kx, kw, kb = jax.random.split(key, 3)
    x = jax.random.normal(kx, (N, CIN, H, W), jnp.float32)
    w = jax.random.normal(kw, (COUT, CIN, 3, 3), jnp.float32) * 0.1
    b = jax.random.normal(kb, (COUT,), jnp.float32) * 0.1
    gamma = 1.0 + 0.1 * jnp.arange(COUT, dtype=jnp.float32)
    beta = 0.05 * jnp.arange(COUT, dtype=jnp.float32)

    out = jax.block_until_ready(up_conv_forward(x, w, b, gamma, beta))
    ref = jax.block_until_ready(ref_forward(x, w, b, gamma, beta))

    assert out.shape == (N, COUT, 2 * H, 2 * W), out.shape
    err = float(jnp.max(jnp.abs(out - ref)))
    assert jnp.allclose(out, ref, atol=1e-4, rtol=1e-4), err
    print("KERNEL_OK")
</pallas_src>

<mosaic_0001>
module attributes {stable_mosaic.version = 11 : i64} {
  func.func @conv_bn_stats_kernel(%arg0: i32, %arg1: memref<1x18x18x4xf32, #tpu.memory_space<vmem>>, %arg2: memref<4x16x8xf32, #tpu.memory_space<vmem>>, %arg3: memref<1x4x16x16x8xf32, #tpu.memory_space<vmem>>, %arg4: memref<1x8xf32, #tpu.memory_space<vmem>>, %arg5: memref<1x8xf32, #tpu.memory_space<vmem>>) attributes {dimension_semantics = [#tpu.dimension_semantics<arbitrary>], iteration_bounds = array<i64: 2>, scalar_prefetch = 0 : i64, scratch_operands = 0 : i64, tpu.core_type = #tpu.core_type<tc>, window_params = [{transform_indices = @transform_0, window_bounds = array<i64: 1, 18, 18, 4>}, {pipeline_mode = #tpu.pipeline_mode<synchronous>, transform_indices = @transform_1, window_bounds = array<i64: 4, 16, 8>}, {transform_indices = @transform_2, window_bounds = array<i64: 1, 4, 16, 16, 8>}, {pipeline_mode = #tpu.pipeline_mode<synchronous>, transform_indices = @transform_3, window_bounds = array<i64: 1, 8>}, {pipeline_mode = #tpu.pipeline_mode<synchronous>, transform_indices = @transform_4, window_bounds = array<i64: 1, 8>}]} {
    %c0_i32 = arith.constant 0 : i32
    %0 = arith.cmpi eq, %arg0, %c0_i32 : i32
    %1 = arith.extui %0 : i1 to i32
    %c0_i32_0 = arith.constant 0 : i32
    %2 = arith.cmpi ne, %1, %c0_i32_0 : i32
    scf.if %2 {
      %cst_54 = arith.constant 0.000000e+00 : f32
      %79 = vector.broadcast %cst_54 : f32 to vector<1x8xf32>
      %c0_55 = arith.constant 0 : index
      %c0_56 = arith.constant 0 : index
      %80 = vector.load %arg4[%c0_55, %c0_56] : memref<1x8xf32, #tpu.memory_space<vmem>>, vector<1x8xf32>
      tpu.vector_store %arg4[%c0_55, %c0_56], %79 {strides = array<i32>} : memref<1x8xf32, #tpu.memory_space<vmem>>, vector<1x8xf32>,
      %cst_57 = arith.constant 0.000000e+00 : f32
      %81 = vector.broadcast %cst_57 : f32 to vector<1x8xf32>
      %c0_58 = arith.constant 0 : index
      %c0_59 = arith.constant 0 : index
      %82 = vector.load %arg5[%c0_58, %c0_59] : memref<1x8xf32, #tpu.memory_space<vmem>>, vector<1x8xf32>
      tpu.vector_store %arg5[%c0_58, %c0_59], %81 {strides = array<i32>} : memref<1x8xf32, #tpu.memory_space<vmem>>, vector<1x8xf32>,
    } else {
    }
    %c0 = arith.constant 0 : index
    %c0_1 = arith.constant 0 : index
    %c0_2 = arith.constant 0 : index
    %c0_3 = arith.constant 0 : index
    %3 = vector.load %arg1[%c0, %c0_1, %c0_2, %c0_3] : memref<1x18x18x4xf32, #tpu.memory_space<vmem>>, vector<1x18x18x4xf32>
    %4 = vector.shape_cast %3 : vector<1x18x18x4xf32> to vector<18x18x4xf32>
    %cst = arith.constant 0.000000e+00 : f32
    %5 = vector.broadcast %cst : f32 to vector<8xf32>
    %cst_4 = arith.constant 0.000000e+00 : f32
    %6 = vector.broadcast %cst_4 : f32 to vector<8xf32>
    %7 = vector.extract_strided_slice %4 {offsets = [0, 0, 0], sizes = [16, 16, 4], strides = [1, 1, 1]} : vector<18x18x4xf32> to vector<16x16x4xf32>
    %8 = vector.extract_strided_slice %4 {offsets = [0, 1, 0], sizes = [16, 16, 4], strides = [1, 1, 1]} : vector<18x18x4xf32> to vector<16x16x4xf32>
    %9 = vector.extract_strided_slice %4 {offsets = [1, 0, 0], sizes = [16, 16, 4], strides = [1, 1, 1]} : vector<18x18x4xf32> to vector<16x16x4xf32>
    %10 = vector.extract_strided_slice %4 {offsets = [1, 1, 0], sizes = [16, 16, 4], strides = [1, 1, 1]} : vector<18x18x4xf32> to vector<16x16x4xf32>
    %11 = tpu.concatenate %7, %8, %9, %10 in 2 : vector<16x16x4xf32>, vector<16x16x4xf32>, vector<16x16x4xf32>, vector<16x16x4xf32> -> vector<16x16x16xf32>
    %c0_5 = arith.constant 0 : index
    %c0_6 = arith.constant 0 : index
    %c0_7 = arith.constant 0 : index
    %12 = vector.load %arg2[%c0_5, %c0_6, %c0_7] : memref<4x16x8xf32, #tpu.memory_space<vmem>>, vector<1x16x8xf32>
    %13 = vector.shape_cast %12 : vector<1x16x8xf32> to vector<16x8xf32>
    %cst_8 = arith.constant dense<0.000000e+00> : vector<16x16x8xf32>
    %14 = tpu.matmul %11, %13, %cst_8 {dimension_numbers = #tpu.dot_dimension_numbers<[2], [0], [0, 1], [1], [0, 0, 0, 1, 1, 1], [], []>} : vector<16x16x16xf32>, vector<16x8xf32>, vector<16x16x8xf32> -> vector<16x16x8xf32>
    %c0_9 = arith.constant 0 : index
    %c0_10 = arith.constant 0 : index
    %c0_11 = arith.constant 0 : index
    %c0_12 = arith.constant 0 : index
    %c0_13 = arith.constant 0 : index
    %15 = vector.load %arg3[%c0_9, %c0_10, %c0_11, %c0_12, %c0_13] : memref<1x4x16x16x8xf32, #tpu.memory_space<vmem>>, vector<1x1x16x16x8xf32>
    %16 = vector.shape_cast %15 : vector<1x1x16x16x8xf32> to vector<16x16x8xf32>
    %17 = vector.shape_cast %14 : vector<16x16x8xf32> to vector<1x1x16x16x8xf32>
    tpu.vector_store %arg3[%c0_9, %c0_10, %c0_11, %c0_12, %c0_13], %17 {strides = array<i32>} : memref<1x4x16x16x8xf32, #tpu.memory_space<vmem>>, vector<1x1x16x16x8xf32>,
    %cst_14 = arith.constant dense<0.000000e+00> : vector<8xf32>
    %18 = vector.multi_reduction <add>, %14, %cst_14 [0, 1] : vector<16x16x8xf32> to vector<8xf32>
    %19 = arith.addf %5, %18 : vector<8xf32>
    %20 = arith.mulf %14, %14 : vector<16x16x8xf32>
    %cst_15 = arith.constant dense<0.000000e+00> : vector<8xf32>
    %21 = vector.multi_reduction <add>, %20, %cst_15 [0, 1] : vector<16x16x8xf32> to vector<8xf32>
    %22 = arith.addf %6, %21 : vector<8xf32>
    %23 = vector.extract_strided_slice %4 {offsets = [0, 1, 0], sizes = [16, 16, 4], strides = [1, 1, 1]} : vector<18x18x4xf32> to vector<16x16x4xf32>
    %24 = vector.extract_strided_slice %4 {offsets = [0, 2, 0], sizes = [16, 16, 4], strides = [1, 1, 1]} : vector<18x18x4xf32> to vector<16x16x4xf32>
    %25 = vector.extract_strided_slice %4 {offsets = [1, 1, 0], sizes = [16, 16, 4], strides = [1, 1, 1]} : vector<18x18x4xf32> to vector<16x16x4xf32>
    %26 = vector.extract_strided_slice %4 {offsets = [1, 2, 0], sizes = [16, 16, 4], strides = [1, 1, 1]} : vector<18x18x4xf32> to vector<16x16x4xf32>
    %27 = tpu.concatenate %23, %24, %25, %26 in 2 : vector<16x16x4xf32>, vector<16x16x4xf32>, vector<16x16x4xf32>, vector<16x16x4xf32> -> vector<16x16x16xf32>
    %c1 = arith.constant 1 : index
    %c0_16 = arith.constant 0 : index
    %c0_17 = arith.constant 0 : index
    %28 = vector.load %arg2[%c1, %c0_16, %c0_17] : memref<4x16x8xf32, #tpu.memory_space<vmem>>, vector<1x16x8xf32>
    %29 = vector.shape_cast %28 : vector<1x16x8xf32> to vector<16x8xf32>
    %cst_18 = arith.constant dense<0.000000e+00> : vector<16x16x8xf32>
    %30 = tpu.matmul %27, %29, %cst_18 {dimension_numbers = #tpu.dot_dimension_numbers<[2], [0], [0, 1], [1], [0, 0, 0, 1, 1, 1], [], []>} : vector<16x16x16xf32>, vector<16x8xf32>, vector<16x16x8xf32> -> vector<16x16x8xf32>
    %c0_19 = arith.constant 0 : index
    %c1_20 = arith.constant 1 : index
    %c0_21 = arith.constant 0 : index
    %c0_22 = arith.constant 0 : index
    %c0_23 = arith.constant 0 : index
    %31 = vector.load %arg3[%c0_19, %c1_20, %c0_21, %c0_22, %c0_23] : memref<1x4x16x16x8xf32, #tpu.memory_space<vmem>>, vector<1x1x16x16x8xf32>
    %32 = vector.shape_cast %31 : vector<1x1x16x16x8xf32> to vector<16x16x8xf32>
    %33 = vector.shape_cast %30 : vector<16x16x8xf32> to vector<1x1x16x16x8xf32>
    tpu.vector_store %arg3[%c0_19, %c1_20, %c0_21, %c0_22, %c0_23], %33 {strides = array<i32>} : memref<1x4x16x16x8xf32, #tpu.memory_space<vmem>>, vector<1x1x16x16x8xf32>,
    %cst_24 = arith.constant dense<0.000000e+00> : vector<8xf32>
    %34 = vector.multi_reduction <add>, %30, %cst_24 [0, 1] : vector<16x16x8xf32> to vector<8xf32>
    %35 = arith.addf %19, %34 : vector<8xf32>
    %36 = arith.mulf %30, %30 : vector<16x16x8xf32>
    %cst_25 = arith.constant dense<0.000000e+00> : vector<8xf32>
    %37 = vector.multi_reduction <add>, %36, %cst_25 [0, 1] : vector<16x16x8xf32> to vector<8xf32>
    %38 = arith.addf %22, %37 : vector<8xf32>
    %39 = vector.extract_strided_slice %4 {offsets = [1, 0, 0], sizes = [16, 16, 4], strides = [1, 1, 1]} : vector<18x18x4xf32> to vector<16x16x4xf32>
    %40 = vector.extract_strided_slice %4 {offsets = [1, 1, 0], sizes = [16, 16, 4], strides = [1, 1, 1]} : vector<18x18x4xf32> to vector<16x16x4xf32>
    %41 = vector.extract_strided_slice %4 {offsets = [2, 0, 0], sizes = [16, 16, 4], strides = [1, 1, 1]} : vector<18x18x4xf32> to vector<16x16x4xf32>
    %42 = vector.extract_strided_slice %4 {offsets = [2, 1, 0], sizes = [16, 16, 4], strides = [1, 1, 1]} : vector<18x18x4xf32> to vector<16x16x4xf32>
    %43 = tpu.concatenate %39, %40, %41, %42 in 2 : vector<16x16x4xf32>, vector<16x16x4xf32>, vector<16x16x4xf32>, vector<16x16x4xf32> -> vector<16x16x16xf32>
    %c2 = arith.constant 2 : index
    %c0_26 = arith.constant 0 : index
    %c0_27 = arith.constant 0 : index
    %44 = vector.load %arg2[%c2, %c0_26, %c0_27] : memref<4x16x8xf32, #tpu.memory_space<vmem>>, vector<1x16x8xf32>
    %45 = vector.shape_cast %44 : vector<1x16x8xf32> to vector<16x8xf32>
    %cst_28 = arith.constant dense<0.000000e+00> : vector<16x16x8xf32>
    %46 = tpu.matmul %43, %45, %cst_28 {dimension_numbers = #tpu.dot_dimension_numbers<[2], [0], [0, 1], [1], [0, 0, 0, 1, 1, 1], [], []>} : vector<16x16x16xf32>, vector<16x8xf32>, vector<16x16x8xf32> -> vector<16x16x8xf32>
    %c0_29 = arith.constant 0 : index
    %c2_30 = arith.constant 2 : index
    %c0_31 = arith.constant 0 : index
    %c0_32 = arith.constant 0 : index
    %c0_33 = arith.constant 0 : index
    %47 = vector.load %arg3[%c0_29, %c2_30, %c0_31, %c0_32, %c0_33] : memref<1x4x16x16x8xf32, #tpu.memory_space<vmem>>, vector<1x1x16x16x8xf32>
    %48 = vector.shape_cast %47 : vector<1x1x16x16x8xf32> to vector<16x16x8xf32>
    %49 = vector.shape_cast %46 : vector<16x16x8xf32> to vector<1x1x16x16x8xf32>
    tpu.vector_store %arg3[%c0_29, %c2_30, %c0_31, %c0_32, %c0_33], %49 {strides = array<i32>} : memref<1x4x16x16x8xf32, #tpu.memory_space<vmem>>, vector<1x1x16x16x8xf32>,
    %cst_34 = arith.constant dense<0.000000e+00> : vector<8xf32>
    %50 = vector.multi_reduction <add>, %46, %cst_34 [0, 1] : vector<16x16x8xf32> to vector<8xf32>
    %51 = arith.addf %35, %50 : vector<8xf32>
    %52 = arith.mulf %46, %46 : vector<16x16x8xf32>
    %cst_35 = arith.constant dense<0.000000e+00> : vector<8xf32>
    %53 = vector.multi_reduction <add>, %52, %cst_35 [0, 1] : vector<16x16x8xf32> to vector<8xf32>
    %54 = arith.addf %38, %53 : vector<8xf32>
    %55 = vector.extract_strided_slice %4 {offsets = [1, 1, 0], sizes = [16, 16, 4], strides = [1, 1, 1]} : vector<18x18x4xf32> to vector<16x16x4xf32>
    %56 = vector.extract_strided_slice %4 {offsets = [1, 2, 0], sizes = [16, 16, 4], strides = [1, 1, 1]} : vector<18x18x4xf32> to vector<16x16x4xf32>
    %57 = vector.extract_strided_slice %4 {offsets = [2, 1, 0], sizes = [16, 16, 4], strides = [1, 1, 1]} : vector<18x18x4xf32> to vector<16x16x4xf32>
    %58 = vector.extract_strided_slice %4 {offsets = [2, 2, 0], sizes = [16, 16, 4], strides = [1, 1, 1]} : vector<18x18x4xf32> to vector<16x16x4xf32>
    %59 = tpu.concatenate %55, %56, %57, %58 in 2 : vector<16x16x4xf32>, vector<16x16x4xf32>, vector<16x16x4xf32>, vector<16x16x4xf32> -> vector<16x16x16xf32>
    %c3 = arith.constant 3 : index
    %c0_36 = arith.constant 0 : index
    %c0_37 = arith.constant 0 : index
    %60 = vector.load %arg2[%c3, %c0_36, %c0_37] : memref<4x16x8xf32, #tpu.memory_space<vmem>>, vector<1x16x8xf32>
    %61 = vector.shape_cast %60 : vector<1x16x8xf32> to vector<16x8xf32>
    %cst_38 = arith.constant dense<0.000000e+00> : vector<16x16x8xf32>
    %62 = tpu.matmul %59, %61, %cst_38 {dimension_numbers = #tpu.dot_dimension_numbers<[2], [0], [0, 1], [1], [0, 0, 0, 1, 1, 1], [], []>} : vector<16x16x16xf32>, vector<16x8xf32>, vector<16x16x8xf32> -> vector<16x16x8xf32>
    %c0_39 = arith.constant 0 : index
    %c3_40 = arith.constant 3 : index
    %c0_41 = arith.constant 0 : index
    %c0_42 = arith.constant 0 : index
    %c0_43 = arith.constant 0 : index
    %63 = vector.load %arg3[%c0_39, %c3_40, %c0_41, %c0_42, %c0_43] : memref<1x4x16x16x8xf32, #tpu.memory_space<vmem>>, vector<1x1x16x16x8xf32>
    %64 = vector.shape_cast %63 : vector<1x1x16x16x8xf32> to vector<16x16x8xf32>
    %65 = vector.shape_cast %62 : vector<16x16x8xf32> to vector<1x1x16x16x8xf32>
    tpu.vector_store %arg3[%c0_39, %c3_40, %c0_41, %c0_42, %c0_43], %65 {strides = array<i32>} : memref<1x4x16x16x8xf32, #tpu.memory_space<vmem>>, vector<1x1x16x16x8xf32>,
    %cst_44 = arith.constant dense<0.000000e+00> : vector<8xf32>
    %66 = vector.multi_reduction <add>, %62, %cst_44 [0, 1] : vector<16x16x8xf32> to vector<8xf32>
    %67 = arith.addf %51, %66 : vector<8xf32>
    %68 = arith.mulf %62, %62 : vector<16x16x8xf32>
    %cst_45 = arith.constant dense<0.000000e+00> : vector<8xf32>
    %69 = vector.multi_reduction <add>, %68, %cst_45 [0, 1] : vector<16x16x8xf32> to vector<8xf32>
    %70 = arith.addf %54, %69 : vector<8xf32>
    %c0_46 = arith.constant 0 : index
    %c0_47 = arith.constant 0 : index
    %71 = vector.load %arg4[%c0_46, %c0_47] : memref<1x8xf32, #tpu.memory_space<vmem>>, vector<1x8xf32>
    %72 = vector.shape_cast %67 : vector<8xf32> to vector<1x8xf32>
    %73 = arith.addf %71, %72 : vector<1x8xf32>
    %c0_48 = arith.constant 0 : index
    %c0_49 = arith.constant 0 : index
    %74 = vector.load %arg4[%c0_48, %c0_49] : memref<1x8xf32, #tpu.memory_space<vmem>>, vector<1x8xf32>
    tpu.vector_store %arg4[%c0_48, %c0_49], %73 {strides = array<i32>} : memref<1x8xf32, #tpu.memory_space<vmem>>, vector<1x8xf32>,
    %c0_50 = arith.constant 0 : index
    %c0_51 = arith.constant 0 : index
    %75 = vector.load %arg5[%c0_50, %c0_51] : memref<1x8xf32, #tpu.memory_space<vmem>>, vector<1x8xf32>
    %76 = vector.shape_cast %70 : vector<8xf32> to vector<1x8xf32>
    %77 = arith.addf %75, %76 : vector<1x8xf32>
    %c0_52 = arith.constant 0 : index
    %c0_53 = arith.constant 0 : index
    %78 = vector.load %arg5[%c0_52, %c0_53] : memref<1x8xf32, #tpu.memory_space<vmem>>, vector<1x8xf32>
    tpu.vector_store %arg5[%c0_52, %c0_53], %77 {strides = array<i32>} : memref<1x8xf32, #tpu.memory_space<vmem>>, vector<1x8xf32>,
    return
  }
  func.func @transform_0(%arg0: i32) -> (i32, i32, i32, i32) {
    %c0_i32 = arith.constant 0 : i32
    %c0_i32_0 = arith.constant 0 : i32
    %c0_i32_1 = arith.constant 0 : i32
    %c0_i32_2 = arith.constant 0 : i32
    return %arg0, %c0_i32, %c0_i32_0, %c0_i32_1 : i32, i32, i32, i32
  }
  func.func @transform_1(%arg0: i32) -> (i32, i32, i32) {
    %c0_i32 = arith.constant 0 : i32
    %c0_i32_0 = arith.constant 0 : i32
    %c0_i32_1 = arith.constant 0 : i32
    %c0_i32_2 = arith.constant 0 : i32
    return %c0_i32, %c0_i32_0, %c0_i32_1 : i32, i32, i32
  }
  func.func @transform_2(%arg0: i32) -> (i32, i32, i32, i32, i32) {
    %c0_i32 = arith.constant 0 : i32
    %c0_i32_0 = arith.constant 0 : i32
    %c0_i32_1 = arith.constant 0 : i32
    %c0_i32_2 = arith.constant 0 : i32
    %c0_i32_3 = arith.constant 0 : i32
    return %arg0, %c0_i32, %c0_i32_0, %c0_i32_1, %c0_i32_2 : i32, i32, i32, i32, i32
  }
  func.func @transform_3(%arg0: i32) -> (i32, i32) {
    %c0_i32 = arith.constant 0 : i32
    %c0_i32_0 = arith.constant 0 : i32
    %c0_i32_1 = arith.constant 0 : i32
    return %c0_i32, %c0_i32_0 : i32, i32
  }
  func.func @transform_4(%arg0: i32) -> (i32, i32) {
    %c0_i32 = arith.constant 0 : i32
    %c0_i32_0 = arith.constant 0 : i32
    %c0_i32_1 = arith.constant 0 : i32
    return %c0_i32, %c0_i32_0 : i32, i32
  }
}

</mosaic_0001>

<llo_original>
// kernel: tpu_custom_call.1
$region0: #{tpu_custom_call.1}
  #allocation0 [shape = 'u32[]', space=smem, size = 0x4, offset = 0x4, fixed_abs, tag = 'smem constant byte address 0x4 - core index']
  #allocation1 [shape = 'u32[144,128]{1,0:T(1,128)}', space=vmem, size = 0x12000, scoped, tag = 'internal scratch']
  %s0 = inlined_call_operand.vmem [shape: f32[2,18,18,4], index: 0, kind: input, shape index: {}]
  %s1 = inlined_call_operand.vmem [shape: f32[4,16,8], index: 1, kind: input, shape index: {}]
  %s2 = inlined_call_operand.vmem [shape: f32[2,4,16,16,8], index: 2, kind: output, shape index: {0}]
  %s3 = inlined_call_operand.hbm [shape: f32[1,8], index: 3, kind: output, shape index: {1}]
  %s4 = inlined_call_operand.hbm [shape: f32[1,8], index: 4, kind: output, shape index: {2}]
  %5 = xla_tuple %s2, %s3, %s4
  %s6 = sld [smem:[#allocation0]]
  $region61: #{tpu_custom_call.1} parent=0
    _
  %s8 = ssub.s32 1, %s6
  %s9 = scalar_select 0, %s8, %s6
  $region1: #{tpu_custom_call.1} parent=0
    #allocation2 [shape = 'u8[512]{0}', space=vmem, size = 0x400, scoped, tag = 'output window, operand 1, single buffered']
    #allocation3 [shape = 's32[2]{0}', space=sflag, size = 0x8, scoped, tag = 'scoped memory for tpu_custom_call.1']
    #allocation4 [shape = 'u8[512]{0}', space=vmem, size = 0x400, scoped, tag = 'output window, operand 2, single buffered']
    #allocation5 [shape = 's32[1]{0}', space=sflag, size = 0x4, scoped, tag = 'scoped memory for tpu_custom_call.1']
    %10 = vsyncpa [#allocation3], 0
    %11 = vsyncpa [#allocation5], 0
    loop: start=0, step=1, limit=4
    $region2: #{tpu_custom_call.1} parent=1 // loop_pre_header
      _
    $region3: #{tpu_custom_call.1} parent=1 // loop_header
      %s13 = sphi 0, %s17
      %p14 = scmp.ge.s32.totalorder %s13, 4
      %s23 = sphi 0, %s25
      %s26 = sphi 0, %s23
      %s27 = sphi 0, %s26
      %s43 = sphi 0, %s27
      %s47 = sphi 0, %s47
      %s49 = sphi 0, %s47
      %s50 = sphi 0, %s49
      %s64 = sphi 0, %s50
      %s70 = sphi 0, %s72
      %s73 = sphi 0, %s70
      %s74 = sphi 0, %s73
      %s90 = sphi 0, %s74
      %s94 = sphi 0, %s94
      %s96 = sphi 0, %s94
      %s97 = sphi 0, %s96
      %s111 = sphi 0, %s97
      %s115 = sphi 0, %s115
      %s117 = sphi 0, %s115
      %s118 = sphi 0, %s117
      %s132 = sphi 0, %s118
    $region4: #{tpu_custom_call.1} parent=1 // loop_header_branch
      %16 = sbr.rel (%p14) target = $region8
    $region5: #{tpu_custom_call.1} parent=1 // loop_body
      %s18 = ssub.s32 %s13, 1
      %s19 = ssub.s32 %s13, 2
      %s20 = sadd.s32 %s13, 1
      %s21 = ssub.s32 %s13, %s20
      %p22 = scmp.eq.s32.totalorder %s21, 0
      %s24 = sadd.s32 %s23, 1
      %s25 = scalar_select %p22, %s23, %s24
      %p28 = pneg %p22
      %p29 = scmp.eq.s32.totalorder %s13, 1
      %p30 = por %p28, %p29
      %p31 = scmp.ne.s32.totalorder %s23, %s26
      %p32 = scmp.eq.s32.totalorder %s13, 0
      %p33 = por %p31, %p32
      %p34 = scmp.ne.s32.totalorder %s23, %s26
      %p35 = scmp.eq.s32.totalorder %s18, 1
      %p36 = por %p34, %p35
      %p37 = scmp.ne.s32.totalorder %s26, %s27
      %p38 = scmp.eq.s32.totalorder %s18, 0
      %p39 = por %p37, %p38
      %p40 = scmp.ne.s32.totalorder %s26, %s27
      %p41 = scmp.eq.s32.totalorder %s19, 1
      %p42 = por %p40, %p41
      %p44 = scmp.ne.s32.totalorder %s27, %s43
      %p45 = scmp.eq.s32.totalorder %s19, 0
      %p46 = por %p44, %p45
      %s48 = sadd.s32 %s47, 1
      %p51 = scmp.eq.s32.totalorder %s13, 1
      %p52 = scmp.ne.s32.totalorder %s47, %s49
      %p53 = scmp.eq.s32.totalorder %s13, 0
      %p54 = por %p52, %p53
      %p55 = scmp.ne.s32.totalorder %s47, %s49
      %p56 = scmp.eq.s32.totalorder %s18, 1
      %p57 = por %p55, %p56
      %p58 = scmp.ne.s32.totalorder %s49, %s50
      %p59 = scmp.eq.s32.totalorder %s18, 0
      %p60 = por %p58, %p59
      %p61 = scmp.ne.s32.totalorder %s49, %s50
      %p62 = scmp.eq.s32.totalorder %s19, 1
      %p63 = por %p61, %p62
      %p65 = scmp.ne.s32.totalorder %s50, %s64
      %p66 = scmp.eq.s32.totalorder %s19, 0
      %p67 = por %p65, %p66
      %s68 = ssub.s32 %s13, %s20
      %p69 = scmp.eq.s32.totalorder %s68, 0
      %s71 = sadd.s32 %s70, 1
      %s72 = scalar_select %p69, %s70, %s71
      %p75 = pneg %p69
      %p76 = scmp.eq.s32.totalorder %s13, 1
      %p77 = por %p75, %p76
      %p78 = scmp.ne.s32.totalorder %s70, %s73
      %p79 = scmp.eq.s32.totalorder %s13, 0
      %p80 = por %p78, %p79
      %p81 = scmp.ne.s32.totalorder %s70, %s73
      %p82 = scmp.eq.s32.totalorder %s18, 1
      %p83 = por %p81, %p82
      %p84 = scmp.ne.s32.totalorder %s73, %s74
      %p85 = scmp.eq.s32.totalorder %s18, 0
      %p86 = por %p84, %p85
      %p87 = scmp.ne.s32.totalorder %s73, %s74
      %p88 = scmp.eq.s32.totalorder %s19, 1
      %p89 = por %p87, %p88
      %p91 = scmp.ne.s32.totalorder %s74, %s90
      %p92 = scmp.eq.s32.totalorder %s19, 0
      %p93 = por %p91, %p92
      %s95 = sadd.s32 %s94, 1
      %p98 = scmp.eq.s32.totalorder %s13, 1
      %p99 = scmp.ne.s32.totalorder %s94, %s96
      %p100 = scmp.eq.s32.totalorder %s13, 0
      %p101 = por %p99, %p100
      %p102 = scmp.ne.s32.totalorder %s94, %s96
      %p103 = scmp.eq.s32.totalorder %s18, 1
      %p104 = por %p102, %p103
      %p105 = scmp.ne.s32.totalorder %s96, %s97
      %p106 = scmp.eq.s32.totalorder %s18, 0
      %p107 = por %p105, %p106
      %p108 = scmp.ne.s32.totalorder %s96, %s97
      %p109 = scmp.eq.s32.totalorder %s19, 1
      %p110 = por %p108, %p109
      %p112 = scmp.ne.s32.totalorder %s97, %s111
      %p113 = scmp.eq.s32.totalorder %s19, 0
      %p114 = por %p112, %p113
      %s116 = sadd.s32 %s115, 1
      %p119 = scmp.eq.s32.totalorder %s13, 1
      %p120 = scmp.ne.s32.totalorder %s115, %s117
      %p121 = scmp.eq.s32.totalorder %s13, 0
      %p122 = por %p120, %p121
      %p123 = scmp.ne.s32.totalorder %s115, %s117
      %p124 = scmp.eq.s32.totalorder %s18, 1
      %p125 = por %p123, %p124
      %p126 = scmp.ne.s32.totalorder %s117, %s118
      %p127 = scmp.eq.s32.totalorder %s18, 0
      %p128 = por %p126, %p127
      %p129 = scmp.ne.s32.totalorder %s117, %s118
      %p130 = scmp.eq.s32.totalorder %s19, 1
      %p131 = por %p129, %p130
      %p133 = scmp.ne.s32.totalorder %s118, %s132
      %p134 = scmp.eq.s32.totalorder %s19, 0
      %p135 = por %p133, %p134
      %p136 = scmp.le.s32.totalorder 1, %s13
      %p137 = scmp.lt.s32.totalorder %s13, 3
      %p138 = pnand %p136, %p137
      %p139 = pneg %p138
      // Predicated region
      $region9: #{tpu_custom_call.1} parent=5 // pred_check
        _
      $region10: #{tpu_custom_call.1} parent=5 // pred_check_branch
        %141 = sbr.rel (%p138) target = $region12
      $region11: #{tpu_custom_call.1} parent=5 // pred_region
        %s142 = ssub.s32 %s13, 1
        // Predicated region
        $region13: #{tpu_custom_call.1} parent=11 // pred_check
          %p143 = pneg %p60
        $region14: #{tpu_custom_call.1} parent=11 // pred_check_branch
          %145 = sbr.rel (%p143) target = $region16
        $region15: #{tpu_custom_call.1} parent=11 // pred_region
          _
        $region16: #{tpu_custom_call.1} parent=11 // pred_fallthru
          _
      $region12: #{tpu_custom_call.1} parent=5 // pred_fallthru
        _
      %p146 = scmp.lt.s32.totalorder %s13, 2
      // Predicated region
      $region17: #{tpu_custom_call.1} parent=5 // pred_check
        %p147 = pneg %p146
      $region18: #{tpu_custom_call.1} parent=5 // pred_check_branch
        %149 = sbr.rel (%p147) target = $region20
      $region19: #{tpu_custom_call.1} parent=5 // pred_region
        // Predicated region
        $region21: #{tpu_custom_call.1} parent=19 // pred_check
          %p150 = pneg %p33
        $region22: #{tpu_custom_call.1} parent=19 // pred_check_branch
          %152 = sbr.rel (%p150) target = $region24
        $region23: #{tpu_custom_call.1} parent=19 // pred_region
          %p153 = scmp.lt.s32.totalorder %s13, 1
          %s154 = scalar_select %p153, %s13, 1
          %s155 = smul.addr %s154, 54
          %s156 = smul.addr %s155, 8
          %s157 = scalar_lea.vmem %s0, %s156
        $region24: #{tpu_custom_call.1} parent=19 // pred_fallthru
          _
      $region20: #{tpu_custom_call.1} parent=5 // pred_fallthru
        _
      %p158 = scmp.le.s32.totalorder 1, %s13
      %p159 = scmp.lt.s32.totalorder %s13, 3
      %p160 = pnand %p158, %p159
      %p161 = pneg %p160
      // Predicated region
      $region25: #{tpu_custom_call.1} parent=5 // pred_check
        _
      $region26: #{tpu_custom_call.1} parent=5 // pred_check_branch
        %163 = sbr.rel (%p160) target = $region28
      $region27: #{tpu_custom_call.1} parent=5 // pred_region
        %s164 = ssub.s32 %s13, 1
        %p165 = scmp.lt.s32.totalorder %s18, 1
        %s166 = scalar_select %p165, %s18, 1
        %s167 = smul.addr %s166, 54
        %s168 = smul.addr %s167, 8
        %s169 = scalar_lea.vmem %s0, %s168
        %p170 = pneg %p39
        %p171 = pneg %p36
        %p172 = pneg %p60
        %p173 = pneg %p57
        %p174 = pneg %p86
        %p175 = pneg %p83
        %p176 = scmp.lt.s32.totalorder %s18, 1
        %s177 = scalar_select %p176, %s18, 1
        %s178 = smul.addr %s177, 128
        %s179 = smul.addr %s178, 8
        %s180 = scalar_lea.vmem %s2, %s179
        %p181 = pneg %p107
        %p182 = pneg %p104
        %p183 = pneg %p128
        %p184 = pneg %p125
        %p185 = scmp.lt.s32.totalorder %s18, 1
        %s186 = scalar_select %p185, %s18, 1
        %s187 = smul.addr %s186, 54
        %s188 = smul.addr %s187, 8
        %s189 = scalar_lea.vmem %s0, %s188
        %p190 = scmp.lt.s32.totalorder %s18, 1
        %s191 = scalar_select %p190, %s18, 1
        %s192 = smul.addr %s191, 128
        %s193 = smul.addr %s192, 8
        %s194 = scalar_lea.vmem %s2, %s193
        %p195 = scmp.eq.s32.totalorder %s18, 0
        // Predicated region
        $region29: #{tpu_custom_call.1} parent=27 // pred_check
          %p196 = pneg %p195
        $region30: #{tpu_custom_call.1} parent=27 // pred_check_branch
          %198 = sbr.rel (%p196) target = $region32
        $region31: #{tpu_custom_call.1} parent=27 // pred_region
          %vm199 = vcmask 57344
          %200 = vst.msk [vmem:[#allocation2] sm:$0x1] %vm199, 0.0
          %201 = vst.msk [vmem:[#allocation4] sm:$0x1] %vm199, 0.0
        $region32: #{tpu_custom_call.1} parent=27 // pred_fallthru
          _
        %v202 = vld [vmem:[%s189] sm:$0xff]
        %v203 = vld [vmem:[%s189 + $0x8] sm:$0xff]
        %v204 = vld [vmem:[%s189 + $0x10] sm:$0x3]
        %v205 = vld [vmem:[%s189 + $0x18] sm:$0xff]
        %v206 = vld [vmem:[%s189 + $0x20] sm:$0xff]
        %v207 = vld [vmem:[%s189 + $0x28] sm:$0x3]
        %v208 = vld [vmem:[%s189 + $0x30] sm:$0xff]
        %v209 = vld [vmem:[%s189 + $0x38] sm:$0xff]
        %v210 = vld [vmem:[%s189 + $0x40] sm:$0x3]
        %v211 = vld [vmem:[%s189 + $0x48] sm:$0xff]
        %v212 = vld [vmem:[%s189 + $0x50] sm:$0xff]
        %v213 = vld [vmem:[%s189 + $0x58] sm:$0x3]
        %v214 = vld [vmem:[%s189 + $0x60] sm:$0xff]
        %v215 = vld [vmem:[%s189 + $0x68] sm:$0xff]
        %v216 = vld [vmem:[%s189 + $0x70] sm:$0x3]
        %v217 = vld [vmem:[%s189 + $0x78] sm:$0xff]
        %v218 = vld [vmem:[%s189 + $0x80] sm:$0xff]
        %v219 = vld [vmem:[%s189 + $0x88] sm:$0x3]
        %v220 = vld [vmem:[%s189 + $0x90] sm:$0xff]
        %v221 = vld [vmem:[%s189 + $0x98] sm:$0xff]
        %v222 = vld [vmem:[%s189 + $0xa0] sm:$0x3]
        %v223 = vld [vmem:[%s189 + $0xa8] sm:$0xff]
        %v224 = vld [vmem:[%s189 + $0xb0] sm:$0xff]
        %v225 = vld [vmem:[%s189 + $0xb8] sm:$0x3]
        %v226 = vld [vmem:[%s189 + $0xc0] sm:$0xff]
        %v227 = vld [vmem:[%s189 + $0xc8] sm:$0xff]
        %v228 = vld [vmem:[%s189 + $0xd0] sm:$0x3]
        %v229 = vld [vmem:[%s189 + $0xd8] sm:$0xff]
        %v230 = vld [vmem:[%s189 + $0xe0] sm:$0xff]
        %v231 = vld [vmem:[%s189 + $0xe8] sm:$0x3]
        %v232 = vld [vmem:[%s189 + $0xf0] sm:$0xff]
        %v233 = vld [vmem:[%s189 + $0xf8] sm:$0xff]
        %v234 = vld [vmem:[%s189 + $0x100] sm:$0x3]
        %v235 = vld [vmem:[%s189 + $0x108] sm:$0xff]
        %v236 = vld [vmem:[%s189 + $0x110] sm:$0xff]
        %v237 = vld [vmem:[%s189 + $0x118] sm:$0x3]
        %v238 = vld [vmem:[%s189 + $0x120] sm:$0xff]
        %v239 = vld [vmem:[%s189 + $0x128] sm:$0xff]
        %v240 = vld [vmem:[%s189 + $0x130] sm:$0x3]
        %v241 = vld [vmem:[%s189 + $0x138] sm:$0xff]
        %v242 = vld [vmem:[%s189 + $0x140] sm:$0xff]
        %v243 = vld [vmem:[%s189 + $0x148] sm:$0x3]
        %v244 = vld [vmem:[%s189 + $0x150] sm:$0xff]
        %v245 = vld [vmem:[%s189 + $0x158] sm:$0xff]
        %v246 = vld [vmem:[%s189 + $0x160] sm:$0x3]
        %v247 = vld [vmem:[%s189 + $0x168] sm:$0xff]
        %v248 = vld [vmem:[%s189 + $0x170] sm:$0xff]
        %v249 = vld [vmem:[%s189 + $0x178] sm:$0x3]
        %v250 = vld [vmem:[%s189 + $0x180] sm:$0xff]
        %v251 = vld [vmem:[%s189 + $0x188] sm:$0xff]
        %v252 = vld [vmem:[%s189 + $0x190] sm:$0x3]
        %v253 = vld [vmem:[%s189 + $0x198] sm:$0xff]
        %v254 = vld [vmem:[%s189 + $0x1a0] sm:$0xff]
        %v255 = vld [vmem:[%s189 + $0x1a8] sm:$0x3]
        %vm304 = vcmask 1046528
        %v305 = vrot.slane %v202, 1
        %v306 = vrot.slane %v203, 1
        %v307 = vsel %vm304, %v305, %v306
        %v308 = vrot.slane %v204, 1
        %v309 = vsel %vm304, %v306, %v308
        %v310 = vrot.slane %v205, 1
        %v311 = vrot.slane %v206, 1
        %v312 = vsel %vm304, %v310, %v311
        %v313 = vrot.slane %v207, 1
        %v314 = vsel %vm304, %v311, %v313
        %v315 = vrot.slane %v208, 1
        %v316 = vrot.slane %v209, 1
        %v317 = vsel %vm304, %v315, %v316
        %v318 = vrot.slane %v210, 1
        %v319 = vsel %vm304, %v316, %v318
        %v320 = vrot.slane %v211, 1
        %v321 = vrot.slane %v212, 1
        %v322 = vsel %vm304, %v320, %v321
        %v323 = vrot.slane %v213, 1
        %v324 = vsel %vm304, %v321, %v323
        %v325 = vrot.slane %v214, 1
        %v326 = vrot.slane %v215, 1
        %v327 = vsel %vm304, %v325, %v326
        %v328 = vrot.slane %v216, 1
        %v329 = vsel %vm304, %v326, %v328
        %v330 = vrot.slane %v217, 1
        %v331 = vrot.slane %v218, 1
        %v332 = vsel %vm304, %v330, %v331
        %v333 = vrot.slane %v219, 1
        %v334 = vsel %vm304, %v331, %v333
        %v335 = vrot.slane %v220, 1
        %v336 = vrot.slane %v221, 1
        %v337 = vsel %vm304, %v335, %v336
        %v338 = vrot.slane %v222, 1
        %v339 = vsel %vm304, %v336, %v338
        %v340 = vrot.slane %v223, 1
        %v341 = vrot.slane %v224, 1
        %v342 = vsel %vm304, %v340, %v341
        %v343 = vrot.slane %v225, 1
        %v344 = vsel %vm304, %v341, %v343
        %v345 = vrot.slane %v226, 1
        %v346 = vrot.slane %v227, 1
        %v347 = vsel %vm304, %v345, %v346
        %v348 = vrot.slane %v228, 1
        %v349 = vsel %vm304, %v346, %v348
        %v350 = vrot.slane %v229, 1
        %v351 = vrot.slane %v230, 1
        %v352 = vsel %vm304, %v350, %v351
        %v353 = vrot.slane %v231, 1
        %v354 = vsel %vm304, %v351, %v353
        %v355 = vrot.slane %v232, 1
        %v356 = vrot.slane %v233, 1
        %v357 = vsel %vm304, %v355, %v356
        %v358 = vrot.slane %v234, 1
        %v359 = vsel %vm304, %v356, %v358
        %v360 = vrot.slane %v235, 1
        %v361 = vrot.slane %v236, 1
        %v362 = vsel %vm304, %v360, %v361
        %v363 = vrot.slane %v237, 1
        %v364 = vsel %vm304, %v361, %v363
        %v365 = vrot.slane %v238, 1
        %v366 = vrot.slane %v239, 1
        %v367 = vsel %vm304, %v365, %v366
        %v368 = vrot.slane %v240, 1
        %v369 = vsel %vm304, %v366, %v368
        %v370 = vrot.slane %v241, 1
        %v371 = vrot.slane %v242, 1
        %v372 = vsel %vm304, %v370, %v371
        %v373 = vrot.slane %v243, 1
        %v374 = vsel %vm304, %v371, %v373
        %v375 = vrot.slane %v244, 1
        %v376 = vrot.slane %v245, 1
        %v377 = vsel %vm304, %v375, %v376
        %v378 = vrot.slane %v246, 1
        %v379 = vsel %vm304, %v376, %v378
        %v380 = vrot.slane %v247, 1
        %v381 = vrot.slane %v248, 1
        %v382 = vsel %vm304, %v380, %v381
        %v383 = vrot.slane %v249, 1
        %v384 = vsel %vm304, %v381, %v383
        %385 = vrot.lane.b32.xlu0 %v307, 4
        %v386 = vpop.permute.xlu0 %385
        %387 = vrot.lane.b32.xlu0 %v309, 4
        %v388 = vpop.permute.xlu0 %387
        %389 = vrot.lane.b32.xlu0 %v312, 4
        %v390 = vpop.permute.xlu0 %389
        %391 = vrot.lane.b32.xlu0 %v314, 4
        %v392 = vpop.permute.xlu0 %391
        %393 = vrot.lane.b32.xlu0 %v317, 4
        %v394 = vpop.permute.xlu0 %393
        %395 = vrot.lane.b32.xlu0 %v319, 4
        %v396 = vpop.permute.xlu0 %395
        %397 = vrot.lane.b32.xlu0 %v322, 4
        %v398 = vpop.permute.xlu0 %397
        %399 = vrot.lane.b32.xlu0 %v324, 4
        %v400 = vpop.permute.xlu0 %399
        %401 = vrot.lane.b32.xlu0 %v327, 4
        %v402 = vpop.permute.xlu0 %401
        %403 = vrot.lane.b32.xlu0 %v329, 4
        %v404 = vpop.permute.xlu0 %403
        %405 = vrot.lane.b32.xlu0 %v332, 4
        %v406 = vpop.permute.xlu0 %405
        %407 = vrot.lane.b32.xlu0 %v334, 4
        %v408 = vpop.permute.xlu0 %407
        %409 = vrot.lane.b32.xlu0 %v337, 4
        %v410 = vpop.permute.xlu0 %409
        %411 = vrot.lane.b32.xlu0 %v339, 4
        %v412 = vpop.permute.xlu0 %411
        %413 = vrot.lane.b32.xlu0 %v342, 4
        %v414 = vpop.permute.xlu0 %413
        %415 = vrot.lane.b32.xlu0 %v344, 4
        %v416 = vpop.permute.xlu0 %415
        %417 = vrot.lane.b32.xlu0 %v347, 4
        %v418 = vpop.permute.xlu0 %417
        %419 = vrot.lane.b32.xlu0 %v349, 4
        %v420 = vpop.permute.xlu0 %419
        %421 = vrot.lane.b32.xlu0 %v352, 4
        %v422 = vpop.permute.xlu0 %421
        %423 = vrot.lane.b32.xlu0 %v354, 4
        %v424 = vpop.permute.xlu0 %423
        %425 = vrot.lane.b32.xlu0 %v357, 4
        %v426 = vpop.permute.xlu0 %425
        %427 = vrot.lane.b32.xlu0 %v359, 4
        %v428 = vpop.permute.xlu0 %427
        %429 = vrot.lane.b32.xlu0 %v362, 4
        %v430 = vpop.permute.xlu0 %429
        %431 = vrot.lane.b32.xlu0 %v364, 4
        %v432 = vpop.permute.xlu0 %431
        %433 = vrot.lane.b32.xlu0 %v367, 4
        %v434 = vpop.permute.xlu0 %433
        %435 = vrot.lane.b32.xlu0 %v369, 4
        %v436 = vpop.permute.xlu0 %435
        %437 = vrot.lane.b32.xlu0 %v372, 4
        %v438 = vpop.permute.xlu0 %437
        %439 = vrot.lane.b32.xlu0 %v374, 4
        %v440 = vpop.permute.xlu0 %439
        %441 = vrot.lane.b32.xlu0 %v377, 4
        %v442 = vpop.permute.xlu0 %441
        %443 = vrot.lane.b32.xlu0 %v379, 4
        %v444 = vpop.permute.xlu0 %443
        %445 = vrot.lane.b32.xlu0 %v382, 4
        %v446 = vpop.permute.xlu0 %445
        %447 = vrot.lane.b32.xlu0 %v384, 4
        %v448 = vpop.permute.xlu0 %447
        %483 = vrot.lane.b32.xlu0 %v205, 8
        %v484 = vpop.permute.xlu0 %483
        %485 = vrot.lane.b32.xlu0 %v206, 8
        %v486 = vpop.permute.xlu0 %485
        %487 = vrot.lane.b32.xlu0 %v208, 8
        %v488 = vpop.permute.xlu0 %487
        %489 = vrot.lane.b32.xlu0 %v209, 8
        %v490 = vpop.permute.xlu0 %489
        %491 = vrot.lane.b32.xlu0 %v211, 8
        %v492 = vpop.permute.xlu0 %491
        %493 = vrot.lane.b32.xlu0 %v212, 8
        %v494 = vpop.permute.xlu0 %493
        %495 = vrot.lane.b32.xlu0 %v214, 8
        %v496 = vpop.permute.xlu0 %495
        %497 = vrot.lane.b32.xlu0 %v215, 8
        %v498 = vpop.permute.xlu0 %497
        %499 = vrot.lane.b32.xlu0 %v217, 8
        %v500 = vpop.permute.xlu0 %499
        %501 = vrot.lane.b32.xlu0 %v218, 8
        %v502 = vpop.permute.xlu0 %501
        %503 = vrot.lane.b32.xlu0 %v220, 8
        %v504 = vpop.permute.xlu0 %503
        %505 = vrot.lane.b32.xlu0 %v221, 8
        %v506 = vpop.permute.xlu0 %505
        %507 = vrot.lane.b32.xlu0 %v223, 8
        %v508 = vpop.permute.xlu0 %507
        %509 = vrot.lane.b32.xlu0 %v224, 8
        %v510 = vpop.permute.xlu0 %509
        %511 = vrot.lane.b32.xlu0 %v226, 8
        %v512 = vpop.permute.xlu0 %511
        %513 = vrot.lane.b32.xlu0 %v227, 8
        %v514 = vpop.permute.xlu0 %513
        %515 = vrot.lane.b32.xlu0 %v229, 8
        %v516 = vpop.permute.xlu0 %515
        %517 = vrot.lane.b32.xlu0 %v230, 8
        %v518 = vpop.permute.xlu0 %517
        %519 = vrot.lane.b32.xlu0 %v232, 8
        %v520 = vpop.permute.xlu0 %519
        %521 = vrot.lane.b32.xlu0 %v233, 8
        %v522 = vpop.permute.xlu0 %521
        %523 = vrot.lane.b32.xlu0 %v235, 8
        %v524 = vpop.permute.xlu0 %523
        %525 = vrot.lane.b32.xlu0 %v236, 8
        %v526 = vpop.permute.xlu0 %525
        %527 = vrot.lane.b32.xlu0 %v238, 8
        %v528 = vpop.permute.xlu0 %527
        %529 = vrot.lane.b32.xlu0 %v239, 8
        %v530 = vpop.permute.xlu0 %529
        %531 = vrot.lane.b32.xlu0 %v241, 8
        %v532 = vpop.permute.xlu0 %531
        %533 = vrot.lane.b32.xlu0 %v242, 8
        %v534 = vpop.permute.xlu0 %533
        %535 = vrot.lane.b32.xlu0 %v244, 8
        %v536 = vpop.permute.xlu0 %535
        %537 = vrot.lane.b32.xlu0 %v245, 8
        %v538 = vpop.permute.xlu0 %537
        %539 = vrot.lane.b32.xlu0 %v247, 8
        %v540 = vpop.permute.xlu0 %539
        %541 = vrot.lane.b32.xlu0 %v248, 8
        %v542 = vpop.permute.xlu0 %541
        %543 = vrot.lane.b32.xlu0 %v250, 8
        %v544 = vpop.permute.xlu0 %543
        %545 = vrot.lane.b32.xlu0 %v251, 8
        %v546 = vpop.permute.xlu0 %545
        %v580 = vrot.slane %v250, 1
        %v581 = vrot.slane %v251, 1
        %v582 = vsel %vm304, %v580, %v581
        %v583 = vrot.slane %v252, 1
        %v584 = vsel %vm304, %v581, %v583
        %585 = vrot.lane.b32.xlu0 %v312, 12
        %v586 = vpop.permute.xlu0 %585
        %587 = vrot.lane.b32.xlu0 %v314, 12
        %v588 = vpop.permute.xlu0 %587
        %589 = vrot.lane.b32.xlu0 %v317, 12
        %v590 = vpop.permute.xlu0 %589
        %591 = vrot.lane.b32.xlu0 %v319, 12
        %v592 = vpop.permute.xlu0 %591
        %593 = vrot.lane.b32.xlu0 %v322, 12
        %v594 = vpop.permute.xlu0 %593
        %595 = vrot.lane.b32.xlu0 %v324, 12
        %v596 = vpop.permute.xlu0 %595
        %597 = vrot.lane.b32.xlu0 %v327, 12
        %v598 = vpop.permute.xlu0 %597
        %599 = vrot.lane.b32.xlu0 %v329, 12
        %v600 = vpop.permute.xlu0 %599
        %601 = vrot.lane.b32.xlu0 %v332, 12
        %v602 = vpop.permute.xlu0 %601
        %603 = vrot.lane.b32.xlu0 %v334, 12
        %v604 = vpop.permute.xlu0 %603
        %605 = vrot.lane.b32.xlu0 %v337, 12
        %v606 = vpop.permute.xlu0 %605
        %607 = vrot.lane.b32.xlu0 %v339, 12
        %v608 = vpop.permute.xlu0 %607
        %609 = vrot.lane.b32.xlu0 %v342, 12
        %v610 = vpop.permute.xlu0 %609
        %611 = vrot.lane.b32.xlu0 %v344, 12
        %v612 = vpop.permute.xlu0 %611
        %613 = vrot.lane.b32.xlu0 %v347, 12
        %v614 = vpop.permute.xlu0 %613
        %615 = vrot.lane.b32.xlu0 %v349, 12
        %v616 = vpop.permute.xlu0 %615
        %617 = vrot.lane.b32.xlu0 %v352, 12
        %v618 = vpop.permute.xlu0 %617
        %619 = vrot.lane.b32.xlu0 %v354, 12
        %v620 = vpop.permute.xlu0 %619
        %621 = vrot.lane.b32.xlu0 %v357, 12
        %v622 = vpop.permute.xlu0 %621
        %623 = vrot.lane.b32.xlu0 %v359, 12
        %v624 = vpop.permute.xlu0 %623
        %625 = vrot.lane.b32.xlu0 %v362, 12
        %v626 = vpop.permute.xlu0 %625
        %627 = vrot.lane.b32.xlu0 %v364, 12
        %v628 = vpop.permute.xlu0 %627
        %629 = vrot.lane.b32.xlu0 %v367, 12
        %v630 = vpop.permute.xlu0 %629
        %631 = vrot.lane.b32.xlu0 %v369, 12
        %v632 = vpop.permute.xlu0 %631
        %633 = vrot.lane.b32.xlu0 %v372, 12
        %v634 = vpop.permute.xlu0 %633
        %635 = vrot.lane.b32.xlu0 %v374, 12
        %v636 = vpop.permute.xlu0 %635
        %637 = vrot.lane.b32.xlu0 %v377, 12
        %v638 = vpop.permute.xlu0 %637
        %639 = vrot.lane.b32.xlu0 %v379, 12
        %v640 = vpop.permute.xlu0 %639
        %641 = vrot.lane.b32.xlu0 %v382, 12
        %v642 = vpop.permute.xlu0 %641
        %643 = vrot.lane.b32.xlu0 %v384, 12
        %v644 = vpop.permute.xlu0 %643
        %645 = vrot.lane.b32.xlu0 %v582, 12
        %v646 = vpop.permute.xlu0 %645
        %647 = vrot.lane.b32.xlu0 %v584, 12
        %v648 = vpop.permute.xlu0 %647
        %vm681 = vcmask 31744
        %v682 = vsel %vm681, %v202, %v386
        %v683 = vsel %vm681, %v203, %v388
        %v684 = vsel %vm681, %v205, %v390
        %v685 = vsel %vm681, %v206, %v392
        %v686 = vsel %vm681, %v208, %v394
        %v687 = vsel %vm681, %v209, %v396
        %v688 = vsel %vm681, %v211, %v398
        %v689 = vsel %vm681, %v212, %v400
        %v690 = vsel %vm681, %v214, %v402
        %v691 = vsel %vm681, %v215, %v404
        %v692 = vsel %vm681, %v217, %v406
        %v693 = vsel %vm681, %v218, %v408
        %v694 = vsel %vm681, %v220, %v410
        %v695 = vsel %vm681, %v221, %v412
        %v696 = vsel %vm681, %v223, %v414
        %v697 = vsel %vm681, %v224, %v416
        %v698 = vsel %vm681, %v226, %v418
        %v699 = vsel %vm681, %v227, %v420
        %v700 = vsel %vm681, %v229, %v422
        %v701 = vsel %vm681, %v230, %v424
        %v702 = vsel %vm681, %v232, %v426
        %v703 = vsel %vm681, %v233, %v428
        %v704 = vsel %vm681, %v235, %v430
        %v705 = vsel %vm681, %v236, %v432
        %v706 = vsel %vm681, %v238, %v434
        %v707 = vsel %vm681, %v239, %v436
        %v708 = vsel %vm681, %v241, %v438
        %v709 = vsel %vm681, %v242, %v440
        %v710 = vsel %vm681, %v244, %v442
        %v711 = vsel %vm681, %v245, %v444
        %v712 = vsel %vm681, %v247, %v446
        %v713 = vsel %vm681, %v248, %v448
        %vm714 = vcmask 64512
        %v715 = vsel %vm714, %v682, %v484
        %v716 = vsel %vm714, %v683, %v486
        %v717 = vsel %vm714, %v684, %v488
        %v718 = vsel %vm714, %v685, %v490
        %v719 = vsel %vm714, %v686, %v492
        %v720 = vsel %vm714, %v687, %v494
        %v721 = vsel %vm714, %v688, %v496
        %v722 = vsel %vm714, %v689, %v498
        %v723 = vsel %vm714, %v690, %v500
        %v724 = vsel %vm714, %v691, %v502
        %v725 = vsel %vm714, %v692, %v504
        %v726 = vsel %vm714, %v693, %v506
        %v727 = vsel %vm714, %v694, %v508
        %v728 = vsel %vm714, %v695, %v510
        %v729 = vsel %vm714, %v696, %v512
        %v730 = vsel %vm714, %v697, %v514
        %v731 = vsel %vm714, %v698, %v516
        %v732 = vsel %vm714, %v699, %v518
        %v733 = vsel %vm714, %v700, %v520
        %v734 = vsel %vm714, %v701, %v522
        %v735 = vsel %vm714, %v702, %v524
        %v736 = vsel %vm714, %v703, %v526
        %v737 = vsel %vm714, %v704, %v528
        %v738 = vsel %vm714, %v705, %v530
        %v739 = vsel %vm714, %v706, %v532
        %v740 = vsel %vm714, %v707, %v534
        %v741 = vsel %vm714, %v708, %v536
        %v742 = vsel %vm714, %v709, %v538
        %v743 = vsel %vm714, %v710, %v540
        %v744 = vsel %vm714, %v711, %v542
        %v745 = vsel %vm714, %v712, %v544
        %v746 = vsel %vm714, %v713, %v546
        %vm747 = vcmask 97280
        %v748 = vsel %vm747, %v715, %v586
        %v749 = vsel %vm747, %v716, %v588
        %v750 = vsel %vm747, %v717, %v590
        %v751 = vsel %vm747, %v718, %v592
        %v752 = vsel %vm747, %v719, %v594
        %v753 = vsel %vm747, %v720, %v596
        %v754 = vsel %vm747, %v721, %v598
        %v755 = vsel %vm747, %v722, %v600
        %v756 = vsel %vm747, %v723, %v602
        %v757 = vsel %vm747, %v724, %v604
        %v758 = vsel %vm747, %v725, %v606
        %v759 = vsel %vm747, %v726, %v608
        %v760 = vsel %vm747, %v727, %v610
        %v761 = vsel %vm747, %v728, %v612
        %v762 = vsel %vm747, %v729, %v614
        %v763 = vsel %vm747, %v730, %v616
        %v764 = vsel %vm747, %v731, %v618
        %v765 = vsel %vm747, %v732, %v620
        %v766 = vsel %vm747, %v733, %v622
        %v767 = vsel %vm747, %v734, %v624
        %v768 = vsel %vm747, %v735, %v626
        %v769 = vsel %vm747, %v736, %v628
        %v770 = vsel %vm747, %v737, %v630
        %v771 = vsel %vm747, %v738, %v632
        %v772 = vsel %vm747, %v739, %v634
        %v773 = vsel %vm747, %v740, %v636
        %v774 = vsel %vm747, %v741, %v638
        %v775 = vsel %vm747, %v742, %v640
        %v776 = vsel %vm747, %v743, %v642
        %v777 = vsel %vm747, %v744, %v644
        %v778 = vsel %vm747, %v745, %v646
        %v779 = vsel %vm747, %v746, %v648
        %v780 = vld [vmem:[%s1] sm:$0xff]
        %v781 = vld [vmem:[%s1 + $0x8] sm:$0xff]
        %vm782 = vcmask 130048
        %v784 = vsel %vm782, %v748, 0
        %v787 = vsel %vm782, %v749, 0
        %v790 = vsel %vm782, %v750, 0
        %v793 = vsel %vm782, %v751, 0
        %v796 = vsel %vm782, %v752, 0
        %v799 = vsel %vm782, %v753, 0
        %v802 = vsel %vm782, %v754, 0
        %v805 = vsel %vm782, %v755, 0
        %v808 = vsel %vm782, %v756, 0
        %v811 = vsel %vm782, %v757, 0
        %v814 = vsel %vm782, %v758, 0
        %v817 = vsel %vm782, %v759, 0
        %v820 = vsel %vm782, %v760, 0
        %v823 = vsel %vm782, %v761, 0
        %v826 = vsel %vm782, %v762, 0
        %v829 = vsel %vm782, %v763, 0
        %v832 = vsel %vm782, %v764, 0
        %v835 = vsel %vm782, %v765, 0
        %v838 = vsel %vm782, %v766, 0
        %v841 = vsel %vm782, %v767, 0
        %v844 = vsel %vm782, %v768, 0
        %v847 = vsel %vm782, %v769, 0
        %v850 = vsel %vm782, %v770, 0
        %v853 = vsel %vm782, %v771, 0
        %v856 = vsel %vm782, %v772, 0
        %v859 = vsel %vm782, %v773, 0
        %v862 = vsel %vm782, %v774, 0
        %v865 = vsel %vm782, %v775, 0
        %v868 = vsel %vm782, %v776, 0
        %v871 = vsel %vm782, %v777, 0
        %v874 = vsel %vm782, %v778, 0
        %v877 = vsel %vm782, %v779, 0
        %879 = vmatprep.subr.mxu0 0.0
        %880 = vmatpush1.msra.mxu0 %v780
        %881 = vmatprep.subr.mxu0 0.0
        %882 = vmatpush1.msra.mxu0 %v781
        %883 = vmatprep.subr.mxu0 0.0
        %884 = vmatpush1.msra.mxu0 0.0
        %885 = vmatprep.subr.mxu0 0.0
        %886 = vmatpush1.msra.mxu0 0.0
        %887 = vmatprep.subr.mxu0 0.0
        %888 = vmatpush1.msra.mxu0 0.0
        %889 = vmatprep.subr.mxu0 0.0
        %890 = vmatpush1.msra.mxu0 0.0
        %891 = vmatprep.subr.mxu0 0.0
        %892 = vmatpush1.msra.mxu0 0.0
        %893 = vmatprep.subr.mxu0 0.0
        %894 = vmatpush1.msra.mxu0 0.0
        %895 = vmatprep.subr.mxu0 0.0
        %896 = vmatpush1.msra.mxu0 0.0
        %897 = vmatprep.subr.mxu0 0.0
        %898 = vmatpush1.msra.mxu0 0.0
        %899 = vmatprep.subr.mxu0 0.0
        %900 = vmatpush1.msra.mxu0 0.0
        %901 = vmatprep.subr.mxu0 0.0
        %902 = vmatpush1.msra.mxu0 0.0
        %903 = vmatprep.subr.mxu0 0.0
        %904 = vmatpush1.msra.mxu0 0.0
        %905 = vmatprep.subr.mxu0 0.0
        %906 = vmatpush1.msra.mxu0 0.0
        %907 = vmatprep.subr.mxu0 0.0
        %908 = vmatpush1.msra.mxu0 0.0
        %909 = vmatprep.subr.mxu0 0.0
        %910 = vmatpush1.msra.mxu0 0.0
        %911 = vmatprep.subr.mxu0 0.0
        %912 = vmatpush1.msra.mxu0 0.0
        %913 = vmatprep.subr.mxu0 0.0
        %914 = vmatpush1.msra.mxu0 0.0
        %915 = vmatprep.subr.mxu0 0.0
        %916 = vmatpush1.msra.mxu0 0.0
        %917 = vmatprep.subr.mxu0 0.0
        %918 = vmatpush1.msra.mxu0 0.0
        %919 = vmatprep.subr.mxu0 0.0
        %920 = vmatpush1.msra.mxu0 0.0
        %921 = vmatprep.subr.mxu0 0.0
        %922 = vmatpush1.msra.mxu0 0.0
        %923 = vmatprep.subr.mxu0 0.0
        %924 = vmatpush1.msra.mxu0 0.0
        %925 = vmatprep.subr.mxu0 0.0
        %926 = vmatpush1.msra.mxu0 0.0
        %927 = vmatprep.subr.mxu0 0.0
        %928 = vmatpush1.msra.mxu0 0.0
        %929 = vmatprep.subr.mxu0 0.0
        %930 = vmatpush1.msra.mxu0 0.0
        %931 = vmatprep.subr.mxu0 0.0
        %932 = vmatpush1.msra.mxu0 0.0
        %933 = vmatprep.subr.mxu0 0.0
        %934 = vmatpush1.msra.mxu0 0.0
        %935 = vmatprep.subr.mxu0 0.0
        %936 = vmatpush1.msra.mxu0 0.0
        %937 = vmatprep.subr.mxu0 0.0
        %938 = vmatpush1.msra.mxu0 0.0
        %939 = vmatprep.subr.mxu0 0.0
        %940 = vmatpush1.msra.mxu0 0.0
        %941 = vmatprep.subr.mxu0 0.0
        %942 = vmatpush1.msra.mxu0 0.0
        %943 = vmatprep.mubr.f32.mxu0 0.0
        %944 = vmatmul.mubr.f32.gmra.mrb[0].mxu0 %v784
        %v945 = vpop.f32.mrb[0].mxu0
        %v946 = vadd.f32 0.0, %v945
        %v947 = vpop.f32.mrb[0].mxu0
        %948 = vmatprep.mubr.f32.mxu0 0.0
        %949 = vmatmul.mubr.f32.gmra.mrb[0].mxu0 %v787
        %v950 = vpop.f32.mrb[0].mxu0
        %v951 = vadd.f32 0.0, %v950
        %v952 = vpop.f32.mrb[0].mxu0
        %953 = vmatprep.mubr.f32.mxu0 0.0
        %954 = vmatmul.mubr.f32.gmra.mrb[0].mxu0 %v790
        %v955 = vpop.f32.mrb[0].mxu0
        %v956 = vadd.f32 0.0, %v955
        %v957 = vpop.f32.mrb[0].mxu0
        %958 = vmatprep.mubr.f32.mxu0 0.0
        %959 = vmatmul.mubr.f32.gmra.mrb[0].mxu0 %v793
        %v960 = vpop.f32.mrb[0].mxu0
        %v961 = vadd.f32 0.0, %v960
        %v962 = vpop.f32.mrb[0].mxu0
        %963 = vmatprep.mubr.f32.mxu0 0.0
        %964 = vmatmul.mubr.f32.gmra.mrb[0].mxu0 %v796
        %v965 = vpop.f32.mrb[0].mxu0
        %v966 = vadd.f32 0.0, %v965
        %v967 = vpop.f32.mrb[0].mxu0
        %968 = vmatprep.mubr.f32.mxu0 0.0
        %969 = vmatmul.mubr.f32.gmra.mrb[0].mxu0 %v799
        %v970 = vpop.f32.mrb[0].mxu0
        %v971 = vadd.f32 0.0, %v970
        %v972 = vpop.f32.mrb[0].mxu0
        %973 = vmatprep.mubr.f32.mxu0 0.0
        %974 = vmatmul.mubr.f32.gmra.mrb[0].mxu0 %v802
        %v975 = vpop.f32.mrb[0].mxu0
        %v976 = vadd.f32 0.0, %v975
        %v977 = vpop.f32.mrb[0].mxu0
        %978 = vmatprep.mubr.f32.mxu0 0.0
        %979 = vmatmul.mubr.f32.gmra.mrb[0].mxu0 %v805
        %v980 = vpop.f32.mrb[0].mxu0
        %v981 = vadd.f32 0.0, %v980
        %v982 = vpop.f32.mrb[0].mxu0
        %983 = vmatprep.mubr.f32.mxu0 0.0
        %984 = vmatmul.mubr.f32.gmra.mrb[0].mxu0 %v808
        %v985 = vpop.f32.mrb[0].mxu0
        %v986 = vadd.f32 0.0, %v985
        %v987 = vpop.f32.mrb[0].mxu0
        %988 = vmatprep.mubr.f32.mxu0 0.0
        %989 = vmatmul.mubr.f32.gmra.mrb[0].mxu0 %v811
        %v990 = vpop.f32.mrb[0].mxu0
        %v991 = vadd.f32 0.0, %v990
        %v992 = vpop.f32.mrb[0].mxu0
        %993 = vmatprep.mubr.f32.mxu0 0.0
        %994 = vmatmul.mubr.f32.gmra.mrb[0].mxu0 %v814
        %v995 = vpop.f32.mrb[0].mxu0
        %v996 = vadd.f32 0.0, %v995
        %v997 = vpop.f32.mrb[0].mxu0
        %998 = vmatprep.mubr.f32.mxu0 0.0
        %999 = vmatmul.mubr.f32.gmra.mrb[0].mxu0 %v817
        %v1000 = vpop.f32.mrb[0].mxu0
        %v1001 = vadd.f32 0.0, %v1000
        %v1002 = vpop.f32.mrb[0].mxu0
        %1003 = vmatprep.mubr.f32.mxu0 0.0
        %1004 = vmatmul.mubr.f32.gmra.mrb[0].mxu0 %v820
        %v1005 = vpop.f32.mrb[0].mxu0
        %v1006 = vadd.f32 0.0, %v1005
        %v1007 = vpop.f32.mrb[0].mxu0
        %1008 = vmatprep.mubr.f32.mxu0 0.0
        %1009 = vmatmul.mubr.f32.gmra.mrb[0].mxu0 %v823
        %v1010 = vpop.f32.mrb[0].mxu0
        %v1011 = vadd.f32 0.0, %v1010
        %v1012 = vpop.f32.mrb[0].mxu0
        %1013 = vmatprep.mubr.f32.mxu0 0.0
        %1014 = vmatmul.mubr.f32.gmra.mrb[0].mxu0 %v826
        %v1015 = vpop.f32.mrb[0].mxu0
        %v1016 = vadd.f32 0.0, %v1015
        %v1017 = vpop.f32.mrb[0].mxu0
        %1018 = vmatprep.mubr.f32.mxu0 0.0
        %1019 = vmatmul.mubr.f32.gmra.mrb[0].mxu0 %v829
        %v1020 = vpop.f32.mrb[0].mxu0
        %v1021 = vadd.f32 0.0, %v1020
        %v1022 = vpop.f32.mrb[0].mxu0
        %1023 = vmatprep.mubr.f32.mxu0 0.0
        %1024 = vmatmul.mubr.f32.gmra.mrb[0].mxu0 %v832
        %v1025 = vpop.f32.mrb[0].mxu0
        %v1026 = vadd.f32 0.0, %v1025
        %v1027 = vpop.f32.mrb[0].mxu0
        %1028 = vmatprep.mubr.f32.mxu0 0.0
        %1029 = vmatmul.mubr.f32.gmra.mrb[0].mxu0 %v835
        %v1030 = vpop.f32.mrb[0].mxu0
        %v1031 = vadd.f32 0.0, %v1030
        %v1032 = vpop.f32.mrb[0].mxu0
        %1033 = vmatprep.mubr.f32.mxu0 0.0
        %1034 = vmatmul.mubr.f32.gmra.mrb[0].mxu0 %v838
        %v1035 = vpop.f32.mrb[0].mxu0
        %v1036 = vadd.f32 0.0, %v1035
        %v1037 = vpop.f32.mrb[0].mxu0
        %1038 = vmatprep.mubr.f32.mxu0 0.0
        %1039 = vmatmul.mubr.f32.gmra.mrb[0].mxu0 %v841
        %v1040 = vpop.f32.mrb[0].mxu0
        %v1041 = vadd.f32 0.0, %v1040
        %v1042 = vpop.f32.mrb[0].mxu0
        %1043 = vmatprep.mubr.f32.mxu0 0.0
        %1044 = vmatmul.mubr.f32.gmra.mrb[0].mxu0 %v844
        %v1045 = vpop.f32.mrb[0].mxu0
        %v1046 = vadd.f32 0.0, %v1045
        %v1047 = vpop.f32.mrb[0].mxu0
        %1048 = vmatprep.mubr.f32.mxu0 0.0
        %1049 = vmatmul.mubr.f32.gmra.mrb[0].mxu0 %v847
        %v1050 = vpop.f32.mrb[0].mxu0
        %v1051 = vadd.f32 0.0, %v1050
        %v1052 = vpop.f32.mrb[0].mxu0
        %1053 = vmatprep.mubr.f32.mxu0 0.0
        %1054 = vmatmul.mubr.f32.gmra.mrb[0].mxu0 %v850
        %v1055 = vpop.f32.mrb[0].mxu0
        %v1056 = vadd.f32 0.0, %v1055
        %v1057 = vpop.f32.mrb[0].mxu0
        %1058 = vmatprep.mubr.f32.mxu0 0.0
        %1059 = vmatmul.mubr.f32.gmra.mrb[0].mxu0 %v853
        %v1060 = vpop.f32.mrb[0].mxu0
        %v1061 = vadd.f32 0.0, %v1060
        %v1062 = vpop.f32.mrb[0].mxu0
        %1063 = vmatprep.mubr.f32.mxu0 0.0
        %1064 = vmatmul.mubr.f32.gmra.mrb[0].mxu0 %v856
        %v1065 = vpop.f32.mrb[0].mxu0
        %v1066 = vadd.f32 0.0, %v1065
        %v1067 = vpop.f32.mrb[0].mxu0
        %1068 = vmatprep.mubr.f32.mxu0 0.0
        %1069 = vmatmul.mubr.f32.gmra.mrb[0].mxu0 %v859
        %v1070 = vpop.f32.mrb[0].mxu0
        %v1071 = vadd.f32 0.0, %v1070
        %v1072 = vpop.f32.mrb[0].mxu0
        %1073 = vmatprep.mubr.f32.mxu0 0.0
        %1074 = vmatmul.mubr.f32.gmra.mrb[0].mxu0 %v862
        %v1075 = vpop.f32.mrb[0].mxu0
        %v1076 = vadd.f32 0.0, %v1075
        %v1077 = vpop.f32.mrb[0].mxu0
        %1078 = vmatprep.mubr.f32.mxu0 0.0
        %1079 = vmatmul.mubr.f32.gmra.mrb[0].mxu0 %v865
        %v1080 = vpop.f32.mrb[0].mxu0
        %v1081 = vadd.f32 0.0, %v1080
        %v1082 = vpop.f32.mrb[0].mxu0
        %1083 = vmatprep.mubr.f32.mxu0 0.0
        %1084 = vmatmul.mubr.f32.gmra.mrb[0].mxu0 %v868
        %v1085 = vpop.f32.mrb[0].mxu0
        %v1086 = vadd.f32 0.0, %v1085
        %v1087 = vpop.f32.mrb[0].mxu0
        %1088 = vmatprep.mubr.f32.mxu0 0.0
        %1089 = vmatmul.mubr.f32.gmra.mrb[0].mxu0 %v871
        %v1090 = vpop.f32.mrb[0].mxu0
        %v1091 = vadd.f32 0.0, %v1090
        %v1092 = vpop.f32.mrb[0].mxu0
        %1093 = vmatprep.mubr.f32.mxu0 0.0
        %1094 = vmatmul.mubr.f32.gmra.mrb[0].mxu0 %v874
        %v1095 = vpop.f32.mrb[0].mxu0
        %v1096 = vadd.f32 0.0, %v1095
        %v1097 = vpop.f32.mrb[0].mxu0
        %1098 = vmatprep.mubr.f32.mxu0 0.0
        %1099 = vmatmul.mubr.f32.gmra.mrb[0].mxu0 %v877
        %v1100 = vpop.f32.mrb[0].mxu0
        %v1101 = vadd.f32 0.0, %v1100
        %v1102 = vpop.f32.mrb[0].mxu0
        %1103 = vdwg.mxu0
        %1104 = vst.msk [vmem:[%s194] sm:$0xff] %vm714, %v946
        %1105 = vst.msk [vmem:[%s194 + $0x8] sm:$0xff] %vm714, %v951
        %1106 = vst.msk [vmem:[%s194 + $0x10] sm:$0xff] %vm714, %v956
        %1107 = vst.msk [vmem:[%s194 + $0x18] sm:$0xff] %vm714, %v961
        %1108 = vst.msk [vmem:[%s194 + $0x20] sm:$0xff] %vm714, %v966
        %1109 = vst.msk [vmem:[%s194 + $0x28] sm:$0xff] %vm714, %v971
        %1110 = vst.msk [vmem:[%s194 + $0x30] sm:$0xff] %vm714, %v976
        %1111 = vst.msk [vmem:[%s194 + $0x38] sm:$0xff] %vm714, %v981
        %1112 = vst.msk [vmem:[%s194 + $0x40] sm:$0xff] %vm714, %v986
        %1113 = vst.msk [vmem:[%s194 + $0x48] sm:$0xff] %vm714, %v991
        %1114 = vst.msk [vmem:[%s194 + $0x50] sm:$0xff] %vm714, %v996
        %1115 = vst.msk [vmem:[%s194 + $0x58] sm:$0xff] %vm714, %v1001
        %1116 = vst.msk [vmem:[%s194 + $0x60] sm:$0xff] %vm714, %v1006
        %1117 = vst.msk [vmem:[%s194 + $0x68] sm:$0xff] %vm714, %v1011
        %1118 = vst.msk [vmem:[%s194 + $0x70] sm:$0xff] %vm714, %v1016
        %1119 = vst.msk [vmem:[%s194 + $0x78] sm:$0xff] %vm714, %v1021
        %1120 = vst.msk [vmem:[%s194 + $0x80] sm:$0xff] %vm714, %v1026
        %1121 = vst.msk [vmem:[%s194 + $0x88] sm:$0xff] %vm714, %v1031
        %1122 = vst.msk [vmem:[%s194 + $0x90] sm:$0xff] %vm714, %v1036
        %1123 = vst.msk [vmem:[%s194 + $0x98] sm:$0xff] %vm714, %v1041
        %1124 = vst.msk [vmem:[%s194 + $0xa0] sm:$0xff] %vm714, %v1046
        %1125 = vst.msk [vmem:[%s194 + $0xa8] sm:$0xff] %vm714, %v1051
        %1126 = vst.msk [vmem:[%s194 + $0xb0] sm:$0xff] %vm714, %v1056
        %1127 = vst.msk [vmem:[%s194 + $0xb8] sm:$0xff] %vm714, %v1061
        %1128 = vst.msk [vmem:[%s194 + $0xc0] sm:$0xff] %vm714, %v1066
        %1129 = vst.msk [vmem:[%s194 + $0xc8] sm:$0xff] %vm714, %v1071
        %1130 = vst.msk [vmem:[%s194 + $0xd0] sm:$0xff] %vm714, %v1076
        %1131 = vst.msk [vmem:[%s194 + $0xd8] sm:$0xff] %vm714, %v1081
        %1132 = vst.msk [vmem:[%s194 + $0xe0] sm:$0xff] %vm714, %v1086
        %1133 = vst.msk [vmem:[%s194 + $0xe8] sm:$0xff] %vm714, %v1091
        %1134 = vst.msk [vmem:[%s194 + $0xf0] sm:$0xff] %vm714, %v1096
        %1135 = vst.msk [vmem:[%s194 + $0xf8] sm:$0xff] %vm714, %v1101
        %v1136 = vsel %vm714, %v946, 0.0
        %v1137 = vsel %vm714, %v951, 0.0
        %v1138 = vadd.f32 %v1136, %v1137
        %v1139 = vsel %vm714, %v956, 0.0
        %v1140 = vadd.f32 %v1138, %v1139
        %v1141 = vsel %vm714, %v961, 0.0
        %v1142 = vadd.f32 %v1140, %v1141
        %v1143 = vsel %vm714, %v966, 0.0
        %v1144 = vadd.f32 %v1142, %v1143
        %v1145 = vsel %vm714, %v971, 0.0
        %v1146 = vadd.f32 %v1144, %v1145
        %v1147 = vsel %vm714, %v976, 0.0
        %v1148 = vadd.f32 %v1146, %v1147
        %v1149 = vsel %vm714, %v981, 0.0
        %v1150 = vadd.f32 %v1148, %v1149
        %v1151 = vsel %vm714, %v986, 0.0
        %v1152 = vadd.f32 %v1150, %v1151
        %v1153 = vsel %vm714, %v991, 0.0
        %v1154 = vadd.f32 %v1152, %v1153
        %v1155 = vsel %vm714, %v996, 0.0
        %v1156 = vadd.f32 %v1154, %v1155
        %v1157 = vsel %vm714, %v1001, 0.0
        %v1158 = vadd.f32 %v1156, %v1157
        %v1159 = vsel %vm714, %v1006, 0.0
        %v1160 = vadd.f32 %v1158, %v1159
        %v1161 = vsel %vm714, %v1011, 0.0
        %v1162 = vadd.f32 %v1160, %v1161
        %v1163 = vsel %vm714, %v1016, 0.0
        %v1164 = vadd.f32 %v1162, %v1163
        %v1165 = vsel %vm714, %v1021, 0.0
        %v1166 = vadd.f32 %v1164, %v1165
        %v1167 = vsel %vm714, %v1026, 0.0
        %v1168 = vadd.f32 %v1166, %v1167
        %v1169 = vsel %vm714, %v1031, 0.0
        %v1170 = vadd.f32 %v1168, %v1169
        %v1171 = vsel %vm714, %v1036, 0.0
        %v1172 = vadd.f32 %v1170, %v1171
        %v1173 = vsel %vm714, %v1041, 0.0
        %v1174 = vadd.f32 %v1172, %v1173
        %v1175 = vsel %vm714, %v1046, 0.0
        %v1176 = vadd.f32 %v1174, %v1175
        %v1177 = vsel %vm714, %v1051, 0.0
        %v1178 = vadd.f32 %v1176, %v1177
        %v1179 = vsel %vm714, %v1056, 0.0
        %v1180 = vadd.f32 %v1178, %v1179
        %v1181 = vsel %vm714, %v1061, 0.0
        %v1182 = vadd.f32 %v1180, %v1181
        %v1183 = vsel %vm714, %v1066, 0.0
        %v1184 = vadd.f32 %v1182, %v1183
        %v1185 = vsel %vm714, %v1071, 0.0
        %v1186 = vadd.f32 %v1184, %v1185
        %v1187 = vsel %vm714, %v1076, 0.0
        %v1188 = vadd.f32 %v1186, %v1187
        %v1189 = vsel %vm714, %v1081, 0.0
        %v1190 = vadd.f32 %v1188, %v1189
        %v1191 = vsel %vm714, %v1086, 0.0
        %v1192 = vadd.f32 %v1190, %v1191
        %v1193 = vsel %vm714, %v1091, 0.0
        %v1194 = vadd.f32 %v1192, %v1193
        %v1195 = vsel %vm714, %v1096, 0.0
        %v1196 = vadd.f32 %v1194, %v1195
        %v1197 = vsel %vm714, %v1101, 0.0
        %v1198 = vadd.f32 %v1196, %v1197
        %v1199 = vrot.slane %v1198, 4
        %v1200 = vadd.f32 %v1198, %v1199
        %v1201 = vrot.slane %v1200, 2
        %v1202 = vadd.f32 %v1200, %v1201
        %v1203 = vrot.slane %v1202, 1
        %v1204 = vadd.f32 %v1202, %v1203
        %v1205 = vadd.f32 %v1204, 0.0
        %v1206 = vmul.f32 %v946, %v946
        %v1207 = vmul.f32 %v951, %v951
        %v1208 = vmul.f32 %v956, %v956
        %v1209 = vmul.f32 %v961, %v961
        %v1210 = vmul.f32 %v966, %v966
        %v1211 = vmul.f32 %v971, %v971
        %v1212 = vmul.f32 %v976, %v976
        %v1213 = vmul.f32 %v981, %v981
        %v1214 = vmul.f32 %v986, %v986
        %v1215 = vmul.f32 %v991, %v991
        %v1216 = vmul.f32 %v996, %v996
        %v1217 = vmul.f32 %v1001, %v1001
        %v1218 = vmul.f32 %v1006, %v1006
        %v1219 = vmul.f32 %v1011, %v1011
        %v1220 = vmul.f32 %v1016, %v1016
        %v1221 = vmul.f32 %v1021, %v1021
        %v1222 = vmul.f32 %v1026, %v1026
        %v1223 = vmul.f32 %v1031, %v1031
        %v1224 = vmul.f32 %v1036, %v1036
        %v1225 = vmul.f32 %v1041, %v1041
        %v1226 = vmul.f32 %v1046, %v1046
        %v1227 = vmul.f32 %v1051, %v1051
        %v1228 = vmul.f32 %v1056, %v1056
        %v1229 = vmul.f32 %v1061, %v1061
        %v1230 = vmul.f32 %v1066, %v1066
        %v1231 = vmul.f32 %v1071, %v1071
        %v1232 = vmul.f32 %v1076, %v1076
        %v1233 = vmul.f32 %v1081, %v1081
        %v1234 = vmul.f32 %v1086, %v1086
        %v1235 = vmul.f32 %v1091, %v1091
        %v1236 = vmul.f32 %v1096, %v1096
        %v1237 = vmul.f32 %v1101, %v1101
        %v1238 = vsel %vm714, %v1206, 0.0
        %v1239 = vsel %vm714, %v1207, 0.0
        %v1240 = vadd.f32 %v1238, %v1239
        %v1241 = vsel %vm714, %v1208, 0.0
        %v1242 = vadd.f32 %v1240, %v1241
        %v1243 = vsel %vm714, %v1209, 0.0
        %v1244 = vadd.f32 %v1242, %v1243
        %v1245 = vsel %vm714, %v1210, 0.0
        %v1246 = vadd.f32 %v1244, %v1245
        %v1247 = vsel %vm714, %v1211, 0.0
        %v1248 = vadd.f32 %v1246, %v1247
        %v1249 = vsel %vm714, %v1212, 0.0
        %v1250 = vadd.f32 %v1248, %v1249
        %v1251 = vsel %vm714, %v1213, 0.0
        %v1252 = vadd.f32 %v1250, %v1251
        %v1253 = vsel %vm714, %v1214, 0.0
        %v1254 = vadd.f32 %v1252, %v1253
        %v1255 = vsel %vm714, %v1215, 0.0
        %v1256 = vadd.f32 %v1254, %v1255
        %v1257 = vsel %vm714, %v1216, 0.0
        %v1258 = vadd.f32 %v1256, %v1257
        %v1259 = vsel %vm714, %v1217, 0.0
        %v1260 = vadd.f32 %v1258, %v1259
        %v1261 = vsel %vm714, %v1218, 0.0
        %v1262 = vadd.f32 %v1260, %v1261
        %v1263 = vsel %vm714, %v1219, 0.0
        %v1264 = vadd.f32 %v1262, %v1263
        %v1265 = vsel %vm714, %v1220, 0.0
        %v1266 = vadd.f32 %v1264, %v1265
        %v1267 = vsel %vm714, %v1221, 0.0
        %v1268 = vadd.f32 %v1266, %v1267
        %v1269 = vsel %vm714, %v1222, 0.0
        %v1270 = vadd.f32 %v1268, %v1269
        %v1271 = vsel %vm714, %v1223, 0.0
        %v1272 = vadd.f32 %v1270, %v1271
        %v1273 = vsel %vm714, %v1224, 0.0
        %v1274 = vadd.f32 %v1272, %v1273
        %v1275 = vsel %vm714, %v1225, 0.0
        %v1276 = vadd.f32 %v1274, %v1275
        %v1277 = vsel %vm714, %v1226, 0.0
        %v1278 = vadd.f32 %v1276, %v1277
        %v1279 = vsel %vm714, %v1227, 0.0
        %v1280 = vadd.f32 %v1278, %v1279
        %v1281 = vsel %vm714, %v1228, 0.0
        %v1282 = vadd.f32 %v1280, %v1281
        %v1283 = vsel %vm714, %v1229, 0.0
        %v1284 = vadd.f32 %v1282, %v1283
        %v1285 = vsel %vm714, %v1230, 0.0
        %v1286 = vadd.f32 %v1284, %v1285
        %v1287 = vsel %vm714, %v1231, 0.0
        %v1288 = vadd.f32 %v1286, %v1287
        %v1289 = vsel %vm714, %v1232, 0.0
        %v1290 = vadd.f32 %v1288, %v1289
        %v1291 = vsel %vm714, %v1233, 0.0
        %v1292 = vadd.f32 %v1290, %v1291
        %v1293 = vsel %vm714, %v1234, 0.0
        %v1294 = vadd.f32 %v1292, %v1293
        %v1295 = vsel %vm714, %v1235, 0.0
        %v1296 = vadd.f32 %v1294, %v1295
        %v1297 = vsel %vm714, %v1236, 0.0
        %v1298 = vadd.f32 %v1296, %v1297
        %v1299 = vsel %vm714, %v1237, 0.0
        %v1300 = vadd.f32 %v1298, %v1299
        %v1301 = vrot.slane %v1300, 4
        %v1302 = vadd.f32 %v1300, %v1301
        %v1303 = vrot.slane %v1302, 2
        %v1304 = vadd.f32 %v1302, %v1303
        %v1305 = vrot.slane %v1304, 1
        %v1306 = vadd.f32 %v1304, %v1305
        %v1307 = vadd.f32 %v1306, 0.0
        %1308 = vrot.lane.b32.xlu0 %v308, 4
        %v1309 = vpop.permute.xlu0 %1308
        %1310 = vrot.lane.b32.xlu0 %v313, 4
        %v1311 = vpop.permute.xlu0 %1310
        %1312 = vrot.lane.b32.xlu0 %v318, 4
        %v1313 = vpop.permute.xlu0 %1312
        %1314 = vrot.lane.b32.xlu0 %v323, 4
        %v1315 = vpop.permute.xlu0 %1314
        %1316 = vrot.lane.b32.xlu0 %v328, 4
        %v1317 = vpop.permute.xlu0 %1316
        %1318 = vrot.lane.b32.xlu0 %v333, 4
        %v1319 = vpop.permute.xlu0 %1318
        %1320 = vrot.lane.b32.xlu0 %v338, 4
        %v1321 = vpop.permute.xlu0 %1320
        %1322 = vrot.lane.b32.xlu0 %v343, 4
        %v1323 = vpop.permute.xlu0 %1322
        %1324 = vrot.lane.b32.xlu0 %v348, 4
        %v1325 = vpop.permute.xlu0 %1324
        %1326 = vrot.lane.b32.xlu0 %v353, 4
        %v1327 = vpop.permute.xlu0 %1326
        %1328 = vrot.lane.b32.xlu0 %v358, 4
        %v1329 = vpop.permute.xlu0 %1328
        %1330 = vrot.lane.b32.xlu0 %v363, 4
        %v1331 = vpop.permute.xlu0 %1330
        %1332 = vrot.lane.b32.xlu0 %v368, 4
        %v1333 = vpop.permute.xlu0 %1332
        %1334 = vrot.lane.b32.xlu0 %v373, 4
        %v1335 = vpop.permute.xlu0 %1334
        %1336 = vrot.lane.b32.xlu0 %v378, 4
        %v1337 = vpop.permute.xlu0 %1336
        %1338 = vrot.lane.b32.xlu0 %v383, 4
        %v1339 = vpop.permute.xlu0 %1338
        %1356 = vrot.lane.b32.xlu0 %v207, 8
        %v1357 = vpop.permute.xlu0 %1356
        %1358 = vrot.lane.b32.xlu0 %v210, 8
        %v1359 = vpop.permute.xlu0 %1358
        %1360 = vrot.lane.b32.xlu0 %v213, 8
        %v1361 = vpop.permute.xlu0 %1360
        %1362 = vrot.lane.b32.xlu0 %v216, 8
        %v1363 = vpop.permute.xlu0 %1362
        %1364 = vrot.lane.b32.xlu0 %v219, 8
        %v1365 = vpop.permute.xlu0 %1364
        %1366 = vrot.lane.b32.xlu0 %v222, 8
        %v1367 = vpop.permute.xlu0 %1366
        %1368 = vrot.lane.b32.xlu0 %v225, 8
        %v1369 = vpop.permute.xlu0 %1368
        %1370 = vrot.lane.b32.xlu0 %v228, 8
        %v1371 = vpop.permute.xlu0 %1370
        %1372 = vrot.lane.b32.xlu0 %v231, 8
        %v1373 = vpop.permute.xlu0 %1372
        %1374 = vrot.lane.b32.xlu0 %v234, 8
        %v1375 = vpop.permute.xlu0 %1374
        %1376 = vrot.lane.b32.xlu0 %v237, 8
        %v1377 = vpop.permute.xlu0 %1376
        %1378 = vrot.lane.b32.xlu0 %v240, 8
        %v1379 = vpop.permute.xlu0 %1378
        %1380 = vrot.lane.b32.xlu0 %v243, 8
        %v1381 = vpop.permute.xlu0 %1380
        %1382 = vrot.lane.b32.xlu0 %v246, 8
        %v1383 = vpop.permute.xlu0 %1382
        %1384 = vrot.lane.b32.xlu0 %v249, 8
        %v1385 = vpop.permute.xlu0 %1384
        %1386 = vrot.lane.b32.xlu0 %v252, 8
        %v1387 = vpop.permute.xlu0 %1386
        %1404 = vrot.lane.b32.xlu0 %v313, 12
        %v1405 = vpop.permute.xlu0 %1404
        %1406 = vrot.lane.b32.xlu0 %v318, 12
        %v1407 = vpop.permute.xlu0 %1406
        %1408 = vrot.lane.b32.xlu0 %v323, 12
        %v1409 = vpop.permute.xlu0 %1408
        %1410 = vrot.lane.b32.xlu0 %v328, 12
        %v1411 = vpop.permute.xlu0 %1410
        %1412 = vrot.lane.b32.xlu0 %v333, 12
        %v1413 = vpop.permute.xlu0 %1412
        %1414 = vrot.lane.b32.xlu0 %v338, 12
        %v1415 = vpop.permute.xlu0 %1414
        %1416 = vrot.lane.b32.xlu0 %v343, 12
        %v1417 = vpop.permute.xlu0 %1416
        %1418 = vrot.lane.b32.xlu0 %v348, 12
        %v1419 = vpop.permute.xlu0 %1418
        %1420 = vrot.lane.b32.xlu0 %v353, 12
        %v1421 = vpop.permute.xlu0 %1420
        %1422 = vrot.lane.b32.xlu0 %v358, 12
        %v1423 = vpop.permute.xlu0 %1422
        %1424 = vrot.lane.b32.xlu0 %v363, 12
        %v1425 = vpop.permute.xlu0 %1424
        %1426 = vrot.lane.b32.xlu0 %v368, 12
        %v1427 = vpop.permute.xlu0 %1426
        %1428 = vrot.lane.b32.xlu0 %v373, 12
        %v1429 = vpop.permute.xlu0 %1428
        %1430 = vrot.lane.b32.xlu0 %v378, 12
        %v1431 = vpop.permute.xlu0 %1430
        %1432 = vrot.lane.b32.xlu0 %v383, 12
        %v1433 = vpop.permute.xlu0 %1432
        %1434 = vrot.lane.b32.xlu0 %v583, 12
        %v1435 = vpop.permute.xlu0 %1434
        %v1452 = vsel %vm681, %v204, %v1309
        %v1453 = vsel %vm681, %v207, %v1311
        %v1454 = vsel %vm681, %v210, %v1313
        %v1455 = vsel %vm681, %v213, %v1315
        %v1456 = vsel %vm681, %v216, %v1317
        %v1457 = vsel %vm681, %v219, %v1319
        %v1458 = vsel %vm681, %v222, %v1321
        %v1459 = vsel %vm681, %v225, %v1323
        %v1460 = vsel %vm681, %v228, %v1325
        %v1461 = vsel %vm681, %v231, %v1327
        %v1462 = vsel %vm681, %v234, %v1329
        %v1463 = vsel %vm681, %v237, %v1331
        %v1464 = vsel %vm681, %v240, %v1333
        %v1465 = vsel %vm681, %v243, %v1335
        %v1466 = vsel %vm681, %v246, %v1337
        %v1467 = vsel %vm681, %v249, %v1339
        %v1468 = vsel %vm714, %v1452, %v1357
        %v1469 = vsel %vm714, %v1453, %v1359
        %v1470 = vsel %vm714, %v1454, %v1361
        %v1471 = vsel %vm714, %v1455, %v1363
        %v1472 = vsel %vm714, %v1456, %v1365
        %v1473 = vsel %vm714, %v1457, %v1367
        %v1474 = vsel %vm714, %v1458, %v1369
        %v1475 = vsel %vm714, %v1459, %v1371
        %v1476 = vsel %vm714, %v1460, %v1373
        %v1477 = vsel %vm714, %v1461, %v1375
        %v1478 = vsel %vm714, %v1462, %v1377
        %v1479 = vsel %vm714, %v1463, %v1379
        %v1480 = vsel %vm714, %v1464, %v1381
        %v1481 = vsel %vm714, %v1465, %v1383
        %v1482 = vsel %vm714, %v1466, %v1385
        %v1483 = vsel %vm714, %v1467, %v1387
        %v1484 = vsel %vm747, %v1468, %v1405
        %v1485 = vsel %vm747, %v1469, %v1407
        %v1486 = vsel %vm747, %v1470, %v1409
        %v1487 = vsel %vm747, %v1471, %v1411
        %v1488 = vsel %vm747, %v1472, %v1413
        %v1489 = vsel %vm747, %v1473, %v1415
        %v1490 = vsel %vm747, %v1474, %v1417
        %v1491 = vsel %vm747, %v1475, %v1419
        %v1492 = vsel %vm747, %v1476, %v1421
        %v1493 = vsel %vm747, %v1477, %v1423
        %v1494 = vsel %vm747, %v1478, %v1425
        %v1495 = vsel %vm747, %v1479, %v1427
        %v1496 = vsel %vm747, %v1480, %v1429
        %v1497 = vsel %vm747, %v1481, %v1431
        %v1498 = vsel %vm747, %v1482, %v1433
        %v1499 = vsel %vm747, %v1483, %v1435
        %s1500 = scalar_lea.vmem %s1, 16
        %v1501 = vld [vmem:[%s1500] sm:$0xff]
        %v1502 = vld [vmem:[%s1500 + $0x8] sm:$0xff]
        %v1519 = vrot.slane %v748, 1
        %v1520 = vrot.slane %v749, 1
        %v1521 = vsel %vm304, %v1519, %v1520
        %v1522 = vrot.slane %v1484, 1
        %v1523 = vsel %vm304, %v1520, %v1522
        %v1524 = vrot.slane %v750, 1
        %v1525 = vrot.slane %v751, 1
        %v1526 = vsel %vm304, %v1524, %v1525
        %v1527 = vrot.slane %v1485, 1
        %v1528 = vsel %vm304, %v1525, %v1527
        %v1529 = vrot.slane %v752, 1
        %v1530 = vrot.slane %v753, 1
        %v1531 = vsel %vm304, %v1529, %v1530
        %v1532 = vrot.slane %v1486, 1
        %v1533 = vsel %vm304, %v1530, %v1532
        %v1534 = vrot.slane %v754, 1
        %v1535 = vrot.slane %v755, 1
        %v1536 = vsel %vm304, %v1534, %v1535
        %v1537 = vrot.slane %v1487, 1
        %v1538 = vsel %vm304, %v1535, %v1537
        %v1539 = vrot.slane %v756, 1
        %v1540 = vrot.slane %v757, 1
        %v1541 = vsel %vm304, %v1539, %v1540
        %v1542 = vrot.slane %v1488, 1
        %v1543 = vsel %vm304, %v1540, %v1542
        %v1544 = vrot.slane %v758, 1
        %v1545 = vrot.slane %v759, 1
        %v1546 = vsel %vm304, %v1544, %v1545
        %v1547 = vrot.slane %v1489, 1
        %v1548 = vsel %vm304, %v1545, %v1547
        %v1549 = vrot.slane %v760, 1
        %v1550 = vrot.slane %v761, 1
        %v1551 = vsel %vm304, %v1549, %v1550
        %v1552 = vrot.slane %v1490, 1
        %v1553 = vsel %vm304, %v1550, %v1552
        %v1554 = vrot.slane %v762, 1
        %v1555 = vrot.slane %v763, 1
        %v1556 = vsel %vm304, %v1554, %v1555
        %v1557 = vrot.slane %v1491, 1
        %v1558 = vsel %vm304, %v1555, %v1557
        %v1559 = vrot.slane %v764, 1
        %v1560 = vrot.slane %v765, 1
        %v1561 = vsel %vm304, %v1559, %v1560
        %v1562 = vrot.slane %v1492, 1
        %v1563 = vsel %vm304, %v1560, %v1562
        %v1564 = vrot.slane %v766, 1
        %v1565 = vrot.slane %v767, 1
        %v1566 = vsel %vm304, %v1564, %v1565
        %v1567 = vrot.slane %v1493, 1
        %v1568 = vsel %vm304, %v1565, %v1567
        %v1569 = vrot.slane %v768, 1
        %v1570 = vrot.slane %v769, 1
        %v1571 = vsel %vm304, %v1569, %v1570
        %v1572 = vrot.slane %v1494, 1
        %v1573 = vsel %vm304, %v1570, %v1572
        %v1574 = vrot.slane %v770, 1
        %v1575 = vrot.slane %v771, 1
        %v1576 = vsel %vm304, %v1574, %v1575
        %v1577 = vrot.slane %v1495, 1
        %v1578 = vsel %vm304, %v1575, %v1577
        %v1579 = vrot.slane %v772, 1
        %v1580 = vrot.slane %v773, 1
        %v1581 = vsel %vm304, %v1579, %v1580
        %v1582 = vrot.slane %v1496, 1
        %v1583 = vsel %vm304, %v1580, %v1582
        %v1584 = vrot.slane %v774, 1
        %v1585 = vrot.slane %v775, 1
        %v1586 = vsel %vm304, %v1584, %v1585
        %v1587 = vrot.slane %v1497, 1
        %v1588 = vsel %vm304, %v1585, %v1587
        %v1589 = vrot.slane %v776, 1
        %v1590 = vrot.slane %v777, 1
        %v1591 = vsel %vm304, %v1589, %v1590
        %v1592 = vrot.slane %v1498, 1
        %v1593 = vsel %vm304, %v1590, %v1592
        %v1594 = vrot.slane %v778, 1
        %v1595 = vrot.slane %v779, 1
        %v1596 = vsel %vm304, %v1594, %v1595
        %v1597 = vrot.slane %v1499, 1
        %v1598 = vsel %vm304, %v1595, %v1597
        %v1599 = vsel %vm782, %v1521, 0
        %v1601 = vsel %vm782, %v1523, 0
        %v1603 = vsel %vm782, %v1526, 0
        %v1605 = vsel %vm782, %v1528, 0
        %v1607 = vsel %vm782, %v1531, 0
        %v1609 = vsel %vm782, %v1533, 0
        %v1611 = vsel %vm782, %v1536, 0
        %v1613 = vsel %vm782, %v1538, 0
        %v1615 = vsel %vm782, %v1541, 0
        %v1617 = vsel %vm782, %v1543, 0
        %v1619 = vsel %vm782, %v1546, 0
        %v1621 = vsel %vm782, %v1548, 0
        %v1623 = vsel %vm782, %v1551, 0
        %v1625 = vsel %vm782, %v1553, 0
        %v1627 = vsel %vm782, %v1556, 0
        %v1629 = vsel %vm782, %v1558, 0
        %v1631 = vsel %vm782, %v1561, 0
        %v1633 = vsel %vm782, %v1563, 0
        %v1635 = vsel %vm782, %v1566, 0
        %v1637 = vsel %vm782, %v1568, 0
        %v1639 = vsel %vm782, %v1571, 0
        %v1641 = vsel %vm782, %v1573, 0
        %v1643 = vsel %vm782, %v1576, 0
        %v1645 = vsel %vm782, %v1578, 0
        %v1647 = vsel %vm782, %v1581, 0
        %v1649 = vsel %vm782, %v1583, 0
        %v1651 = vsel %vm782, %v1586, 0
        %v1653 = vsel %vm782, %v1588, 0
        %v1655 = vsel %vm782, %v1591, 0
        %v1657 = vsel %vm782, %v1593, 0
        %v1659 = vsel %vm782, %v1596, 0
        %v1661 = vsel %vm782, %v1598, 0
        %1663 = vmatprep.subr.mxu0 0.0
        %1664 = vmatpush1.msra.mxu0 %v1501
        %1665 = vmatprep.subr.mxu0 0.0
        %1666 = vmatpush1.msra.mxu0 %v1502
        %1667 = vmatprep.subr.mxu0 0.0
        %1668 = vmatpush1.msra.mxu0 0.0
        %1669 = vmatprep.subr.mxu0 0.0
        %1670 = vmatpush1.msra.mxu0 0.0
        %1671 = vmatprep.subr.mxu0 0.0
        %1672 = vmatpush1.msra.mxu0 0.0
        %1673 = vmatprep.subr.mxu0 0.0
        %1674 = vmatpush1.msra.mxu0 0.0
        %1675 = vmatprep.subr.mxu0 0.0
        %1676 = vmatpush1.msra.mxu0 0.0
        %1677 = vmatprep.subr.mxu0 0.0
        %1678 = vmatpush1.msra.mxu0 0.0
        %1679 = vmatprep.subr.mxu0 0.0
        %1680 = vmatpush1.msra.mxu0 0.0
        %1681 = vmatprep.subr.mxu0 0.0
        %1682 = vmatpush1.msra.mxu0 0.0
        %1683 = vmatprep.subr.mxu0 0.0
        %1684 = vmatpush1.msra.mxu0 0.0
        %1685 = vmatprep.subr.mxu0 0.0
        %1686 = vmatpush1.msra.mxu0 0.0
        %1687 = vmatprep.subr.mxu0 0.0
        %1688 = vmatpush1.msra.mxu0 0.0
        %1689 = vmatprep.subr.mxu0 0.0
        %1690 = vmatpush1.msra.mxu0 0.0
        %1691 = vmatprep.subr.mxu0 0.0
        %1692 = vmatpush1.msra.mxu0 0.0
        %1693 = vmatprep.subr.mxu0 0.0
        %1694 = vmatpush1.msra.mxu0 0.0
        %1695 = vmatprep.subr.mxu0 0.0
        %1696 = vmatpush1.msra.mxu0 0.0
        %1697 = vmatprep.subr.mxu0 0.0
        %1698 = vmatpush1.msra.mxu0 0.0
        %1699 = vmatprep.subr.mxu0 0.0
        %1700 = vmatpush1.msra.mxu0 0.0
        %1701 = vmatprep.subr.mxu0 0.0
        %1702 = vmatpush1.msra.mxu0 0.0
        %1703 = vmatprep.subr.mxu0 0.0
        %1704 = vmatpush1.msra.mxu0 0.0
        %1705 = vmatprep.subr.mxu0 0.0
        %1706 = vmatpush1.msra.mxu0 0.0
        %1707 = vmatprep.subr.mxu0 0.0
        %1708 = vmatpush1.msra.mxu0 0.0
        %1709 = vmatprep.subr.mxu0 0.0
        %1710 = vmatpush1.msra.mxu0 0.0
        %1711 = vmatprep.subr.mxu0 0.0
        %1712 = vmatpush1.msra.mxu0 0.0
        %1713 = vmatprep.subr.mxu0 0.0
        %1714 = vmatpush1.msra.mxu0 0.0
        %1715 = vmatprep.subr.mxu0 0.0
        %1716 = vmatpush1.msra.mxu0 0.0
        %1717 = vmatprep.subr.mxu0 0.0
        %1718 = vmatpush1.msra.mxu0 0.0
        %1719 = vmatprep.subr.mxu0 0.0
        %1720 = vmatpush1.msra.mxu0 0.0
        %1721 = vmatprep.subr.mxu0 0.0
        %1722 = vmatpush1.msra.mxu0 0.0
        %1723 = vmatprep.subr.mxu0 0.0
        %1724 = vmatpush1.msra.mxu0 0.0
        %1725 = vmatprep.subr.mxu0 0.0
        %1726 = vmatpush1.msra.mxu0 0.0
        %1727 = vmatprep.mubr.f32.mxu0 0.0
        %1728 = vmatmul.mubr.f32.gmra.mrb[0].mxu0 %v1599
        %v1729 = vpop.f32.mrb[0].mxu0
        %v1730 = vadd.f32 0.0, %v1729
        %v1731 = vpop.f32.mrb[0].mxu0
        %1732 = vmatprep.mubr.f32.mxu0 0.0
        %1733 = vmatmul.mubr.f32.gmra.mrb[0].mxu0 %v1601
        %v1734 = vpop.f32.mrb[0].mxu0
        %v1735 = vadd.f32 0.0, %v1734
        %v1736 = vpop.f32.mrb[0].mxu0
        %1737 = vmatprep.mubr.f32.mxu0 0.0
        %1738 = vmatmul.mubr.f32.gmra.mrb[0].mxu0 %v1603
        %v1739 = vpop.f32.mrb[0].mxu0
        %v1740 = vadd.f32 0.0, %v1739
        %v1741 = vpop.f32.mrb[0].mxu0
        %1742 = vmatprep.mubr.f32.mxu0 0.0
        %1743 = vmatmul.mubr.f32.gmra.mrb[0].mxu0 %v1605
        %v1744 = vpop.f32.mrb[0].mxu0
        %v1745 = vadd.f32 0.0, %v1744
        %v1746 = vpop.f32.mrb[0].mxu0
        %1747 = vmatprep.mubr.f32.mxu0 0.0
        %1748 = vmatmul.mubr.f32.gmra.mrb[0].mxu0 %v1607
        %v1749 = vpop.f32.mrb[0].mxu0
        %v1750 = vadd.f32 0.0, %v1749
        %v1751 = vpop.f32.mrb[0].mxu0
        %1752 = vmatprep.mubr.f32.mxu0 0.0
        %1753 = vmatmul.mubr.f32.gmra.mrb[0].mxu0 %v1609
        %v1754 = vpop.f32.mrb[0].mxu0
        %v1755 = vadd.f32 0.0, %v1754
        %v1756 = vpop.f32.mrb[0].mxu0
        %1757 = vmatprep.mubr.f32.mxu0 0.0
        %1758 = vmatmul.mubr.f32.gmra.mrb[0].mxu0 %v1611
        %v1759 = vpop.f32.mrb[0].mxu0
        %v1760 = vadd.f32 0.0, %v1759
        %v1761 = vpop.f32.mrb[0].mxu0
        %1762 = vmatprep.mubr.f32.mxu0 0.0
        %1763 = vmatmul.mubr.f32.gmra.mrb[0].mxu0 %v1613
        %v1764 = vpop.f32.mrb[0].mxu0
        %v1765 = vadd.f32 0.0, %v1764
        %v1766 = vpop.f32.mrb[0].mxu0
        %1767 = vmatprep.mubr.f32.mxu0 0.0
        %1768 = vmatmul.mubr.f32.gmra.mrb[0].mxu0 %v1615
        %v1769 = vpop.f32.mrb[0].mxu0
        %v1770 = vadd.f32 0.0, %v1769
        %v1771 = vpop.f32.mrb[0].mxu0
        %1772 = vmatprep.mubr.f32.mxu0 0.0
        %1773 = vmatmul.mubr.f32.gmra.mrb[0].mxu0 %v1617
        %v1774 = vpop.f32.mrb[0].mxu0
        %v1775 = vadd.f32 0.0, %v1774
        %v1776 = vpop.f32.mrb[0].mxu0
        %1777 = vmatprep.mubr.f32.mxu0 0.0
        %1778 = vmatmul.mubr.f32.gmra.mrb[0].mxu0 %v1619
        %v1779 = vpop.f32.mrb[0].mxu0
        %v1780 = vadd.f32 0.0, %v1779
        %v1781 = vpop.f32.mrb[0].mxu0
        %1782 = vmatprep.mubr.f32.mxu0 0.0
        %1783 = vmatmul.mubr.f32.gmra.mrb[0].mxu0 %v1621
        %v1784 = vpop.f32.mrb[0].mxu0
        %v1785 = vadd.f32 0.0, %v1784
        %v1786 = vpop.f32.mrb[0].mxu0
        %1787 = vmatprep.mubr.f32.mxu0 0.0
        %1788 = vmatmul.mubr.f32.gmra.mrb[0].mxu0 %v1623
        %v1789 = vpop.f32.mrb[0].mxu0
        %v1790 = vadd.f32 0.0, %v1789
        %v1791 = vpop.f32.mrb[0].mxu0
        %1792 = vmatprep.mubr.f32.mxu0 0.0
        %1793 = vmatmul.mubr.f32.gmra.mrb[0].mxu0 %v1625
        %v1794 = vpop.f32.mrb[0].mxu0
        %v1795 = vadd.f32 0.0, %v1794
        %v1796 = vpop.f32.mrb[0].mxu0
        %1797 = vmatprep.mubr.f32.mxu0 0.0
        %1798 = vmatmul.mubr.f32.gmra.mrb[0].mxu0 %v1627
        %v1799 = vpop.f32.mrb[0].mxu0
        %v1800 = vadd.f32 0.0, %v1799
        %v1801 = vpop.f32.mrb[0].mxu0
        %1802 = vmatprep.mubr.f32.mxu0 0.0
        %1803 = vmatmul.mubr.f32.gmra.mrb[0].mxu0 %v1629
        %v1804 = vpop.f32.mrb[0].mxu0
        %v1805 = vadd.f32 0.0, %v1804
        %v1806 = vpop.f32.mrb[0].mxu0
        %1807 = vmatprep.mubr.f32.mxu0 0.0
        %1808 = vmatmul.mubr.f32.gmra.mrb[0].mxu0 %v1631
        %v1809 = vpop.f32.mrb[0].mxu0
        %v1810 = vadd.f32 0.0, %v1809
        %v1811 = vpop.f32.mrb[0].mxu0
        %1812 = vmatprep.mubr.f32.mxu0 0.0
        %1813 = vmatmul.mubr.f32.gmra.mrb[0].mxu0 %v1633
        %v1814 = vpop.f32.mrb[0].mxu0
        %v1815 = vadd.f32 0.0, %v1814
        %v1816 = vpop.f32.mrb[0].mxu0
        %1817 = vmatprep.mubr.f32.mxu0 0.0
        %1818 = vmatmul.mubr.f32.gmra.mrb[0].mxu0 %v1635
        %v1819 = vpop.f32.mrb[0].mxu0
        %v1820 = vadd.f32 0.0, %v1819
        %v1821 = vpop.f32.mrb[0].mxu0
        %1822 = vmatprep.mubr.f32.mxu0 0.0
        %1823 = vmatmul.mubr.f32.gmra.mrb[0].mxu0 %v1637
        %v1824 = vpop.f32.mrb[0].mxu0
        %v1825 = vadd.f32 0.0, %v1824
        %v1826 = vpop.f32.mrb[0].mxu0
        %1827 = vmatprep.mubr.f32.mxu0 0.0
        %1828 = vmatmul.mubr.f32.gmra.mrb[0].mxu0 %v1639
        %v1829 = vpop.f32.mrb[0].mxu0
        %v1830 = vadd.f32 0.0, %v1829
        %v1831 = vpop.f32.mrb[0].mxu0
        %1832 = vmatprep.mubr.f32.mxu0 0.0
        %1833 = vmatmul.mubr.f32.gmra.mrb[0].mxu0 %v1641
        %v1834 = vpop.f32.mrb[0].mxu0
        %v1835 = vadd.f32 0.0, %v1834
        %v1836 = vpop.f32.mrb[0].mxu0
        %1837 = vmatprep.mubr.f32.mxu0 0.0
        %1838 = vmatmul.mubr.f32.gmra.mrb[0].mxu0 %v1643
        %v1839 = vpop.f32.mrb[0].mxu0
        %v1840 = vadd.f32 0.0, %v1839
        %v1841 = vpop.f32.mrb[0].mxu0
        %1842 = vmatprep.mubr.f32.mxu0 0.0
        %1843 = vmatmul.mubr.f32.gmra.mrb[0].mxu0 %v1645
        %v1844 = vpop.f32.mrb[0].mxu0
        %v1845 = vadd.f32 0.0, %v1844
        %v1846 = vpop.f32.mrb[0].mxu0
        %1847 = vmatprep.mubr.f32.mxu0 0.0
        %1848 = vmatmul.mubr.f32.gmra.mrb[0].mxu0 %v1647
        %v1849 = vpop.f32.mrb[0].mxu0
        %v1850 = vadd.f32 0.0, %v1849
        %v1851 = vpop.f32.mrb[0].mxu0
        %1852 = vmatprep.mubr.f32.mxu0 0.0
        %1853 = vmatmul.mubr.f32.gmra.mrb[0].mxu0 %v1649
        %v1854 = vpop.f32.mrb[0].mxu0
        %v1855 = vadd.f32 0.0, %v1854
        %v1856 = vpop.f32.mrb[0].mxu0
        %1857 = vmatprep.mubr.f32.mxu0 0.0
        %1858 = vmatmul.mubr.f32.gmra.mrb[0].mxu0 %v1651
        %v1859 = vpop.f32.mrb[0].mxu0
        %v1860 = vadd.f32 0.0, %v1859
        %v1861 = vpop.f32.mrb[0].mxu0
        %1862 = vmatprep.mubr.f32.mxu0 0.0
        %1863 = vmatmul.mubr.f32.gmra.mrb[0].mxu0 %v1653
        %v1864 = vpop.f32.mrb[0].mxu0
        %v1865 = vadd.f32 0.0, %v1864
        %v1866 = vpop.f32.mrb[0].mxu0
        %1867 = vmatprep.mubr.f32.mxu0 0.0
        %1868 = vmatmul.mubr.f32.gmra.mrb[0].mxu0 %v1655
        %v1869 = vpop.f32.mrb[0].mxu0
        %v1870 = vadd.f32 0.0, %v1869
        %v1871 = vpop.f32.mrb[0].mxu0
        %1872 = vmatprep.mubr.f32.mxu0 0.0
        %1873 = vmatmul.mubr.f32.gmra.mrb[0].mxu0 %v1657
        %v1874 = vpop.f32.mrb[0].mxu0
        %v1875 = vadd.f32 0.0, %v1874
        %v1876 = vpop.f32.mrb[0].mxu0
        %1877 = vmatprep.mubr.f32.mxu0 0.0
        %1878 = vmatmul.mubr.f32.gmra.mrb[0].mxu0 %v1659
        %v1879 = vpop.f32.mrb[0].mxu0
        %v1880 = vadd.f32 0.0, %v1879
        %v1881 = vpop.f32.mrb[0].mxu0
        %1882 = vmatprep.mubr.f32.mxu0 0.0
        %1883 = vmatmul.mubr.f32.gmra.mrb[0].mxu0 %v1661
        %v1884 = vpop.f32.mrb[0].mxu0
        %v1885 = vadd.f32 0.0, %v1884
        %v1886 = vpop.f32.mrb[0].mxu0
        %1887 = vdwg.mxu0
        %s1888 = scalar_lea.vmem %s194, 256
        %1889 = vst.msk [vmem:[%s1888] sm:$0xff] %vm714, %v1730
        %1890 = vst.msk [vmem:[%s1888 + $0x8] sm:$0xff] %vm714, %v1735
        %1891 = vst.msk [vmem:[%s1888 + $0x10] sm:$0xff] %vm714, %v1740
        %1892 = vst.msk [vmem:[%s1888 + $0x18] sm:$0xff] %vm714, %v1745
        %1893 = vst.msk [vmem:[%s1888 + $0x20] sm:$0xff] %vm714, %v1750
        %1894 = vst.msk [vmem:[%s1888 + $0x28] sm:$0xff] %vm714, %v1755
        %1895 = vst.msk [vmem:[%s1888 + $0x30] sm:$0xff] %vm714, %v1760
        %1896 = vst.msk [vmem:[%s1888 + $0x38] sm:$0xff] %vm714, %v1765
        %1897 = vst.msk [vmem:[%s1888 + $0x40] sm:$0xff] %vm714, %v1770
        %1898 = vst.msk [vmem:[%s1888 + $0x48] sm:$0xff] %vm714, %v1775
        %1899 = vst.msk [vmem:[%s1888 + $0x50] sm:$0xff] %vm714, %v1780
        %1900 = vst.msk [vmem:[%s1888 + $0x58] sm:$0xff] %vm714, %v1785
        %1901 = vst.msk [vmem:[%s1888 + $0x60] sm:$0xff] %vm714, %v1790
        %1902 = vst.msk [vmem:[%s1888 + $0x68] sm:$0xff] %vm714, %v1795
        %1903 = vst.msk [vmem:[%s1888 + $0x70] sm:$0xff] %vm714, %v1800
        %1904 = vst.msk [vmem:[%s1888 + $0x78] sm:$0xff] %vm714, %v1805
        %1905 = vst.msk [vmem:[%s1888 + $0x80] sm:$0xff] %vm714, %v1810
        %1906 = vst.msk [vmem:[%s1888 + $0x88] sm:$0xff] %vm714, %v1815
        %1907 = vst.msk [vmem:[%s1888 + $0x90] sm:$0xff] %vm714, %v1820
        %1908 = vst.msk [vmem:[%s1888 + $0x98] sm:$0xff] %vm714, %v1825
        %1909 = vst.msk [vmem:[%s1888 + $0xa0] sm:$0xff] %vm714, %v1830
        %1910 = vst.msk [vmem:[%s1888 + $0xa8] sm:$0xff] %vm714, %v1835
        %1911 = vst.msk [vmem:[%s1888 + $0xb0] sm:$0xff] %vm714, %v1840
        %1912 = vst.msk [vmem:[%s1888 + $0xb8] sm:$0xff] %vm714, %v1845
        %1913 = vst.msk [vmem:[%s1888 + $0xc0] sm:$0xff] %vm714, %v1850
        %1914 = vst.msk [vmem:[%s1888 + $0xc8] sm:$0xff] %vm714, %v1855
        %1915 = vst.msk [vmem:[%s1888 + $0xd0] sm:$0xff] %vm714, %v1860
        %1916 = vst.msk [vmem:[%s1888 + $0xd8] sm:$0xff] %vm714, %v1865
        %1917 = vst.msk [vmem:[%s1888 + $0xe0] sm:$0xff] %vm714, %v1870
        %1918 = vst.msk [vmem:[%s1888 + $0xe8] sm:$0xff] %vm714, %v1875
        %1919 = vst.msk [vmem:[%s1888 + $0xf0] sm:$0xff] %vm714, %v1880
        %1920 = vst.msk [vmem:[%s1888 + $0xf8] sm:$0xff] %vm714, %v1885
        %v1921 = vsel %vm714, %v1730, 0.0
        %v1922 = vsel %vm714, %v1735, 0.0
        %v1923 = vadd.f32 %v1921, %v1922
        %v1924 = vsel %vm714, %v1740, 0.0
        %v1925 = vadd.f32 %v1923, %v1924
        %v1926 = vsel %vm714, %v1745, 0.0
        %v1927 = vadd.f32 %v1925, %v1926
        %v1928 = vsel %vm714, %v1750, 0.0
        %v1929 = vadd.f32 %v1927, %v1928
        %v1930 = vsel %vm714, %v1755, 0.0
        %v1931 = vadd.f32 %v1929, %v1930
        %v1932 = vsel %vm714, %v1760, 0.0
        %v1933 = vadd.f32 %v1931, %v1932
        %v1934 = vsel %vm714, %v1765, 0.0
        %v1935 = vadd.f32 %v1933, %v1934
        %v1936 = vsel %vm714, %v1770, 0.0
        %v1937 = vadd.f32 %v1935, %v1936
        %v1938 = vsel %vm714, %v1775, 0.0
        %v1939 = vadd.f32 %v1937, %v1938
        %v1940 = vsel %vm714, %v1780, 0.0
        %v1941 = vadd.f32 %v1939, %v1940
        %v1942 = vsel %vm714, %v1785, 0.0
        %v1943 = vadd.f32 %v1941, %v1942
        %v1944 = vsel %vm714, %v1790, 0.0
        %v1945 = vadd.f32 %v1943, %v1944
        %v1946 = vsel %vm714, %v1795, 0.0
        %v1947 = vadd.f32 %v1945, %v1946
        %v1948 = vsel %vm714, %v1800, 0.0
        %v1949 = vadd.f32 %v1947, %v1948
        %v1950 = vsel %vm714, %v1805, 0.0
        %v1951 = vadd.f32 %v1949, %v1950
        %v1952 = vsel %vm714, %v1810, 0.0
        %v1953 = vadd.f32 %v1951, %v1952
        %v1954 = vsel %vm714, %v1815, 0.0
        %v1955 = vadd.f32 %v1953, %v1954
        %v1956 = vsel %vm714, %v1820, 0.0
        %v1957 = vadd.f32 %v1955, %v1956
        %v1958 = vsel %vm714, %v1825, 0.0
        %v1959 = vadd.f32 %v1957, %v1958
        %v1960 = vsel %vm714, %v1830, 0.0
        %v1961 = vadd.f32 %v1959, %v1960
        %v1962 = vsel %vm714, %v1835, 0.0
        %v1963 = vadd.f32 %v1961, %v1962
        %v1964 = vsel %vm714, %v1840, 0.0
        %v1965 = vadd.f32 %v1963, %v1964
        %v1966 = vsel %vm714, %v1845, 0.0
        %v1967 = vadd.f32 %v1965, %v1966
        %v1968 = vsel %vm714, %v1850, 0.0
        %v1969 = vadd.f32 %v1967, %v1968
        %v1970 = vsel %vm714, %v1855, 0.0
        %v1971 = vadd.f32 %v1969, %v1970
        %v1972 = vsel %vm714, %v1860, 0.0
        %v1973 = vadd.f32 %v1971, %v1972
        %v1974 = vsel %vm714, %v1865, 0.0
        %v1975 = vadd.f32 %v1973, %v1974
        %v1976 = vsel %vm714, %v1870, 0.0
        %v1977 = vadd.f32 %v1975, %v1976
        %v1978 = vsel %vm714, %v1875, 0.0
        %v1979 = vadd.f32 %v1977, %v1978
        %v1980 = vsel %vm714, %v1880, 0.0
        %v1981 = vadd.f32 %v1979, %v1980
        %v1982 = vsel %vm714, %v1885, 0.0
        %v1983 = vadd.f32 %v1981, %v1982
        %v1984 = vrot.slane %v1983, 4
        %v1985 = vadd.f32 %v1983, %v1984
        %v1986 = vrot.slane %v1985, 2
        %v1987 = vadd.f32 %v1985, %v1986
        %v1988 = vrot.slane %v1987, 1
        %v1989 = vadd.f32 %v1987, %v1988
        %v1990 = vadd.f32 %v1205, %v1989
        %v1991 = vmul.f32 %v1730, %v1730
        %v1992 = vmul.f32 %v1735, %v1735
        %v1993 = vmul.f32 %v1740, %v1740
        %v1994 = vmul.f32 %v1745, %v1745
        %v1995 = vmul.f32 %v1750, %v1750
        %v1996 = vmul.f32 %v1755, %v1755
        %v1997 = vmul.f32 %v1760, %v1760
        %v1998 = vmul.f32 %v1765, %v1765
        %v1999 = vmul.f32 %v1770, %v1770
        %v2000 = vmul.f32 %v1775, %v1775
        %v2001 = vmul.f32 %v1780, %v1780
        %v2002 = vmul.f32 %v1785, %v1785
        %v2003 = vmul.f32 %v1790, %v1790
        %v2004 = vmul.f32 %v1795, %v1795
        %v2005 = vmul.f32 %v1800, %v1800
        %v2006 = vmul.f32 %v1805, %v1805
        %v2007 = vmul.f32 %v1810, %v1810
        %v2008 = vmul.f32 %v1815, %v1815
        %v2009 = vmul.f32 %v1820, %v1820
        %v2010 = vmul.f32 %v1825, %v1825
        %v2011 = vmul.f32 %v1830, %v1830
        %v2012 = vmul.f32 %v1835, %v1835
        %v2013 = vmul.f32 %v1840, %v1840
        %v2014 = vmul.f32 %v1845, %v1845
        %v2015 = vmul.f32 %v1850, %v1850
        %v2016 = vmul.f32 %v1855, %v1855
        %v2017 = vmul.f32 %v1860, %v1860
        %v2018 = vmul.f32 %v1865, %v1865
        %v2019 = vmul.f32 %v1870, %v1870
        %v2020 = vmul.f32 %v1875, %v1875
        %v2021 = vmul.f32 %v1880, %v1880
        %v2022 = vmul.f32 %v1885, %v1885
        %v2023 = vsel %vm714, %v1991, 0.0
        %v2024 = vsel %vm714, %v1992, 0.0
        %v2025 = vadd.f32 %v2023, %v2024
        %v2026 = vsel %vm714, %v1993, 0.0
        %v2027 = vadd.f32 %v2025, %v2026
        %v2028 = vsel %vm714, %v1994, 0.0
        %v2029 = vadd.f32 %v2027, %v2028
        %v2030 = vsel %vm714, %v1995, 0.0
        %v2031 = vadd.f32 %v2029, %v2030
        %v2032 = vsel %vm714, %v1996, 0.0
        %v2033 = vadd.f32 %v2031, %v2032
        %v2034 = vsel %vm714, %v1997, 0.0
        %v2035 = vadd.f32 %v2033, %v2034
        %v2036 = vsel %vm714, %v1998, 0.0
        %v2037 = vadd.f32 %v2035, %v2036
        %v2038 = vsel %vm714, %v1999, 0.0
        %v2039 = vadd.f32 %v2037, %v2038
        %v2040 = vsel %vm714, %v2000, 0.0
        %v2041 = vadd.f32 %v2039, %v2040
        %v2042 = vsel %vm714, %v2001, 0.0
        %v2043 = vadd.f32 %v2041, %v2042
        %v2044 = vsel %vm714, %v2002, 0.0
        %v2045 = vadd.f32 %v2043, %v2044
        %v2046 = vsel %vm714, %v2003, 0.0
        %v2047 = vadd.f32 %v2045, %v2046
        %v2048 = vsel %vm714, %v2004, 0.0
        %v2049 = vadd.f32 %v2047, %v2048
        %v2050 = vsel %vm714, %v2005, 0.0
        %v2051 = vadd.f32 %v2049, %v2050
        %v2052 = vsel %vm714, %v2006, 0.0
        %v2053 = vadd.f32 %v2051, %v2052
        %v2054 = vsel %vm714, %v2007, 0.0
        %v2055 = vadd.f32 %v2053, %v2054
        %v2056 = vsel %vm714, %v2008, 0.0
        %v2057 = vadd.f32 %v2055, %v2056
        %v2058 = vsel %vm714, %v2009, 0.0
        %v2059 = vadd.f32 %v2057, %v2058
        %v2060 = vsel %vm714, %v2010, 0.0
        %v2061 = vadd.f32 %v2059, %v2060
        %v2062 = vsel %vm714, %v2011, 0.0
        %v2063 = vadd.f32 %v2061, %v2062
        %v2064 = vsel %vm714, %v2012, 0.0
        %v2065 = vadd.f32 %v2063, %v2064
        %v2066 = vsel %vm714, %v2013, 0.0
        %v2067 = vadd.f32 %v2065, %v2066
        %v2068 = vsel %vm714, %v2014, 0.0
        %v2069 = vadd.f32 %v2067, %v2068
        %v2070 = vsel %vm714, %v2015, 0.0
        %v2071 = vadd.f32 %v2069, %v2070
        %v2072 = vsel %vm714, %v2016, 0.0
        %v2073 = vadd.f32 %v2071, %v2072
        %v2074 = vsel %vm714, %v2017, 0.0
        %v2075 = vadd.f32 %v2073, %v2074
        %v2076 = vsel %vm714, %v2018, 0.0
        %v2077 = vadd.f32 %v2075, %v2076
        %v2078 = vsel %vm714, %v2019, 0.0
        %v2079 = vadd.f32 %v2077, %v2078
        %v2080 = vsel %vm714, %v2020, 0.0
        %v2081 = vadd.f32 %v2079, %v2080
        %v2082 = vsel %vm714, %v2021, 0.0
        %v2083 = vadd.f32 %v2081, %v2082
        %v2084 = vsel %vm714, %v2022, 0.0
        %v2085 = vadd.f32 %v2083, %v2084
        %v2086 = vrot.slane %v2085, 4
        %v2087 = vadd.f32 %v2085, %v2086
        %v2088 = vrot.slane %v2087, 2
        %v2089 = vadd.f32 %v2087, %v2088
        %v2090 = vrot.slane %v2089, 1
        %v2091 = vadd.f32 %v2089, %v2090
        %v2092 = vadd.f32 %v1307, %v2091
        %2093 = vrot.lane.b32.xlu0 %v582, 4
        %v2094 = vpop.permute.xlu0 %2093
        %2095 = vrot.lane.b32.xlu0 %v584, 4
        %v2096 = vpop.permute.xlu0 %2095
        %2101 = vrot.lane.b32.xlu0 %v253, 8
        %v2102 = vpop.permute.xlu0 %2101
        %2103 = vrot.lane.b32.xlu0 %v254, 8
        %v2104 = vpop.permute.xlu0 %2103
        %v2108 = vrot.slane %v253, 1
        %v2109 = vrot.slane %v254, 1
        %v2110 = vsel %vm304, %v2108, %v2109
        %v2111 = vrot.slane %v255, 1
        %v2112 = vsel %vm304, %v2109, %v2111
        %2113 = vrot.lane.b32.xlu0 %v2110, 12
        %v2114 = vpop.permute.xlu0 %2113
        %2115 = vrot.lane.b32.xlu0 %v2112, 12
        %v2116 = vpop.permute.xlu0 %2115
        %v2119 = vsel %vm681, %v250, %v2094
        %v2120 = vsel %vm681, %v251, %v2096
        %v2121 = vsel %vm714, %v2119, %v2102
        %v2122 = vsel %vm714, %v2120, %v2104
        %v2123 = vsel %vm747, %v2121, %v2114
        %v2124 = vsel %vm747, %v2122, %v2116
        %s2125 = scalar_lea.vmem %s1, 32
        %v2126 = vld [vmem:[%s2125] sm:$0xff]
        %v2127 = vld [vmem:[%s2125 + $0x8] sm:$0xff]
        %v2129 = vsel %vm782, %v2123, 0
        %v2132 = vsel %vm782, %v2124, 0
        %2134 = vmatprep.subr.mxu0 0.0
        %2135 = vmatpush1.msra.mxu0 %v2126
        %2136 = vmatprep.subr.mxu0 0.0
        %2137 = vmatpush1.msra.mxu0 %v2127
        %2138 = vmatprep.subr.mxu0 0.0
        %2139 = vmatpush1.msra.mxu0 0.0
        %2140 = vmatprep.subr.mxu0 0.0
        %2141 = vmatpush1.msra.mxu0 0.0
        %2142 = vmatprep.subr.mxu0 0.0
        %2143 = vmatpush1.msra.mxu0 0.0
        %2144 = vmatprep.subr.mxu0 0.0
        %2145 = vmatpush1.msra.mxu0 0.0
        %2146 = vmatprep.subr.mxu0 0.0
        %2147 = vmatpush1.msra.mxu0 0.0
        %2148 = vmatprep.subr.mxu0 0.0
        %2149 = vmatpush1.msra.mxu0 0.0
        %2150 = vmatprep.subr.mxu0 0.0
        %2151 = vmatpush1.msra.mxu0 0.0
        %2152 = vmatprep.subr.mxu0 0.0
        %2153 = vmatpush1.msra.mxu0 0.0
        %2154 = vmatprep.subr.mxu0 0.0
        %2155 = vmatpush1.msra.mxu0 0.0
        %2156 = vmatprep.subr.mxu0 0.0
        %2157 = vmatpush1.msra.mxu0 0.0
        %2158 = vmatprep.subr.mxu0 0.0
        %2159 = vmatpush1.msra.mxu0 0.0
        %2160 = vmatprep.subr.mxu0 0.0
        %2161 = vmatpush1.msra.mxu0 0.0
        %2162 = vmatprep.subr.mxu0 0.0
        %2163 = vmatpush1.msra.mxu0 0.0
        %2164 = vmatprep.subr.mxu0 0.0
        %2165 = vmatpush1.msra.mxu0 0.0
        %2166 = vmatprep.subr.mxu0 0.0
        %2167 = vmatpush1.msra.mxu0 0.0
        %2168 = vmatprep.subr.mxu0 0.0
        %2169 = vmatpush1.msra.mxu0 0.0
        %2170 = vmatprep.subr.mxu0 0.0
        %2171 = vmatpush1.msra.mxu0 0.0
        %2172 = vmatprep.subr.mxu0 0.0
        %2173 = vmatpush1.msra.mxu0 0.0
        %2174 = vmatprep.subr.mxu0 0.0
        %2175 = vmatpush1.msra.mxu0 0.0
        %2176 = vmatprep.subr.mxu0 0.0
        %2177 = vmatpush1.msra.mxu0 0.0
        %2178 = vmatprep.subr.mxu0 0.0
        %2179 = vmatpush1.msra.mxu0 0.0
        %2180 = vmatprep.subr.mxu0 0.0
        %2181 = vmatpush1.msra.mxu0 0.0
        %2182 = vmatprep.subr.mxu0 0.0
        %2183 = vmatpush1.msra.mxu0 0.0
        %2184 = vmatprep.subr.mxu0 0.0
        %2185 = vmatpush1.msra.mxu0 0.0
        %2186 = vmatprep.subr.mxu0 0.0
        %2187 = vmatpush1.msra.mxu0 0.0
        %2188 = vmatprep.subr.mxu0 0.0
        %2189 = vmatpush1.msra.mxu0 0.0
        %2190 = vmatprep.subr.mxu0 0.0
        %2191 = vmatpush1.msra.mxu0 0.0
        %2192 = vmatprep.subr.mxu0 0.0
        %2193 = vmatpush1.msra.mxu0 0.0
        %2194 = vmatprep.subr.mxu0 0.0
        %2195 = vmatpush1.msra.mxu0 0.0
        %2196 = vmatprep.subr.mxu0 0.0
        %2197 = vmatpush1.msra.mxu0 0.0
        %2198 = vmatprep.mubr.f32.mxu0 0.0
        %2199 = vmatmul.mubr.f32.gmra.mrb[0].mxu0 %v790
        %v2200 = vpop.f32.mrb[0].mxu0
        %v2201 = vadd.f32 0.0, %v2200
        %v2202 = vpop.f32.mrb[0].mxu0
        %2203 = vmatprep.mubr.f32.mxu0 0.0
        %2204 = vmatmul.mubr.f32.gmra.mrb[0].mxu0 %v793
        %v2205 = vpop.f32.mrb[0].mxu0
        %v2206 = vadd.f32 0.0, %v2205
        %v2207 = vpop.f32.mrb[0].mxu0
        %2208 = vmatprep.mubr.f32.mxu0 0.0
        %2209 = vmatmul.mubr.f32.gmra.mrb[0].mxu0 %v796
        %v2210 = vpop.f32.mrb[0].mxu0
        %v2211 = vadd.f32 0.0, %v2210
        %v2212 = vpop.f32.mrb[0].mxu0
        %2213 = vmatprep.mubr.f32.mxu0 0.0
        %2214 = vmatmul.mubr.f32.gmra.mrb[0].mxu0 %v799
        %v2215 = vpop.f32.mrb[0].mxu0
        %v2216 = vadd.f32 0.0, %v2215
        %v2217 = vpop.f32.mrb[0].mxu0
        %2218 = vmatprep.mubr.f32.mxu0 0.0
        %2219 = vmatmul.mubr.f32.gmra.mrb[0].mxu0 %v802
        %v2220 = vpop.f32.mrb[0].mxu0
        %v2221 = vadd.f32 0.0, %v2220
        %v2222 = vpop.f32.mrb[0].mxu0
        %2223 = vmatprep.mubr.f32.mxu0 0.0
        %2224 = vmatmul.mubr.f32.gmra.mrb[0].mxu0 %v805
        %v2225 = vpop.f32.mrb[0].mxu0
        %v2226 = vadd.f32 0.0, %v2225
        %v2227 = vpop.f32.mrb[0].mxu0
        %2228 = vmatprep.mubr.f32.mxu0 0.0
        %2229 = vmatmul.mubr.f32.gmra.mrb[0].mxu0 %v808
        %v2230 = vpop.f32.mrb[0].mxu0
        %v2231 = vadd.f32 0.0, %v2230
        %v2232 = vpop.f32.mrb[0].mxu0
        %2233 = vmatprep.mubr.f32.mxu0 0.0
        %2234 = vmatmul.mubr.f32.gmra.mrb[0].mxu0 %v811
        %v2235 = vpop.f32.mrb[0].mxu0
        %v2236 = vadd.f32 0.0, %v2235
        %v2237 = vpop.f32.mrb[0].mxu0
        %2238 = vmatprep.mubr.f32.mxu0 0.0
        %2239 = vmatmul.mubr.f32.gmra.mrb[0].mxu0 %v814
        %v2240 = vpop.f32.mrb[0].mxu0
        %v2241 = vadd.f32 0.0, %v2240
        %v2242 = vpop.f32.mrb[0].mxu0
        %2243 = vmatprep.mubr.f32.mxu0 0.0
        %2244 = vmatmul.mubr.f32.gmra.mrb[0].mxu0 %v817
        %v2245 = vpop.f32.mrb[0].mxu0
        %v2246 = vadd.f32 0.0, %v2245
        %v2247 = vpop.f32.mrb[0].mxu0
        %2248 = vmatprep.mubr.f32.mxu0 0.0
        %2249 = vmatmul.mubr.f32.gmra.mrb[0].mxu0 %v820
        %v2250 = vpop.f32.mrb[0].mxu0
        %v2251 = vadd.f32 0.0, %v2250
        %v2252 = vpop.f32.mrb[0].mxu0
        %2253 = vmatprep.mubr.f32.mxu0 0.0
        %2254 = vmatmul.mubr.f32.gmra.mrb[0].mxu0 %v823
        %v2255 = vpop.f32.mrb[0].mxu0
        %v2256 = vadd.f32 0.0, %v2255
        %v2257 = vpop.f32.mrb[0].mxu0
        %2258 = vmatprep.mubr.f32.mxu0 0.0
        %2259 = vmatmul.mubr.f32.gmra.mrb[0].mxu0 %v826
        %v2260 = vpop.f32.mrb[0].mxu0
        %v2261 = vadd.f32 0.0, %v2260
        %v2262 = vpop.f32.mrb[0].mxu0
        %2263 = vmatprep.mubr.f32.mxu0 0.0
        %2264 = vmatmul.mubr.f32.gmra.mrb[0].mxu0 %v829
        %v2265 = vpop.f32.mrb[0].mxu0
        %v2266 = vadd.f32 0.0, %v2265
        %v2267 = vpop.f32.mrb[0].mxu0
        %2268 = vmatprep.mubr.f32.mxu0 0.0
        %2269 = vmatmul.mubr.f32.gmra.mrb[0].mxu0 %v832
        %v2270 = vpop.f32.mrb[0].mxu0
        %v2271 = vadd.f32 0.0, %v2270
        %v2272 = vpop.f32.mrb[0].mxu0
        %2273 = vmatprep.mubr.f32.mxu0 0.0
        %2274 = vmatmul.mubr.f32.gmra.mrb[0].mxu0 %v835
        %v2275 = vpop.f32.mrb[0].mxu0
        %v2276 = vadd.f32 0.0, %v2275
        %v2277 = vpop.f32.mrb[0].mxu0
        %2278 = vmatprep.mubr.f32.mxu0 0.0
        %2279 = vmatmul.mubr.f32.gmra.mrb[0].mxu0 %v838
        %v2280 = vpop.f32.mrb[0].mxu0
        %v2281 = vadd.f32 0.0, %v2280
        %v2282 = vpop.f32.mrb[0].mxu0
        %2283 = vmatprep.mubr.f32.mxu0 0.0
        %2284 = vmatmul.mubr.f32.gmra.mrb[0].mxu0 %v841
        %v2285 = vpop.f32.mrb[0].mxu0
        %v2286 = vadd.f32 0.0, %v2285
        %v2287 = vpop.f32.mrb[0].mxu0
        %2288 = vmatprep.mubr.f32.mxu0 0.0
        %2289 = vmatmul.mubr.f32.gmra.mrb[0].mxu0 %v844
        %v2290 = vpop.f32.mrb[0].mxu0
        %v2291 = vadd.f32 0.0, %v2290
        %v2292 = vpop.f32.mrb[0].mxu0
        %2293 = vmatprep.mubr.f32.mxu0 0.0
        %2294 = vmatmul.mubr.f32.gmra.mrb[0].mxu0 %v847
        %v2295 = vpop.f32.mrb[0].mxu0
        %v2296 = vadd.f32 0.0, %v2295
        %v2297 = vpop.f32.mrb[0].mxu0
        %2298 = vmatprep.mubr.f32.mxu0 0.0
        %2299 = vmatmul.mubr.f32.gmra.mrb[0].mxu0 %v850
        %v2300 = vpop.f32.mrb[0].mxu0
        %v2301 = vadd.f32 0.0, %v2300
        %v2302 = vpop.f32.mrb[0].mxu0
        %2303 = vmatprep.mubr.f32.mxu0 0.0
        %2304 = vmatmul.mubr.f32.gmra.mrb[0].mxu0 %v853
        %v2305 = vpop.f32.mrb[0].mxu0
        %v2306 = vadd.f32 0.0, %v2305
        %v2307 = vpop.f32.mrb[0].mxu0
        %2308 = vmatprep.mubr.f32.mxu0 0.0
        %2309 = vmatmul.mubr.f32.gmra.mrb[0].mxu0 %v856
        %v2310 = vpop.f32.mrb[0].mxu0
        %v2311 = vadd.f32 0.0, %v2310
        %v2312 = vpop.f32.mrb[0].mxu0
        %2313 = vmatprep.mubr.f32.mxu0 0.0
        %2314 = vmatmul.mubr.f32.gmra.mrb[0].mxu0 %v859
        %v2315 = vpop.f32.mrb[0].mxu0
        %v2316 = vadd.f32 0.0, %v2315
        %v2317 = vpop.f32.mrb[0].mxu0
        %2318 = vmatprep.mubr.f32.mxu0 0.0
        %2319 = vmatmul.mubr.f32.gmra.mrb[0].mxu0 %v862
        %v2320 = vpop.f32.mrb[0].mxu0
        %v2321 = vadd.f32 0.0, %v2320
        %v2322 = vpop.f32.mrb[0].mxu0
        %2323 = vmatprep.mubr.f32.mxu0 0.0
        %2324 = vmatmul.mubr.f32.gmra.mrb[0].mxu0 %v865
        %v2325 = vpop.f32.mrb[0].mxu0
        %v2326 = vadd.f32 0.0, %v2325
        %v2327 = vpop.f32.mrb[0].mxu0
        %2328 = vmatprep.mubr.f32.mxu0 0.0
        %2329 = vmatmul.mubr.f32.gmra.mrb[0].mxu0 %v868
        %v2330 = vpop.f32.mrb[0].mxu0
        %v2331 = vadd.f32 0.0, %v2330
        %v2332 = vpop.f32.mrb[0].mxu0
        %2333 = vmatprep.mubr.f32.mxu0 0.0
        %2334 = vmatmul.mubr.f32.gmra.mrb[0].mxu0 %v871
        %v2335 = vpop.f32.mrb[0].mxu0
        %v2336 = vadd.f32 0.0, %v2335
        %v2337 = vpop.f32.mrb[0].mxu0
        %2338 = vmatprep.mubr.f32.mxu0 0.0
        %2339 = vmatmul.mubr.f32.gmra.mrb[0].mxu0 %v874
        %v2340 = vpop.f32.mrb[0].mxu0
        %v2341 = vadd.f32 0.0, %v2340
        %v2342 = vpop.f32.mrb[0].mxu0
        %2343 = vmatprep.mubr.f32.mxu0 0.0
        %2344 = vmatmul.mubr.f32.gmra.mrb[0].mxu0 %v877
        %v2345 = vpop.f32.mrb[0].mxu0
        %v2346 = vadd.f32 0.0, %v2345
        %v2347 = vpop.f32.mrb[0].mxu0
        %2348 = vmatprep.mubr.f32.mxu0 0.0
        %2349 = vmatmul.mubr.f32.gmra.mrb[0].mxu0 %v2129
        %v2350 = vpop.f32.mrb[0].mxu0
        %v2351 = vadd.f32 0.0, %v2350
        %v2352 = vpop.f32.mrb[0].mxu0
        %2353 = vmatprep.mubr.f32.mxu0 0.0
        %2354 = vmatmul.mubr.f32.gmra.mrb[0].mxu0 %v2132
        %v2355 = vpop.f32.mrb[0].mxu0
        %v2356 = vadd.f32 0.0, %v2355
        %v2357 = vpop.f32.mrb[0].mxu0
        %2358 = vdwg.mxu0
        %s2359 = scalar_lea.vmem %s194, 512
        %2360 = vst.msk [vmem:[%s2359] sm:$0xff] %vm714, %v2201
        %2361 = vst.msk [vmem:[%s2359 + $0x8] sm:$0xff] %vm714, %v2206
        %2362 = vst.msk [vmem:[%s2359 + $0x10] sm:$0xff] %vm714, %v2211
        %2363 = vst.msk [vmem:[%s2359 + $0x18] sm:$0xff] %vm714, %v2216
        %2364 = vst.msk [vmem:[%s2359 + $0x20] sm:$0xff] %vm714, %v2221
        %2365 = vst.msk [vmem:[%s2359 + $0x28] sm:$0xff] %vm714, %v2226
        %2366 = vst.msk [vmem:[%s2359 + $0x30] sm:$0xff] %vm714, %v2231
        %2367 = vst.msk [vmem:[%s2359 + $0x38] sm:$0xff] %vm714, %v2236
        %2368 = vst.msk [vmem:[%s2359 + $0x40] sm:$0xff] %vm714, %v2241
        %2369 = vst.msk [vmem:[%s2359 + $0x48] sm:$0xff] %vm714, %v2246
        %2370 = vst.msk [vmem:[%s2359 + $0x50] sm:$0xff] %vm714, %v2251
        %2371 = vst.msk [vmem:[%s2359 + $0x58] sm:$0xff] %vm714, %v2256
        %2372 = vst.msk [vmem:[%s2359 + $0x60] sm:$0xff] %vm714, %v2261
        %2373 = vst.msk [vmem:[%s2359 + $0x68] sm:$0xff] %vm714, %v2266
        %2374 = vst.msk [vmem:[%s2359 + $0x70] sm:$0xff] %vm714, %v2271
        %2375 = vst.msk [vmem:[%s2359 + $0x78] sm:$0xff] %vm714, %v2276
        %2376 = vst.msk [vmem:[%s2359 + $0x80] sm:$0xff] %vm714, %v2281
        %2377 = vst.msk [vmem:[%s2359 + $0x88] sm:$0xff] %vm714, %v2286
        %2378 = vst.msk [vmem:[%s2359 + $0x90] sm:$0xff] %vm714, %v2291
        %2379 = vst.msk [vmem:[%s2359 + $0x98] sm:$0xff] %vm714, %v2296
        %2380 = vst.msk [vmem:[%s2359 + $0xa0] sm:$0xff] %vm714, %v2301
        %2381 = vst.msk [vmem:[%s2359 + $0xa8] sm:$0xff] %vm714, %v2306
        %2382 = vst.msk [vmem:[%s2359 + $0xb0] sm:$0xff] %vm714, %v2311
        %2383 = vst.msk [vmem:[%s2359 + $0xb8] sm:$0xff] %vm714, %v2316
        %2384 = vst.msk [vmem:[%s2359 + $0xc0] sm:$0xff] %vm714, %v2321
        %2385 = vst.msk [vmem:[%s2359 + $0xc8] sm:$0xff] %vm714, %v2326
        %2386 = vst.msk [vmem:[%s2359 + $0xd0] sm:$0xff] %vm714, %v2331
        %2387 = vst.msk [vmem:[%s2359 + $0xd8] sm:$0xff] %vm714, %v2336
        %2388 = vst.msk [vmem:[%s2359 + $0xe0] sm:$0xff] %vm714, %v2341
        %2389 = vst.msk [vmem:[%s2359 + $0xe8] sm:$0xff] %vm714, %v2346
        %2390 = vst.msk [vmem:[%s2359 + $0xf0] sm:$0xff] %vm714, %v2351
        %2391 = vst.msk [vmem:[%s2359 + $0xf8] sm:$0xff] %vm714, %v2356
        %v2392 = vsel %vm714, %v2201, 0.0
        %v2393 = vsel %vm714, %v2206, 0.0
        %v2394 = vadd.f32 %v2392, %v2393
        %v2395 = vsel %vm714, %v2211, 0.0
        %v2396 = vadd.f32 %v2394, %v2395
        %v2397 = vsel %vm714, %v2216, 0.0
        %v2398 = vadd.f32 %v2396, %v2397
        %v2399 = vsel %vm714, %v2221, 0.0
        %v2400 = vadd.f32 %v2398, %v2399
        %v2401 = vsel %vm714, %v2226, 0.0
        %v2402 = vadd.f32 %v2400, %v2401
        %v2403 = vsel %vm714, %v2231, 0.0
        %v2404 = vadd.f32 %v2402, %v2403
        %v2405 = vsel %vm714, %v2236, 0.0
        %v2406 = vadd.f32 %v2404, %v2405
        %v2407 = vsel %vm714, %v2241, 0.0
        %v2408 = vadd.f32 %v2406, %v2407
        %v2409 = vsel %vm714, %v2246, 0.0
        %v2410 = vadd.f32 %v2408, %v2409
        %v2411 = vsel %vm714, %v2251, 0.0
        %v2412 = vadd.f32 %v2410, %v2411
        %v2413 = vsel %vm714, %v2256, 0.0
        %v2414 = vadd.f32 %v2412, %v2413
        %v2415 = vsel %vm714, %v2261, 0.0
        %v2416 = vadd.f32 %v2414, %v2415
        %v2417 = vsel %vm714, %v2266, 0.0
        %v2418 = vadd.f32 %v2416, %v2417
        %v2419 = vsel %vm714, %v2271, 0.0
        %v2420 = vadd.f32 %v2418, %v2419
        %v2421 = vsel %vm714, %v2276, 0.0
        %v2422 = vadd.f32 %v2420, %v2421
        %v2423 = vsel %vm714, %v2281, 0.0
        %v2424 = vadd.f32 %v2422, %v2423
        %v2425 = vsel %vm714, %v2286, 0.0
        %v2426 = vadd.f32 %v2424, %v2425
        %v2427 = vsel %vm714, %v2291, 0.0
        %v2428 = vadd.f32 %v2426, %v2427
        %v2429 = vsel %vm714, %v2296, 0.0
        %v2430 = vadd.f32 %v2428, %v2429
        %v2431 = vsel %vm714, %v2301, 0.0
        %v2432 = vadd.f32 %v2430, %v2431
        %v2433 = vsel %vm714, %v2306, 0.0
        %v2434 = vadd.f32 %v2432, %v2433
        %v2435 = vsel %vm714, %v2311, 0.0
        %v2436 = vadd.f32 %v2434, %v2435
        %v2437 = vsel %vm714, %v2316, 0.0
        %v2438 = vadd.f32 %v2436, %v2437
        %v2439 = vsel %vm714, %v2321, 0.0
        %v2440 = vadd.f32 %v2438, %v2439
        %v2441 = vsel %vm714, %v2326, 0.0
        %v2442 = vadd.f32 %v2440, %v2441
        %v2443 = vsel %vm714, %v2331, 0.0
        %v2444 = vadd.f32 %v2442, %v2443
        %v2445 = vsel %vm714, %v2336, 0.0
        %v2446 = vadd.f32 %v2444, %v2445
        %v2447 = vsel %vm714, %v2341, 0.0
        %v2448 = vadd.f32 %v2446, %v2447
        %v2449 = vsel %vm714, %v2346, 0.0
        %v2450 = vadd.f32 %v2448, %v2449
        %v2451 = vsel %vm714, %v2351, 0.0
        %v2452 = vadd.f32 %v2450, %v2451
        %v2453 = vsel %vm714, %v2356, 0.0
        %v2454 = vadd.f32 %v2452, %v2453
        %v2455 = vrot.slane %v2454, 4
        %v2456 = vadd.f32 %v2454, %v2455
        %v2457 = vrot.slane %v2456, 2
        %v2458 = vadd.f32 %v2456, %v2457
        %v2459 = vrot.slane %v2458, 1
        %v2460 = vadd.f32 %v2458, %v2459
        %v2461 = vadd.f32 %v1990, %v2460
        %v2462 = vmul.f32 %v2201, %v2201
        %v2463 = vmul.f32 %v2206, %v2206
        %v2464 = vmul.f32 %v2211, %v2211
        %v2465 = vmul.f32 %v2216, %v2216
        %v2466 = vmul.f32 %v2221, %v2221
        %v2467 = vmul.f32 %v2226, %v2226
        %v2468 = vmul.f32 %v2231, %v2231
        %v2469 = vmul.f32 %v2236, %v2236
        %v2470 = vmul.f32 %v2241, %v2241
        %v2471 = vmul.f32 %v2246, %v2246
        %v2472 = vmul.f32 %v2251, %v2251
        %v2473 = vmul.f32 %v2256, %v2256
        %v2474 = vmul.f32 %v2261, %v2261
        %v2475 = vmul.f32 %v2266, %v2266
        %v2476 = vmul.f32 %v2271, %v2271
        %v2477 = vmul.f32 %v2276, %v2276
        %v2478 = vmul.f32 %v2281, %v2281
        %v2479 = vmul.f32 %v2286, %v2286
        %v2480 = vmul.f32 %v2291, %v2291
        %v2481 = vmul.f32 %v2296, %v2296
        %v2482 = vmul.f32 %v2301, %v2301
        %v2483 = vmul.f32 %v2306, %v2306
        %v2484 = vmul.f32 %v2311, %v2311
        %v2485 = vmul.f32 %v2316, %v2316
        %v2486 = vmul.f32 %v2321, %v2321
        %v2487 = vmul.f32 %v2326, %v2326
        %v2488 = vmul.f32 %v2331, %v2331
        %v2489 = vmul.f32 %v2336, %v2336
        %v2490 = vmul.f32 %v2341, %v2341
        %v2491 = vmul.f32 %v2346, %v2346
        %v2492 = vmul.f32 %v2351, %v2351
        %v2493 = vmul.f32 %v2356, %v2356
        %v2494 = vsel %vm714, %v2462, 0.0
        %v2495 = vsel %vm714, %v2463, 0.0
        %v2496 = vadd.f32 %v2494, %v2495
        %v2497 = vsel %vm714, %v2464, 0.0
        %v2498 = vadd.f32 %v2496, %v2497
        %v2499 = vsel %vm714, %v2465, 0.0
        %v2500 = vadd.f32 %v2498, %v2499
        %v2501 = vsel %vm714, %v2466, 0.0
        %v2502 = vadd.f32 %v2500, %v2501
        %v2503 = vsel %vm714, %v2467, 0.0
        %v2504 = vadd.f32 %v2502, %v2503
        %v2505 = vsel %vm714, %v2468, 0.0
        %v2506 = vadd.f32 %v2504, %v2505
        %v2507 = vsel %vm714, %v2469, 0.0
        %v2508 = vadd.f32 %v2506, %v2507
        %v2509 = vsel %vm714, %v2470, 0.0
        %v2510 = vadd.f32 %v2508, %v2509
        %v2511 = vsel %vm714, %v2471, 0.0
        %v2512 = vadd.f32 %v2510, %v2511
        %v2513 = vsel %vm714, %v2472, 0.0
        %v2514 = vadd.f32 %v2512, %v2513
        %v2515 = vsel %vm714, %v2473, 0.0
        %v2516 = vadd.f32 %v2514, %v2515
        %v2517 = vsel %vm714, %v2474, 0.0
        %v2518 = vadd.f32 %v2516, %v2517
        %v2519 = vsel %vm714, %v2475, 0.0
        %v2520 = vadd.f32 %v2518, %v2519
        %v2521 = vsel %vm714, %v2476, 0.0
        %v2522 = vadd.f32 %v2520, %v2521
        %v2523 = vsel %vm714, %v2477, 0.0
        %v2524 = vadd.f32 %v2522, %v2523
        %v2525 = vsel %vm714, %v2478, 0.0
        %v2526 = vadd.f32 %v2524, %v2525
        %v2527 = vsel %vm714, %v2479, 0.0
        %v2528 = vadd.f32 %v2526, %v2527
        %v2529 = vsel %vm714, %v2480, 0.0
        %v2530 = vadd.f32 %v2528, %v2529
        %v2531 = vsel %vm714, %v2481, 0.0
        %v2532 = vadd.f32 %v2530, %v2531
        %v2533 = vsel %vm714, %v2482, 0.0
        %v2534 = vadd.f32 %v2532, %v2533
        %v2535 = vsel %vm714, %v2483, 0.0
        %v2536 = vadd.f32 %v2534, %v2535
        %v2537 = vsel %vm714, %v2484, 0.0
        %v2538 = vadd.f32 %v2536, %v2537
        %v2539 = vsel %vm714, %v2485, 0.0
        %v2540 = vadd.f32 %v2538, %v2539
        %v2541 = vsel %vm714, %v2486, 0.0
        %v2542 = vadd.f32 %v2540, %v2541
        %v2543 = vsel %vm714, %v2487, 0.0
        %v2544 = vadd.f32 %v2542, %v2543
        %v2545 = vsel %vm714, %v2488, 0.0
        %v2546 = vadd.f32 %v2544, %v2545
        %v2547 = vsel %vm714, %v2489, 0.0
        %v2548 = vadd.f32 %v2546, %v2547
        %v2549 = vsel %vm714, %v2490, 0.0
        %v2550 = vadd.f32 %v2548, %v2549
        %v2551 = vsel %vm714, %v2491, 0.0
        %v2552 = vadd.f32 %v2550, %v2551
        %v2553 = vsel %vm714, %v2492, 0.0
        %v2554 = vadd.f32 %v2552, %v2553
        %v2555 = vsel %vm714, %v2493, 0.0
        %v2556 = vadd.f32 %v2554, %v2555
        %v2557 = vrot.slane %v2556, 4
        %v2558 = vadd.f32 %v2556, %v2557
        %v2559 = vrot.slane %v2558, 2
        %v2560 = vadd.f32 %v2558, %v2559
        %v2561 = vrot.slane %v2560, 1
        %v2562 = vadd.f32 %v2560, %v2561
        %v2563 = vadd.f32 %v2092, %v2562
        %2564 = vrot.lane.b32.xlu0 %v583, 4
        %v2565 = vpop.permute.xlu0 %2564
        %2567 = vrot.lane.b32.xlu0 %v255, 8
        %v2568 = vpop.permute.xlu0 %2567
        %2570 = vrot.lane.b32.xlu0 %v2111, 12
        %v2571 = vpop.permute.xlu0 %2570
        %v2573 = vsel %vm681, %v252, %v2565
        %v2574 = vsel %vm714, %v2573, %v2568
        %v2575 = vsel %vm747, %v2574, %v2571
        %s2576 = scalar_lea.vmem %s1, 48
        %v2577 = vld [vmem:[%s2576] sm:$0xff]
        %v2578 = vld [vmem:[%s2576 + $0x8] sm:$0xff]
        %v2580 = vrot.slane %v2123, 1
        %v2581 = vrot.slane %v2124, 1
        %v2582 = vsel %vm304, %v2580, %v2581
        %v2583 = vrot.slane %v2575, 1
        %v2584 = vsel %vm304, %v2581, %v2583
        %v2585 = vsel %vm782, %v2582, 0
        %v2587 = vsel %vm782, %v2584, 0
        %2589 = vmatprep.subr.mxu0 0.0
        %2590 = vmatpush1.msra.mxu0 %v2577
        %2591 = vmatprep.subr.mxu0 0.0
        %2592 = vmatpush1.msra.mxu0 %v2578
        %2593 = vmatprep.subr.mxu0 0.0
        %2594 = vmatpush1.msra.mxu0 0.0
        %2595 = vmatprep.subr.mxu0 0.0
        %2596 = vmatpush1.msra.mxu0 0.0
        %2597 = vmatprep.subr.mxu0 0.0
        %2598 = vmatpush1.msra.mxu0 0.0
        %2599 = vmatprep.subr.mxu0 0.0
        %2600 = vmatpush1.msra.mxu0 0.0
        %2601 = vmatprep.subr.mxu0 0.0
        %2602 = vmatpush1.msra.mxu0 0.0
        %2603 = vmatprep.subr.mxu0 0.0
        %2604 = vmatpush1.msra.mxu0 0.0
        %2605 = vmatprep.subr.mxu0 0.0
        %2606 = vmatpush1.msra.mxu0 0.0
        %2607 = vmatprep.subr.mxu0 0.0
        %2608 = vmatpush1.msra.mxu0 0.0
        %2609 = vmatprep.subr.mxu0 0.0
        %2610 = vmatpush1.msra.mxu0 0.0
        %2611 = vmatprep.subr.mxu0 0.0
        %2612 = vmatpush1.msra.mxu0 0.0
        %2613 = vmatprep.subr.mxu0 0.0
        %2614 = vmatpush1.msra.mxu0 0.0
        %2615 = vmatprep.subr.mxu0 0.0
        %2616 = vmatpush1.msra.mxu0 0.0
        %2617 = vmatprep.subr.mxu0 0.0
        %2618 = vmatpush1.msra.mxu0 0.0
        %2619 = vmatprep.subr.mxu0 0.0
        %2620 = vmatpush1.msra.mxu0 0.0
        %2621 = vmatprep.subr.mxu0 0.0
        %2622 = vmatpush1.msra.mxu0 0.0
        %2623 = vmatprep.subr.mxu0 0.0
        %2624 = vmatpush1.msra.mxu0 0.0
        %2625 = vmatprep.subr.mxu0 0.0
        %2626 = vmatpush1.msra.mxu0 0.0
        %2627 = vmatprep.subr.mxu0 0.0
        %2628 = vmatpush1.msra.mxu0 0.0
        %2629 = vmatprep.subr.mxu0 0.0
        %2630 = vmatpush1.msra.mxu0 0.0
        %2631 = vmatprep.subr.mxu0 0.0
        %2632 = vmatpush1.msra.mxu0 0.0
        %2633 = vmatprep.subr.mxu0 0.0
        %2634 = vmatpush1.msra.mxu0 0.0
        %2635 = vmatprep.subr.mxu0 0.0
        %2636 = vmatpush1.msra.mxu0 0.0
        %2637 = vmatprep.subr.mxu0 0.0
        %2638 = vmatpush1.msra.mxu0 0.0
        %2639 = vmatprep.subr.mxu0 0.0
        %2640 = vmatpush1.msra.mxu0 0.0
        %2641 = vmatprep.subr.mxu0 0.0
        %2642 = vmatpush1.msra.mxu0 0.0
        %2643 = vmatprep.subr.mxu0 0.0
        %2644 = vmatpush1.msra.mxu0 0.0
        %2645 = vmatprep.subr.mxu0 0.0
        %2646 = vmatpush1.msra.mxu0 0.0
        %2647 = vmatprep.subr.mxu0 0.0
        %2648 = vmatpush1.msra.mxu0 0.0
        %2649 = vmatprep.subr.mxu0 0.0
        %2650 = vmatpush1.msra.mxu0 0.0
        %2651 = vmatprep.subr.mxu0 0.0
        %2652 = vmatpush1.msra.mxu0 0.0
        %2653 = vmatprep.mubr.f32.mxu0 0.0
        %2654 = vmatmul.mubr.f32.gmra.mrb[0].mxu0 %v1603
        %v2655 = vpop.f32.mrb[0].mxu0
        %v2656 = vadd.f32 0.0, %v2655
        %v2657 = vpop.f32.mrb[0].mxu0
        %2658 = vmatprep.mubr.f32.mxu0 0.0
        %2659 = vmatmul.mubr.f32.gmra.mrb[0].mxu0 %v1605
        %v2660 = vpop.f32.mrb[0].mxu0
        %v2661 = vadd.f32 0.0, %v2660
        %v2662 = vpop.f32.mrb[0].mxu0
        %2663 = vmatprep.mubr.f32.mxu0 0.0
        %2664 = vmatmul.mubr.f32.gmra.mrb[0].mxu0 %v1607
        %v2665 = vpop.f32.mrb[0].mxu0
        %v2666 = vadd.f32 0.0, %v2665
        %v2667 = vpop.f32.mrb[0].mxu0
        %2668 = vmatprep.mubr.f32.mxu0 0.0
        %2669 = vmatmul.mubr.f32.gmra.mrb[0].mxu0 %v1609
        %v2670 = vpop.f32.mrb[0].mxu0
        %v2671 = vadd.f32 0.0, %v2670
        %v2672 = vpop.f32.mrb[0].mxu0
        %2673 = vmatprep.mubr.f32.mxu0 0.0
        %2674 = vmatmul.mubr.f32.gmra.mrb[0].mxu0 %v1611
        %v2675 = vpop.f32.mrb[0].mxu0
        %v2676 = vadd.f32 0.0, %v2675
        %v2677 = vpop.f32.mrb[0].mxu0
        %2678 = vmatprep.mubr.f32.mxu0 0.0
        %2679 = vmatmul.mubr.f32.gmra.mrb[0].mxu0 %v1613
        %v2680 = vpop.f32.mrb[0].mxu0
        %v2681 = vadd.f32 0.0, %v2680
        %v2682 = vpop.f32.mrb[0].mxu0
        %2683 = vmatprep.mubr.f32.mxu0 0.0
        %2684 = vmatmul.mubr.f32.gmra.mrb[0].mxu0 %v1615
        %v2685 = vpop.f32.mrb[0].mxu0
        %v2686 = vadd.f32 0.0, %v2685
        %v2687 = vpop.f32.mrb[0].mxu0
        %2688 = vmatprep.mubr.f32.mxu0 0.0
        %2689 = vmatmul.mubr.f32.gmra.mrb[0].mxu0 %v1617
        %v2690 = vpop.f32.mrb[0].mxu0
        %v2691 = vadd.f32 0.0, %v2690
        %v2692 = vpop.f32.mrb[0].mxu0
        %2693 = vmatprep.mubr.f32.mxu0 0.0
        %2694 = vmatmul.mubr.f32.gmra.mrb[0].mxu0 %v1619
        %v2695 = vpop.f32.mrb[0].mxu0
        %v2696 = vadd.f32 0.0, %v2695
        %v2697 = vpop.f32.mrb[0].mxu0
        %2698 = vmatprep.mubr.f32.mxu0 0.0
        %2699 = vmatmul.mubr.f32.gmra.mrb[0].mxu0 %v1621
        %v2700 = vpop.f32.mrb[0].mxu0
        %v2701 = vadd.f32 0.0, %v2700
        %v2702 = vpop.f32.mrb[0].mxu0
        %2703 = vmatprep.mubr.f32.mxu0 0.0
        %2704 = vmatmul.mubr.f32.gmra.mrb[0].mxu0 %v1623
        %v2705 = vpop.f32.mrb[0].mxu0
        %v2706 = vadd.f32 0.0, %v2705
        %v2707 = vpop.f32.mrb[0].mxu0
        %2708 = vmatprep.mubr.f32.mxu0 0.0
        %2709 = vmatmul.mubr.f32.gmra.mrb[0].mxu0 %v1625
        %v2710 = vpop.f32.mrb[0].mxu0
        %v2711 = vadd.f32 0.0, %v2710
        %v2712 = vpop.f32.mrb[0].mxu0
        %2713 = vmatprep.mubr.f32.mxu0 0.0
        %2714 = vmatmul.mubr.f32.gmra.mrb[0].mxu0 %v1627
        %v2715 = vpop.f32.mrb[0].mxu0
        %v2716 = vadd.f32 0.0, %v2715
        %v2717 = vpop.f32.mrb[0].mxu0
        %2718 = vmatprep.mubr.f32.mxu0 0.0
        %2719 = vmatmul.mubr.f32.gmra.mrb[0].mxu0 %v1629
        %v2720 = vpop.f32.mrb[0].mxu0
        %v2721 = vadd.f32 0.0, %v2720
        %v2722 = vpop.f32.mrb[0].mxu0
        %2723 = vmatprep.mubr.f32.mxu0 0.0
        %2724 = vmatmul.mubr.f32.gmra.mrb[0].mxu0 %v1631
        %v2725 = vpop.f32.mrb[0].mxu0
        %v2726 = vadd.f32 0.0, %v2725
        %v2727 = vpop.f32.mrb[0].mxu0
        %2728 = vmatprep.mubr.f32.mxu0 0.0
        %2729 = vmatmul.mubr.f32.gmra.mrb[0].mxu0 %v1633
        %v2730 = vpop.f32.mrb[0].mxu0
        %v2731 = vadd.f32 0.0, %v2730
        %v2732 = vpop.f32.mrb[0].mxu0
        %2733 = vmatprep.mubr.f32.mxu0 0.0
        %2734 = vmatmul.mubr.f32.gmra.mrb[0].mxu0 %v1635
        %v2735 = vpop.f32.mrb[0].mxu0
        %v2736 = vadd.f32 0.0, %v2735
        %v2737 = vpop.f32.mrb[0].mxu0
        %2738 = vmatprep.mubr.f32.mxu0 0.0
        %2739 = vmatmul.mubr.f32.gmra.mrb[0].mxu0 %v1637
        %v2740 = vpop.f32.mrb[0].mxu0
        %v2741 = vadd.f32 0.0, %v2740
        %v2742 = vpop.f32.mrb[0].mxu0
        %2743 = vmatprep.mubr.f32.mxu0 0.0
        %2744 = vmatmul.mubr.f32.gmra.mrb[0].mxu0 %v1639
        %v2745 = vpop.f32.mrb[0].mxu0
        %v2746 = vadd.f32 0.0, %v2745
        %v2747 = vpop.f32.mrb[0].mxu0
        %2748 = vmatprep.mubr.f32.mxu0 0.0
        %2749 = vmatmul.mubr.f32.gmra.mrb[0].mxu0 %v1641
        %v2750 = vpop.f32.mrb[0].mxu0
        %v2751 = vadd.f32 0.0, %v2750
        %v2752 = vpop.f32.mrb[0].mxu0
        %2753 = vmatprep.mubr.f32.mxu0 0.0
        %2754 = vmatmul.mubr.f32.gmra.mrb[0].mxu0 %v1643
        %v2755 = vpop.f32.mrb[0].mxu0
        %v2756 = vadd.f32 0.0, %v2755
        %v2757 = vpop.f32.mrb[0].mxu0
        %2758 = vmatprep.mubr.f32.mxu0 0.0
        %2759 = vmatmul.mubr.f32.gmra.mrb[0].mxu0 %v1645
        %v2760 = vpop.f32.mrb[0].mxu0
        %v2761 = vadd.f32 0.0, %v2760
        %v2762 = vpop.f32.mrb[0].mxu0
        %2763 = vmatprep.mubr.f32.mxu0 0.0
        %2764 = vmatmul.mubr.f32.gmra.mrb[0].mxu0 %v1647
        %v2765 = vpop.f32.mrb[0].mxu0
        %v2766 = vadd.f32 0.0, %v2765
        %v2767 = vpop.f32.mrb[0].mxu0
        %2768 = vmatprep.mubr.f32.mxu0 0.0
        %2769 = vmatmul.mubr.f32.gmra.mrb[0].mxu0 %v1649
        %v2770 = vpop.f32.mrb[0].mxu0
        %v2771 = vadd.f32 0.0, %v2770
        %v2772 = vpop.f32.mrb[0].mxu0
        %2773 = vmatprep.mubr.f32.mxu0 0.0
        %2774 = vmatmul.mubr.f32.gmra.mrb[0].mxu0 %v1651
        %v2775 = vpop.f32.mrb[0].mxu0
        %v2776 = vadd.f32 0.0, %v2775
        %v2777 = vpop.f32.mrb[0].mxu0
        %2778 = vmatprep.mubr.f32.mxu0 0.0
        %2779 = vmatmul.mubr.f32.gmra.mrb[0].mxu0 %v1653
        %v2780 = vpop.f32.mrb[0].mxu0
        %v2781 = vadd.f32 0.0, %v2780
        %v2782 = vpop.f32.mrb[0].mxu0
        %2783 = vmatprep.mubr.f32.mxu0 0.0
        %2784 = vmatmul.mubr.f32.gmra.mrb[0].mxu0 %v1655
        %v2785 = vpop.f32.mrb[0].mxu0
        %v2786 = vadd.f32 0.0, %v2785
        %v2787 = vpop.f32.mrb[0].mxu0
        %2788 = vmatprep.mubr.f32.mxu0 0.0
        %2789 = vmatmul.mubr.f32.gmra.mrb[0].mxu0 %v1657
        %v2790 = vpop.f32.mrb[0].mxu0
        %v2791 = vadd.f32 0.0, %v2790
        %v2792 = vpop.f32.mrb[0].mxu0
        %2793 = vmatprep.mubr.f32.mxu0 0.0
        %2794 = vmatmul.mubr.f32.gmra.mrb[0].mxu0 %v1659
        %v2795 = vpop.f32.mrb[0].mxu0
        %v2796 = vadd.f32 0.0, %v2795
        %v2797 = vpop.f32.mrb[0].mxu0
        %2798 = vmatprep.mubr.f32.mxu0 0.0
        %2799 = vmatmul.mubr.f32.gmra.mrb[0].mxu0 %v1661
        %v2800 = vpop.f32.mrb[0].mxu0
        %v2801 = vadd.f32 0.0, %v2800
        %v2802 = vpop.f32.mrb[0].mxu0
        %2803 = vmatprep.mubr.f32.mxu0 0.0
        %2804 = vmatmul.mubr.f32.gmra.mrb[0].mxu0 %v2585
        %v2805 = vpop.f32.mrb[0].mxu0
        %v2806 = vadd.f32 0.0, %v2805
        %v2807 = vpop.f32.mrb[0].mxu0
        %2808 = vmatprep.mubr.f32.mxu0 0.0
        %2809 = vmatmul.mubr.f32.gmra.mrb[0].mxu0 %v2587
        %v2810 = vpop.f32.mrb[0].mxu0
        %v2811 = vadd.f32 0.0, %v2810
        %v2812 = vpop.f32.mrb[0].mxu0
        %2813 = vdwg.mxu0
        %s2814 = scalar_lea.vmem %s194, 768
        %2815 = vst.msk [vmem:[%s2814] sm:$0xff] %vm714, %v2656
        %2816 = vst.msk [vmem:[%s2814 + $0x8] sm:$0xff] %vm714, %v2661
        %2817 = vst.msk [vmem:[%s2814 + $0x10] sm:$0xff] %vm714, %v2666
        %2818 = vst.msk [vmem:[%s2814 + $0x18] sm:$0xff] %vm714, %v2671
        %2819 = vst.msk [vmem:[%s2814 + $0x20] sm:$0xff] %vm714, %v2676
        %2820 = vst.msk [vmem:[%s2814 + $0x28] sm:$0xff] %vm714, %v2681
        %2821 = vst.msk [vmem:[%s2814 + $0x30] sm:$0xff] %vm714, %v2686
        %2822 = vst.msk [vmem:[%s2814 + $0x38] sm:$0xff] %vm714, %v2691
        %2823 = vst.msk [vmem:[%s2814 + $0x40] sm:$0xff] %vm714, %v2696
        %2824 = vst.msk [vmem:[%s2814 + $0x48] sm:$0xff] %vm714, %v2701
        %2825 = vst.msk [vmem:[%s2814 + $0x50] sm:$0xff] %vm714, %v2706
        %2826 = vst.msk [vmem:[%s2814 + $0x58] sm:$0xff] %vm714, %v2711
        %2827 = vst.msk [vmem:[%s2814 + $0x60] sm:$0xff] %vm714, %v2716
        %2828 = vst.msk [vmem:[%s2814 + $0x68] sm:$0xff] %vm714, %v2721
        %2829 = vst.msk [vmem:[%s2814 + $0x70] sm:$0xff] %vm714, %v2726
        %2830 = vst.msk [vmem:[%s2814 + $0x78] sm:$0xff] %vm714, %v2731
        %2831 = vst.msk [vmem:[%s2814 + $0x80] sm:$0xff] %vm714, %v2736
        %2832 = vst.msk [vmem:[%s2814 + $0x88] sm:$0xff] %vm714, %v2741
        %2833 = vst.msk [vmem:[%s2814 + $0x90] sm:$0xff] %vm714, %v2746
        %2834 = vst.msk [vmem:[%s2814 + $0x98] sm:$0xff] %vm714, %v2751
        %2835 = vst.msk [vmem:[%s2814 + $0xa0] sm:$0xff] %vm714, %v2756
        %2836 = vst.msk [vmem:[%s2814 + $0xa8] sm:$0xff] %vm714, %v2761
        %2837 = vst.msk [vmem:[%s2814 + $0xb0] sm:$0xff] %vm714, %v2766
        %2838 = vst.msk [vmem:[%s2814 + $0xb8] sm:$0xff] %vm714, %v2771
        %2839 = vst.msk [vmem:[%s2814 + $0xc0] sm:$0xff] %vm714, %v2776
        %2840 = vst.msk [vmem:[%s2814 + $0xc8] sm:$0xff] %vm714, %v2781
        %2841 = vst.msk [vmem:[%s2814 + $0xd0] sm:$0xff] %vm714, %v2786
        %2842 = vst.msk [vmem:[%s2814 + $0xd8] sm:$0xff] %vm714, %v2791
        %2843 = vst.msk [vmem:[%s2814 + $0xe0] sm:$0xff] %vm714, %v2796
        %2844 = vst.msk [vmem:[%s2814 + $0xe8] sm:$0xff] %vm714, %v2801
        %2845 = vst.msk [vmem:[%s2814 + $0xf0] sm:$0xff] %vm714, %v2806
        %2846 = vst.msk [vmem:[%s2814 + $0xf8] sm:$0xff] %vm714, %v2811
        %v2847 = vsel %vm714, %v2656, 0.0
        %v2848 = vsel %vm714, %v2661, 0.0
        %v2849 = vadd.f32 %v2847, %v2848
        %v2850 = vsel %vm714, %v2666, 0.0
        %v2851 = vadd.f32 %v2849, %v2850
        %v2852 = vsel %vm714, %v2671, 0.0
        %v2853 = vadd.f32 %v2851, %v2852
        %v2854 = vsel %vm714, %v2676, 0.0
        %v2855 = vadd.f32 %v2853, %v2854
        %v2856 = vsel %vm714, %v2681, 0.0
        %v2857 = vadd.f32 %v2855, %v2856
        %v2858 = vsel %vm714, %v2686, 0.0
        %v2859 = vadd.f32 %v2857, %v2858
        %v2860 = vsel %vm714, %v2691, 0.0
        %v2861 = vadd.f32 %v2859, %v2860
        %v2862 = vsel %vm714, %v2696, 0.0
        %v2863 = vadd.f32 %v2861, %v2862
        %v2864 = vsel %vm714, %v2701, 0.0
        %v2865 = vadd.f32 %v2863, %v2864
        %v2866 = vsel %vm714, %v2706, 0.0
        %v2867 = vadd.f32 %v2865, %v2866
        %v2868 = vsel %vm714, %v2711, 0.0
        %v2869 = vadd.f32 %v2867, %v2868
        %v2870 = vsel %vm714, %v2716, 0.0
        %v2871 = vadd.f32 %v2869, %v2870
        %v2872 = vsel %vm714, %v2721, 0.0
        %v2873 = vadd.f32 %v2871, %v2872
        %v2874 = vsel %vm714, %v2726, 0.0
        %v2875 = vadd.f32 %v2873, %v2874
        %v2876 = vsel %vm714, %v2731, 0.0
        %v2877 = vadd.f32 %v2875, %v2876
        %v2878 = vsel %vm714, %v2736, 0.0
        %v2879 = vadd.f32 %v2877, %v2878
        %v2880 = vsel %vm714, %v2741, 0.0
        %v2881 = vadd.f32 %v2879, %v2880
        %v2882 = vsel %vm714, %v2746, 0.0
        %v2883 = vadd.f32 %v2881, %v2882
        %v2884 = vsel %vm714, %v2751, 0.0
        %v2885 = vadd.f32 %v2883, %v2884
        %v2886 = vsel %vm714, %v2756, 0.0
        %v2887 = vadd.f32 %v2885, %v2886
        %v2888 = vsel %vm714, %v2761, 0.0
        %v2889 = vadd.f32 %v2887, %v2888
        %v2890 = vsel %vm714, %v2766, 0.0
        %v2891 = vadd.f32 %v2889, %v2890
        %v2892 = vsel %vm714, %v2771, 0.0
        %v2893 = vadd.f32 %v2891, %v2892
        %v2894 = vsel %vm714, %v2776, 0.0
        %v2895 = vadd.f32 %v2893, %v2894
        %v2896 = vsel %vm714, %v2781, 0.0
        %v2897 = vadd.f32 %v2895, %v2896
        %v2898 = vsel %vm714, %v2786, 0.0
        %v2899 = vadd.f32 %v2897, %v2898
        %v2900 = vsel %vm714, %v2791, 0.0
        %v2901 = vadd.f32 %v2899, %v2900
        %v2902 = vsel %vm714, %v2796, 0.0
        %v2903 = vadd.f32 %v2901, %v2902
        %v2904 = vsel %vm714, %v2801, 0.0
        %v2905 = vadd.f32 %v2903, %v2904
        %v2906 = vsel %vm714, %v2806, 0.0
        %v2907 = vadd.f32 %v2905, %v2906
        %v2908 = vsel %vm714, %v2811, 0.0
        %v2909 = vadd.f32 %v2907, %v2908
        %v2910 = vrot.slane %v2909, 4
        %v2911 = vadd.f32 %v2909, %v2910
        %v2912 = vrot.slane %v2911, 2
        %v2913 = vadd.f32 %v2911, %v2912
        %v2914 = vrot.slane %v2913, 1
        %v2915 = vadd.f32 %v2913, %v2914
        %v2916 = vadd.f32 %v2461, %v2915
        %v2917 = vmul.f32 %v2656, %v2656
        %v2918 = vmul.f32 %v2661, %v2661
        %v2919 = vmul.f32 %v2666, %v2666
        %v2920 = vmul.f32 %v2671, %v2671
        %v2921 = vmul.f32 %v2676, %v2676
        %v2922 = vmul.f32 %v2681, %v2681
        %v2923 = vmul.f32 %v2686, %v2686
        %v2924 = vmul.f32 %v2691, %v2691
        %v2925 = vmul.f32 %v2696, %v2696
        %v2926 = vmul.f32 %v2701, %v2701
        %v2927 = vmul.f32 %v2706, %v2706
        %v2928 = vmul.f32 %v2711, %v2711
        %v2929 = vmul.f32 %v2716, %v2716
        %v2930 = vmul.f32 %v2721, %v2721
        %v2931 = vmul.f32 %v2726, %v2726
        %v2932 = vmul.f32 %v2731, %v2731
        %v2933 = vmul.f32 %v2736, %v2736
        %v2934 = vmul.f32 %v2741, %v2741
        %v2935 = vmul.f32 %v2746, %v2746
        %v2936 = vmul.f32 %v2751, %v2751
        %v2937 = vmul.f32 %v2756, %v2756
        %v2938 = vmul.f32 %v2761, %v2761
        %v2939 = vmul.f32 %v2766, %v2766
        %v2940 = vmul.f32 %v2771, %v2771
        %v2941 = vmul.f32 %v2776, %v2776
        %v2942 = vmul.f32 %v2781, %v2781
        %v2943 = vmul.f32 %v2786, %v2786
        %v2944 = vmul.f32 %v2791, %v2791
        %v2945 = vmul.f32 %v2796, %v2796
        %v2946 = vmul.f32 %v2801, %v2801
        %v2947 = vmul.f32 %v2806, %v2806
        %v2948 = vmul.f32 %v2811, %v2811
        %v2949 = vsel %vm714, %v2917, 0.0
        %v2950 = vsel %vm714, %v2918, 0.0
        %v2951 = vadd.f32 %v2949, %v2950
        %v2952 = vsel %vm714, %v2919, 0.0
        %v2953 = vadd.f32 %v2951, %v2952
        %v2954 = vsel %vm714, %v2920, 0.0
        %v2955 = vadd.f32 %v2953, %v2954
        %v2956 = vsel %vm714, %v2921, 0.0
        %v2957 = vadd.f32 %v2955, %v2956
        %v2958 = vsel %vm714, %v2922, 0.0
        %v2959 = vadd.f32 %v2957, %v2958
        %v2960 = vsel %vm714, %v2923, 0.0
        %v2961 = vadd.f32 %v2959, %v2960
        %v2962 = vsel %vm714, %v2924, 0.0
        %v2963 = vadd.f32 %v2961, %v2962
        %v2964 = vsel %vm714, %v2925, 0.0
        %v2965 = vadd.f32 %v2963, %v2964
        %v2966 = vsel %vm714, %v2926, 0.0
        %v2967 = vadd.f32 %v2965, %v2966
        %v2968 = vsel %vm714, %v2927, 0.0
        %v2969 = vadd.f32 %v2967, %v2968
        %v2970 = vsel %vm714, %v2928, 0.0
        %v2971 = vadd.f32 %v2969, %v2970
        %v2972 = vsel %vm714, %v2929, 0.0
        %v2973 = vadd.f32 %v2971, %v2972
        %v2974 = vsel %vm714, %v2930, 0.0
        %v2975 = vadd.f32 %v2973, %v2974
        %v2976 = vsel %vm714, %v2931, 0.0
        %v2977 = vadd.f32 %v2975, %v2976
        %v2978 = vsel %vm714, %v2932, 0.0
        %v2979 = vadd.f32 %v2977, %v2978
        %v2980 = vsel %vm714, %v2933, 0.0
        %v2981 = vadd.f32 %v2979, %v2980
        %v2982 = vsel %vm714, %v2934, 0.0
        %v2983 = vadd.f32 %v2981, %v2982
        %v2984 = vsel %vm714, %v2935, 0.0
        %v2985 = vadd.f32 %v2983, %v2984
        %v2986 = vsel %vm714, %v2936, 0.0
        %v2987 = vadd.f32 %v2985, %v2986
        %v2988 = vsel %vm714, %v2937, 0.0
        %v2989 = vadd.f32 %v2987, %v2988
        %v2990 = vsel %vm714, %v2938, 0.0
        %v2991 = vadd.f32 %v2989, %v2990
        %v2992 = vsel %vm714, %v2939, 0.0
        %v2993 = vadd.f32 %v2991, %v2992
        %v2994 = vsel %vm714, %v2940, 0.0
        %v2995 = vadd.f32 %v2993, %v2994
        %v2996 = vsel %vm714, %v2941, 0.0
        %v2997 = vadd.f32 %v2995, %v2996
        %v2998 = vsel %vm714, %v2942, 0.0
        %v2999 = vadd.f32 %v2997, %v2998
        %v3000 = vsel %vm714, %v2943, 0.0
        %v3001 = vadd.f32 %v2999, %v3000
        %v3002 = vsel %vm714, %v2944, 0.0
        %v3003 = vadd.f32 %v3001, %v3002
        %v3004 = vsel %vm714, %v2945, 0.0
        %v3005 = vadd.f32 %v3003, %v3004
        %v3006 = vsel %vm714, %v2946, 0.0
        %v3007 = vadd.f32 %v3005, %v3006
        %v3008 = vsel %vm714, %v2947, 0.0
        %v3009 = vadd.f32 %v3007, %v3008
        %v3010 = vsel %vm714, %v2948, 0.0
        %v3011 = vadd.f32 %v3009, %v3010
        %v3012 = vrot.slane %v3011, 4
        %v3013 = vadd.f32 %v3011, %v3012
        %v3014 = vrot.slane %v3013, 2
        %v3015 = vadd.f32 %v3013, %v3014
        %v3016 = vrot.slane %v3015, 1
        %v3017 = vadd.f32 %v3015, %v3016
        %v3018 = vadd.f32 %v2563, %v3017
        %v3019 = vld [vmem:[#allocation2] sm:$0x1]
        %v3020 = vadd.f32 %v3019, %v2916
        %vm3021 = vcmask 57344
        %3022 = vst.msk [vmem:[#allocation2] sm:$0x1] %vm3021, %v3020
        %v3023 = vld [vmem:[#allocation4] sm:$0x1]
        %v3024 = vadd.f32 %v3023, %v3018
        %3025 = vst.msk [vmem:[#allocation4] sm:$0x1] %vm3021, %v3024
        %p3026 = scmp.lt.s32.totalorder %s18, 1
        %s3027 = scalar_select %p3026, %s18, 1
        %s3028 = smul.addr %s3027, 128
        %s3029 = smul.addr %s3028, 8
        %s3030 = scalar_lea.vmem %s2, %s3029
        // Predicated region
        $region33: #{tpu_custom_call.1} parent=27 // pred_check
          %p3031 = pneg %p83
        $region34: #{tpu_custom_call.1} parent=27 // pred_check_branch
          %3033 = sbr.rel (%p3031) target = $region36
        $region35: #{tpu_custom_call.1} parent=27 // pred_region
          _
        $region36: #{tpu_custom_call.1} parent=27 // pred_fallthru
          _
        // Predicated region
        $region37: #{tpu_custom_call.1} parent=27 // pred_check
          %p3034 = pneg %p104
        $region38: #{tpu_custom_call.1} parent=27 // pred_check_branch
          %3036 = sbr.rel (%p3034) target = $region40
        $region39: #{tpu_custom_call.1} parent=27 // pred_region
          %s3038 = ssub.s32 16, 16
          %3039 = vsyncadd [#allocation3], %s3038
          %s3041 = sshll.u32 [#allocation2], 4
          %s3042 = int_to_ptr.vmem [resolvable:$true] %s3041
          %3044 = dma.vmem_to_hbm [thread:$0]  %s3042, 16, %s3, [#allocation3]
        $region40: #{tpu_custom_call.1} parent=27 // pred_fallthru
          _
        // Predicated region
        $region41: #{tpu_custom_call.1} parent=27 // pred_check
          %p3045 = pneg %p125
        $region42: #{tpu_custom_call.1} parent=27 // pred_check_branch
          %3047 = sbr.rel (%p3045) target = $region44
        $region43: #{tpu_custom_call.1} parent=27 // pred_region
          %s3049 = ssub.s32 16, 16
          %3050 = vsyncadd [#allocation5], %s3049
          %s3052 = sshll.u32 [#allocation4], 4
          %s3053 = int_to_ptr.vmem [resolvable:$true] %s3052
          %3055 = dma.vmem_to_hbm [thread:$0]  %s3053, 16, %s4, [#allocation5]
        $region44: #{tpu_custom_call.1} parent=27 // pred_fallthru
          _
        // Predicated region
        $region45: #{tpu_custom_call.1} parent=27 // pred_check
          %p3056 = pneg %p104
        $region46: #{tpu_custom_call.1} parent=27 // pred_check_branch
          %3058 = sbr.rel (%p3056) target = $region48
        $region47: #{tpu_custom_call.1} parent=27 // pred_region
          %3059 = dma.done [#allocation3], 16
        $region48: #{tpu_custom_call.1} parent=27 // pred_fallthru
          _
        // Predicated region
        $region49: #{tpu_custom_call.1} parent=27 // pred_check
          %p3060 = pneg %p125
        $region50: #{tpu_custom_call.1} parent=27 // pred_check_branch
          %3062 = sbr.rel (%p3060) target = $region52
        $region51: #{tpu_custom_call.1} parent=27 // pred_region
          %3063 = dma.done [#allocation5], 16
        $region52: #{tpu_custom_call.1} parent=27 // pred_fallthru
          _
      $region28: #{tpu_custom_call.1} parent=5 // pred_fallthru
        _
      %p3064 = scmp.le.s32.totalorder 2, %s13
      // Predicated region
      $region53: #{tpu_custom_call.1} parent=5 // pred_check
        %p3065 = pneg %p3064
      $region54: #{tpu_custom_call.1} parent=5 // pred_check_branch
        %3067 = sbr.rel (%p3065) target = $region56
      $region55: #{tpu_custom_call.1} parent=5 // pred_region
        %s3068 = ssub.s32 %s13, 2
        // Predicated region
        $region57: #{tpu_custom_call.1} parent=55 // pred_check
          %p3069 = pneg %p89
        $region58: #{tpu_custom_call.1} parent=55 // pred_check_branch
          %3071 = sbr.rel (%p3069) target = $region60
        $region59: #{tpu_custom_call.1} parent=55 // pred_region
          %p3072 = scmp.lt.s32.totalorder %s19, 1
          %s3073 = scalar_select %p3072, %s19, 1
          %s3074 = smul.addr %s3073, 128
          %s3075 = smul.addr %s3074, 8
          %s3076 = scalar_lea.vmem %s2, %s3075
        $region60: #{tpu_custom_call.1} parent=55 // pred_fallthru
          _
      $region56: #{tpu_custom_call.1} parent=5 // pred_fallthru
        _
    $region6: #{tpu_custom_call.1} parent=1 // loop_footer
      %s17 = sadd.s32 1, %s13
    $region7: #{tpu_custom_call.1} parent=1 // loop_footer_branch
      %12 = sbr.rel target = $region3
    $region8: #{tpu_custom_call.1} parent=1 // loop_exit
      _
    %3077 = vsyncpa [#allocation3], 1
    %s3078 = scalar_lea.sflag [#allocation3], 1
    %3079 = vsyncpa %s3078, 1
    %3080 = vsyncpa [#allocation5], 1

</llo_original>
